<compile_context>
chip_gen: v7x
topology: tpu7x:2x2x1
jax: 0.10.0
libtpu: 0.0.40
codegen_flags: <defaults>
</compile_context>

<pallas_src>
import math
import numpy as np
import jax
import jax.numpy as jnp
from jax.experimental import pallas as pl
from jax.experimental.pallas import tpu as pltpu

# ---- model hyperparameters (config['Architecture']) ----
H = 32         # hidden_size
NH = 4         # num_attention_heads
DH = H // NH   # attention_head_size
INTER = 64     # intermediate_size
EPS = 1e-12    # LayerNorm eps
_NEG = -10000.0


# ------------------------- shared math helpers -------------------------
def _gelu(x):
    # exact erf gelu (matches the module's `gelu`)
    return x * 0.5 * (1.0 + jax.lax.erf(x / math.sqrt(2.0)))


def _layernorm(x, gamma, beta):
    mu = jnp.mean(x, axis=-1, keepdims=True)
    var = jnp.mean((x - mu) ** 2, axis=-1, keepdims=True)
    return (x - mu) * jax.lax.rsqrt(var + EPS) * gamma + beta


# ------------------------- fused Pallas kernel -------------------------
def _cross_att_layer_kernel(own_ref, other_ref, cmask_ref, smask_ref, qm_ref,
                            wqkv_ref, woatt_ref, wi_ref, wof_ref,
                            bqkv_ref, vec_ref, bi_ref, out_ref):
    """One branch per grid step: cross-att -> self-att -> FFN, all in VMEM."""
    x0 = own_ref[0]          # (B*S, H)  query-side features for this branch
    c0 = other_ref[0]        # (B*S, H)  context features (other sequence)
    qm = qm_ref[0]           # (B*S, 1)  binary row mask for this branch
    scale = 1.0 / math.sqrt(DH)

    def attention(x2d, c2d, mask2d, w_qkv, b_qkv, w_o, b_o, gamma, beta, same_src):
        # fused [q|k|v|o] projection -> lane-dense (rows, 128) MXU result
        proj_q = jnp.dot(x2d, w_qkv, preferred_element_type=jnp.float32) + b_qkv
        if same_src:
            proj_kv = proj_q
        else:
            proj_kv = jnp.dot(c2d, w_qkv, preferred_element_type=jnp.float32) + b_qkv

        dense = jnp.zeros((x2d.shape[0], H), jnp.float32)
        for h in range(NH):  # small static head loop
            qh = proj_q[:, h * DH:(h + 1) * DH]                     # (BS, DH)
            kh = proj_kv[:, H + h * DH:H + (h + 1) * DH]            # (BS, DH)
            vh = proj_kv[:, 2 * H + h * DH:2 * H + (h + 1) * DH]    # (BS, DH)
            # scores: contract last dims of both operands (no explicit transpose)
            s = jax.lax.dot_general(qh, kh, (((1,), (1,)), ((), ())),
                                    preferred_element_type=jnp.float32)
            s = s * scale + mask2d                  # additive mask + block-diag batch mask
            s = s - jnp.max(s, axis=-1, keepdims=True)
            e = jnp.exp(s)
            p = e * pl.reciprocal(jnp.sum(e, axis=-1, keepdims=True), approx=True)
            ctx_h = jnp.dot(p, vh, preferred_element_type=jnp.float32)       # (BS, DH)
            # accumulate output projection per head (sublane-row slice of W_o)
            dense = dense + jnp.dot(ctx_h, w_o[h * DH:(h + 1) * DH, :],
                                    preferred_element_type=jnp.float32)
        # BertAttOutput: dense -> (dropout=id) -> LayerNorm(dense + input) -> gelu -> * mask
        y = _layernorm(dense + b_o + x2d, gamma, beta)
        return _gelu(y) * qm

    # --- cross attention (shared weights, slab row 0) ---
    y1 = attention(x0, c0, cmask_ref[0],
                   wqkv_ref[0], bqkv_ref[0], woatt_ref[0],
                   vec_ref[0:1], vec_ref[1:2], vec_ref[2:3], same_src=False)
    # --- self attention (shared weights, slab row 1) ---
    y2 = attention(y1, y1, smask_ref[0],
                   wqkv_ref[1], bqkv_ref[1], woatt_ref[1],
                   vec_ref[3:4], vec_ref[4:5], vec_ref[5:6], same_src=True)
    # --- FFN: intermediate -> gelu -> *mask -> output dense -> LayerNorm(+res) -> *mask ---
    hmid = _gelu(jnp.dot(y2, wi_ref[...], preferred_element_type=jnp.float32)
                 + bi_ref[...]) * qm
    o = jnp.dot(hmid, wof_ref[...], preferred_element_type=jnp.float32) + vec_ref[6:7]
    out_ref[0] = _layernorm(o + y2, vec_ref[7:8], vec_ref[8:9]) * qm


# ------------------------- wrapper -------------------------
def _pad_seq(x, target, value=0.0):
    pad = target - x.shape[1]
    if pad == 0:
        return x
    cfg = [(0, 0)] * x.ndim
    cfg[1] = (0, pad)
    return jnp.pad(x, cfg, constant_values=value)


def _block_diag_add_mask(add_mask):
    """(B, S) additive mask -> (B*S, B*S) with -1e4 for cross-batch pairs."""
    Bb, S = add_mask.shape
    same = jnp.arange(Bb)[:, None, None, None] == jnp.arange(Bb)[None, None, :, None]
    m = jnp.where(same, add_mask[None, None, :, :], _NEG)       # (B, 1, B, S)
    m = jnp.broadcast_to(m, (Bb, S, Bb, S))
    return m.reshape(Bb * S, Bb * S).astype(jnp.float32)


def cross_att_layer_forward(params, pocket_features, pocket_attention_masks,
                            compound_features, compound_attention_masks,
                            pocket_masks, compound_masks):
    """Mirrors CrossAttLayer.forward (eval mode)."""
    f32 = jnp.float32
    B, S_P, _ = pocket_features.shape
    S_C = compound_features.shape[1]
    S = ((max(S_P, S_C) + 7) // 8) * 8          # common padded length
    BS = B * S

    pf = _pad_seq(pocket_features.astype(f32), S)
    cf = _pad_seq(compound_features.astype(f32), S)
    pam = _pad_seq(pocket_attention_masks.astype(f32), S, _NEG)
    cam = _pad_seq(compound_attention_masks.astype(f32), S, _NEG)
    pm = _pad_seq(pocket_masks.astype(f32), S)
    cm = _pad_seq(compound_masks.astype(f32), S)

    # branch-stacked activations / masks (index 0 = pocket, 1 = compound)
    feats = jnp.stack([pf, cf]).reshape(2, BS, H)
    bdmask = jnp.stack([_block_diag_add_mask(pam), _block_diag_add_mask(cam)])   # (2,BS,BS)
    qmask = jnp.stack([pm, cm]).reshape(2, BS, 1)

    # ---- packed parameter slabs ----
    ca, sa, ff = params['cross_attention'], params['self_attention'], params['ffn']
    w_qkvo = jnp.stack([
        jnp.concatenate([ca['wq'], ca['wk'], ca['wv'], ca['wo']], axis=1),
        jnp.concatenate([sa['wq'], sa['wk'], sa['wv'], sa['wo']], axis=1)])      # (2, H, 4H)
    w_oatt = jnp.stack([ca['wo'], sa['wo']])                                     # (2, H, H)
    zeros_b = jnp.zeros((1, H), f32)
    b_qkv = jnp.stack([
        jnp.concatenate([ca['bq'], ca['bk'], ca['bv'], zeros_b], axis=1),
        jnp.concatenate([sa['bq'], sa['bk'], sa['bv'], zeros_b], axis=1)])       # (2, 1, 4H)
    vec32 = jnp.concatenate([ca['bo'], ca['ln_g'], ca['ln_b'],
                             sa['bo'], sa['ln_g'], sa['ln_b'],
                             ff['bo'], ff['ln_g'], ff['ln_b']], axis=0)          # (9, H)

    in_specs = [
        pl.BlockSpec((1, BS, H), lambda g: (g, 0, 0)),         # own (query) features
        pl.BlockSpec((1, BS, H), lambda g: (1 - g, 0, 0)),     # other (context) features
        pl.BlockSpec((1, BS, BS), lambda g: (1 - g, 0, 0)),    # cross-att block-diag add-mask
        pl.BlockSpec((1, BS, BS), lambda g: (g, 0, 0)),        # self-att block-diag add-mask
        pl.BlockSpec((1, BS, 1), lambda g: (g, 0, 0)),         # own binary row mask
        pl.BlockSpec((2, H, 4 * H), lambda g: (0, 0, 0)),      # fused [q|k|v|o] weights
        pl.BlockSpec((2, H, H), lambda g: (0, 0, 0)),          # attention output weights
        pl.BlockSpec((H, INTER), lambda g: (0, 0)),            # ffn intermediate weight
        pl.BlockSpec((INTER, H), lambda g: (0, 0)),            # ffn output weight
        pl.BlockSpec((2, 1, 4 * H), lambda g: (0, 0, 0)),      # fused qkv bias
        pl.BlockSpec((9, H), lambda g: (0, 0)),                # packed bias / LN vectors
        pl.BlockSpec((1, INTER), lambda g: (0, 0)),            # ffn intermediate bias
    ]

    out = pl.pallas_call(
        _cross_att_layer_kernel,
        out_shape=jax.ShapeDtypeStruct((2, BS, H), f32),
        grid=(2,),
        in_specs=in_specs,
        out_specs=pl.BlockSpec((1, BS, H), lambda g: (g, 0, 0)),
        compiler_params=pltpu.CompilerParams(dimension_semantics=("parallel",)),
    )(feats, feats, bdmask, bdmask, qmask,
      w_qkvo, w_oatt, ff['wi'], ff['wo'], b_qkv, vec32, ff['bi'])

    out = out.reshape(2, B, S, H)
    return (out[0, :, :S_P], pocket_attention_masks,
            out[1, :, :S_C], compound_attention_masks)


# ------------------------- pure-JAX reference (near-exact f32) -------------------------
_HIGH = jax.lax.Precision.HIGHEST


def _mm(a, b):
    return jnp.matmul(a, b, precision=_HIGH)


def _ref_attention(hid, ctx, add_mask, tmp_mask, p):
    B, Sq, _ = hid.shape
    Sk = ctx.shape[1]
    q = (_mm(hid, p['wq']) + p['bq']).reshape(B, Sq, NH, DH).transpose(0, 2, 1, 3)
    k = (_mm(ctx, p['wk']) + p['bk']).reshape(B, Sk, NH, DH).transpose(0, 2, 1, 3)
    v = (_mm(ctx, p['wv']) + p['bv']).reshape(B, Sk, NH, DH).transpose(0, 2, 1, 3)
    s = jnp.einsum('bhqd,bhkd->bhqk', q, k, precision=_HIGH) / math.sqrt(DH)
    s = s + add_mask[:, None, None, :]
    pr = jax.nn.softmax(s, axis=-1)
    pr = pr * tmp_mask[:, None, :, None]
    c = jnp.einsum('bhqk,bhkd->bhqd', pr, v, precision=_HIGH)
    c = c.transpose(0, 2, 1, 3).reshape(B, Sq, H)
    d = _mm(c, p['wo']) + p['bo']
    y = _layernorm(d + hid, p['ln_g'], p['ln_b'])
    return _gelu(y) * tmp_mask[:, :, None]


def _ref_ffn(x, mask, p):
    h = _gelu(_mm(x, p['wi']) + p['bi']) * mask[:, :, None]
    o = _mm(h, p['wo']) + p['bo']
    return _layernorm(o + x, p['ln_g'], p['ln_b']) * mask[:, :, None]


def _ref_forward(params, pf, pam, cf, cam, pm, cm):
    ca = params['cross_attention']
    p1 = _ref_attention(pf, cf, cam, pm, ca)
    c1 = _ref_attention(cf, pf, pam, cm, ca)
    sa = params['self_attention']
    p2 = _ref_attention(p1, p1, pam, pm, sa)
    c2 = _ref_attention(c1, c1, cam, cm, sa)
    ff = params['ffn']
    return _ref_ffn(p2, pm, ff), pam, _ref_ffn(c2, cm, ff), cam


# ------------------------- parameter init -------------------------
def init_params(key):
    def linear(k, din, dout, scale=0.05):
        k1, k2 = jax.random.split(k)
        w = scale * jax.random.normal(k1, (din, dout), jnp.float32)
        b = scale * jax.random.normal(k2, (1, dout), jnp.float32)
        return w, b

    ks = jax.random.split(key, 12)

    def att_params(k0, k1, k2, k3):
        p = {}
        p['wq'], p['bq'] = linear(k0, H, H)
        p['wk'], p['bk'] = linear(k1, H, H)
        p['wv'], p['bv'] = linear(k2, H, H)
        p['wo'], p['bo'] = linear(k3, H, H)
        p['ln_g'] = jnp.ones((1, H), jnp.float32)
        p['ln_b'] = jnp.zeros((1, H), jnp.float32)
        return p

    ffn = {}
    ffn['wi'], ffn['bi'] = linear(ks[8], H, INTER)
    ffn['wo'], ffn['bo'] = linear(ks[9], INTER, H)
    ffn['ln_g'] = jnp.ones((1, H), jnp.float32)
    ffn['ln_b'] = jnp.zeros((1, H), jnp.float32)

    return {
        'cross_attention': att_params(ks[0], ks[1], ks[2], ks[3]),
        'self_attention': att_params(ks[4], ks[5], ks[6], ks[7]),
        'ffn': ffn,
    }


# ------------------------- main -------------------------
if __name__ == "__main__":
    key = jax.random.PRNGKey(0)
    B, S_P, S_C = 2, 8, 16

    kp, kc, kk = jax.random.split(key, 3)
    pocket_features = jax.random.normal(kp, (B, S_P, H), jnp.float32)
    compound_features = jax.random.normal(kc, (B, S_C, H), jnp.float32)

    # binary validity masks (tmp_mask / *_masks)
    pocket_masks = jnp.concatenate(
        [jnp.ones((B, S_P - 2), jnp.float32), jnp.zeros((B, 2), jnp.float32)], axis=1)
    compound_masks = jnp.concatenate(
        [jnp.ones((B, S_C - 4), jnp.float32), jnp.zeros((B, 4), jnp.float32)], axis=1)
    # additive attention masks (0 for valid, -1e4 for padded), BERT-style
    pocket_attention_masks = (1.0 - pocket_masks) * -10000.0
    compound_attention_masks = (1.0 - compound_masks) * -10000.0

    params = init_params(kk)

    fwd = jax.jit(cross_att_layer_forward)
    out = fwd(params, pocket_features, pocket_attention_masks,
              compound_features, compound_attention_masks,
              pocket_masks, compound_masks)
    out = jax.block_until_ready(out)

    ref = _ref_forward(params, pocket_features, pocket_attention_masks,
                       compound_features, compound_attention_masks,
                       pocket_masks, compound_masks)

    # kernel uses default MXU precision + approx softmax reciprocal; reference is
    # near-exact f32, so allow a slightly looser tolerance.
    np.testing.assert_allclose(np.asarray(out[0]), np.asarray(ref[0]), rtol=2e-2, atol=2e-2)
    np.testing.assert_allclose(np.asarray(out[2]), np.asarray(ref[2]), rtol=2e-2, atol=2e-2)

    # TODO(synk): dropout is identity (eval mode); no stochastic dropout implemented.
    print("KERNEL_OK")
</pallas_src>

<mosaic_0001>
module attributes {stable_mosaic.version = 11 : i64} {
  func.func @_cross_att_layer_kernel(%arg0: i32, %arg1: memref<1x32x32xf32, #tpu.memory_space<vmem>>, %arg2: memref<1x32x32xf32, #tpu.memory_space<vmem>>, %arg3: memref<1x32x32xf32, #tpu.memory_space<vmem>>, %arg4: memref<1x32x32xf32, #tpu.memory_space<vmem>>, %arg5: memref<1x32x1xf32, #tpu.memory_space<vmem>>, %arg6: memref<2x32x128xf32, #tpu.memory_space<vmem>>, %arg7: memref<2x32x32xf32, #tpu.memory_space<vmem>>, %arg8: memref<32x64xf32, #tpu.memory_space<vmem>>, %arg9: memref<64x32xf32, #tpu.memory_space<vmem>>, %arg10: memref<2x1x128xf32, #tpu.memory_space<vmem>>, %arg11: memref<9x32xf32, #tpu.memory_space<vmem>>, %arg12: memref<1x64xf32, #tpu.memory_space<vmem>>, %arg13: memref<1x32x32xf32, #tpu.memory_space<vmem>>) attributes {dimension_semantics = [#tpu.dimension_semantics<parallel>], iteration_bounds = array<i64: 2>, scalar_prefetch = 0 : i64, scratch_operands = 0 : i64, tpu.core_type = #tpu.core_type<tc>, window_params = [{transform_indices = @transform_0, window_bounds = array<i64: 1, 32, 32>}, {transform_indices = @transform_1, window_bounds = array<i64: 1, 32, 32>}, {transform_indices = @transform_2, window_bounds = array<i64: 1, 32, 32>}, {transform_indices = @transform_3, window_bounds = array<i64: 1, 32, 32>}, {transform_indices = @transform_4, window_bounds = array<i64: 1, 32, 1>}, {pipeline_mode = #tpu.pipeline_mode<synchronous>, transform_indices = @transform_5, window_bounds = array<i64: 2, 32, 128>}, {pipeline_mode = #tpu.pipeline_mode<synchronous>, transform_indices = @transform_6, window_bounds = array<i64: 2, 32, 32>}, {pipeline_mode = #tpu.pipeline_mode<synchronous>, transform_indices = @transform_7, window_bounds = array<i64: 32, 64>}, {pipeline_mode = #tpu.pipeline_mode<synchronous>, transform_indices = @transform_8, window_bounds = array<i64: 64, 32>}, {pipeline_mode = #tpu.pipeline_mode<synchronous>, transform_indices = @transform_9, window_bounds = array<i64: 2, 1, 128>}, {pipeline_mode = #tpu.pipeline_mode<synchronous>, transform_indices = @transform_10, window_bounds = array<i64: 9, 32>}, {pipeline_mode = #tpu.pipeline_mode<synchronous>, transform_indices = @transform_11, window_bounds = array<i64: 1, 64>}, {transform_indices = @transform_12, window_bounds = array<i64: 1, 32, 32>}]} {
    %c0 = arith.constant 0 : index
    %c0_0 = arith.constant 0 : index
    %c0_1 = arith.constant 0 : index
    %0 = vector.load %arg1[%c0, %c0_0, %c0_1] : memref<1x32x32xf32, #tpu.memory_space<vmem>>, vector<1x32x32xf32>
    %1 = vector.shape_cast %0 : vector<1x32x32xf32> to vector<32x32xf32>
    %c0_2 = arith.constant 0 : index
    %c0_3 = arith.constant 0 : index
    %c0_4 = arith.constant 0 : index
    %2 = vector.load %arg2[%c0_2, %c0_3, %c0_4] : memref<1x32x32xf32, #tpu.memory_space<vmem>>, vector<1x32x32xf32>
    %3 = vector.shape_cast %2 : vector<1x32x32xf32> to vector<32x32xf32>
    %c0_5 = arith.constant 0 : index
    %c0_6 = arith.constant 0 : index
    %c0_7 = arith.constant 0 : index
    %4 = vector.load %arg5[%c0_5, %c0_6, %c0_7] : memref<1x32x1xf32, #tpu.memory_space<vmem>>, vector<1x32x1xf32>
    %5 = vector.shape_cast %4 : vector<1x32x1xf32> to vector<32x1xf32>
    %c0_8 = arith.constant 0 : index
    %c0_9 = arith.constant 0 : index
    %c0_10 = arith.constant 0 : index
    %6 = vector.load %arg3[%c0_8, %c0_9, %c0_10] : memref<1x32x32xf32, #tpu.memory_space<vmem>>, vector<1x32x32xf32>
    %7 = vector.shape_cast %6 : vector<1x32x32xf32> to vector<32x32xf32>
    %c0_11 = arith.constant 0 : index
    %c0_12 = arith.constant 0 : index
    %c0_13 = arith.constant 0 : index
    %8 = vector.load %arg6[%c0_11, %c0_12, %c0_13] : memref<2x32x128xf32, #tpu.memory_space<vmem>>, vector<1x32x128xf32>
    %9 = vector.shape_cast %8 : vector<1x32x128xf32> to vector<32x128xf32>
    %c0_14 = arith.constant 0 : index
    %c0_15 = arith.constant 0 : index
    %c0_16 = arith.constant 0 : index
    %10 = vector.load %arg10[%c0_14, %c0_15, %c0_16] : memref<2x1x128xf32, #tpu.memory_space<vmem>>, vector<1x1x128xf32>
    %11 = vector.shape_cast %10 : vector<1x1x128xf32> to vector<1x128xf32>
    %c0_17 = arith.constant 0 : index
    %c0_18 = arith.constant 0 : index
    %c0_19 = arith.constant 0 : index
    %12 = vector.load %arg7[%c0_17, %c0_18, %c0_19] : memref<2x32x32xf32, #tpu.memory_space<vmem>>, vector<1x32x32xf32>
    %13 = vector.shape_cast %12 : vector<1x32x32xf32> to vector<32x32xf32>
    %c0_20 = arith.constant 0 : index
    %c0_21 = arith.constant 0 : index
    %14 = vector.load %arg11[%c0_20, %c0_21] : memref<9x32xf32, #tpu.memory_space<vmem>>, vector<1x32xf32>
    %c1 = arith.constant 1 : index
    %c0_22 = arith.constant 0 : index
    %15 = vector.load %arg11[%c1, %c0_22] : memref<9x32xf32, #tpu.memory_space<vmem>>, vector<1x32xf32>
    %c2 = arith.constant 2 : index
    %c0_23 = arith.constant 0 : index
    %16 = vector.load %arg11[%c2, %c0_23] : memref<9x32xf32, #tpu.memory_space<vmem>>, vector<1x32xf32>
    %cst = arith.constant dense<0.000000e+00> : vector<32x128xf32>
    %17 = tpu.matmul %1, %9, %cst {dimension_numbers = #tpu.dot_dimension_numbers<[1], [0], [0], [1], [0, 0, 1, 1], [], []>} : vector<32x32xf32>, vector<32x128xf32>, vector<32x128xf32> -> vector<32x128xf32>
    %18 = vector.broadcast %11 : vector<1x128xf32> to vector<32x128xf32>
    %19 = arith.addf %17, %18 : vector<32x128xf32>
    %cst_24 = arith.constant dense<0.000000e+00> : vector<32x128xf32>
    %20 = tpu.matmul %3, %9, %cst_24 {dimension_numbers = #tpu.dot_dimension_numbers<[1], [0], [0], [1], [0, 0, 1, 1], [], []>} : vector<32x32xf32>, vector<32x128xf32>, vector<32x128xf32> -> vector<32x128xf32>
    %21 = vector.broadcast %11 : vector<1x128xf32> to vector<32x128xf32>
    %22 = arith.addf %20, %21 : vector<32x128xf32>
    %cst_25 = arith.constant 0.000000e+00 : f32
    %23 = vector.broadcast %cst_25 : f32 to vector<32x32xf32>
    %24 = vector.extract_strided_slice %19 {offsets = [0, 0], sizes = [32, 8], strides = [1, 1]} : vector<32x128xf32> to vector<32x8xf32>
    %25 = vector.extract_strided_slice %22 {offsets = [0, 32], sizes = [32, 8], strides = [1, 1]} : vector<32x128xf32> to vector<32x8xf32>
    %26 = vector.extract_strided_slice %22 {offsets = [0, 64], sizes = [32, 8], strides = [1, 1]} : vector<32x128xf32> to vector<32x8xf32>
    %cst_26 = arith.constant dense<0.000000e+00> : vector<32x32xf32>
    %27 = tpu.matmul %24, %25, %cst_26 {dimension_numbers = #tpu.dot_dimension_numbers<[1], [1], [0], [0], [0, 0, 1, 0], [], []>} : vector<32x8xf32>, vector<32x8xf32>, vector<32x32xf32> -> vector<32x32xf32>
    %cst_27 = arith.constant 0.353553385 : f32
    %28 = vector.broadcast %cst_27 : f32 to vector<32x32xf32>
    %29 = arith.mulf %27, %28 : vector<32x32xf32>
    %30 = arith.addf %29, %7 : vector<32x32xf32>
    %cst_28 = arith.constant dense<0xFF800000> : vector<32xf32>
    %31 = vector.multi_reduction <maximumf>, %30, %cst_28 [1] : vector<32x32xf32> to vector<32xf32>
    %32 = vector.shape_cast %31 : vector<32xf32> to vector<32x1xf32>
    %33 = vector.broadcast %32 : vector<32x1xf32> to vector<32x32xf32>
    %34 = arith.subf %30, %33 : vector<32x32xf32>
    %35 = math.exp %34 : vector<32x32xf32>
    %cst_29 = arith.constant dense<0.000000e+00> : vector<32xf32>
    %36 = vector.multi_reduction <add>, %35, %cst_29 [1] : vector<32x32xf32> to vector<32xf32>
    %37 = vector.shape_cast %36 : vector<32xf32> to vector<32x1xf32>
    %38 = tpu.reciprocal %37 {approx = true} : vector<32x1xf32> -> vector<32x1xf32>
    %39 = vector.broadcast %38 : vector<32x1xf32> to vector<32x32xf32>
    %40 = arith.mulf %35, %39 : vector<32x32xf32>
    %cst_30 = arith.constant dense<0.000000e+00> : vector<32x8xf32>
    %41 = tpu.matmul %40, %26, %cst_30 {dimension_numbers = #tpu.dot_dimension_numbers<[1], [0], [0], [1], [0, 0, 1, 1], [], []>} : vector<32x32xf32>, vector<32x8xf32>, vector<32x8xf32> -> vector<32x8xf32>
    %42 = vector.extract_strided_slice %13 {offsets = [0, 0], sizes = [8, 32], strides = [1, 1]} : vector<32x32xf32> to vector<8x32xf32>
    %cst_31 = arith.constant dense<0.000000e+00> : vector<32x32xf32>
    %43 = tpu.matmul %41, %42, %cst_31 {dimension_numbers = #tpu.dot_dimension_numbers<[1], [0], [0], [1], [0, 0, 1, 1], [], []>} : vector<32x8xf32>, vector<8x32xf32>, vector<32x32xf32> -> vector<32x32xf32>
    %44 = arith.addf %23, %43 : vector<32x32xf32>
    %45 = vector.extract_strided_slice %19 {offsets = [0, 8], sizes = [32, 8], strides = [1, 1]} : vector<32x128xf32> to vector<32x8xf32>
    %46 = vector.extract_strided_slice %22 {offsets = [0, 40], sizes = [32, 8], strides = [1, 1]} : vector<32x128xf32> to vector<32x8xf32>
    %47 = vector.extract_strided_slice %22 {offsets = [0, 72], sizes = [32, 8], strides = [1, 1]} : vector<32x128xf32> to vector<32x8xf32>
    %cst_32 = arith.constant dense<0.000000e+00> : vector<32x32xf32>
    %48 = tpu.matmul %45, %46, %cst_32 {dimension_numbers = #tpu.dot_dimension_numbers<[1], [1], [0], [0], [0, 0, 1, 0], [], []>} : vector<32x8xf32>, vector<32x8xf32>, vector<32x32xf32> -> vector<32x32xf32>
    %cst_33 = arith.constant 0.353553385 : f32
    %49 = vector.broadcast %cst_33 : f32 to vector<32x32xf32>
    %50 = arith.mulf %48, %49 : vector<32x32xf32>
    %51 = arith.addf %50, %7 : vector<32x32xf32>
    %cst_34 = arith.constant dense<0xFF800000> : vector<32xf32>
    %52 = vector.multi_reduction <maximumf>, %51, %cst_34 [1] : vector<32x32xf32> to vector<32xf32>
    %53 = vector.shape_cast %52 : vector<32xf32> to vector<32x1xf32>
    %54 = vector.broadcast %53 : vector<32x1xf32> to vector<32x32xf32>
    %55 = arith.subf %51, %54 : vector<32x32xf32>
    %56 = math.exp %55 : vector<32x32xf32>
    %cst_35 = arith.constant dense<0.000000e+00> : vector<32xf32>
    %57 = vector.multi_reduction <add>, %56, %cst_35 [1] : vector<32x32xf32> to vector<32xf32>
    %58 = vector.shape_cast %57 : vector<32xf32> to vector<32x1xf32>
    %59 = tpu.reciprocal %58 {approx = true} : vector<32x1xf32> -> vector<32x1xf32>
    %60 = vector.broadcast %59 : vector<32x1xf32> to vector<32x32xf32>
    %61 = arith.mulf %56, %60 : vector<32x32xf32>
    %cst_36 = arith.constant dense<0.000000e+00> : vector<32x8xf32>
    %62 = tpu.matmul %61, %47, %cst_36 {dimension_numbers = #tpu.dot_dimension_numbers<[1], [0], [0], [1], [0, 0, 1, 1], [], []>} : vector<32x32xf32>, vector<32x8xf32>, vector<32x8xf32> -> vector<32x8xf32>
    %63 = vector.extract_strided_slice %13 {offsets = [8, 0], sizes = [8, 32], strides = [1, 1]} : vector<32x32xf32> to vector<8x32xf32>
    %cst_37 = arith.constant dense<0.000000e+00> : vector<32x32xf32>
    %64 = tpu.matmul %62, %63, %cst_37 {dimension_numbers = #tpu.dot_dimension_numbers<[1], [0], [0], [1], [0, 0, 1, 1], [], []>} : vector<32x8xf32>, vector<8x32xf32>, vector<32x32xf32> -> vector<32x32xf32>
    %65 = arith.addf %44, %64 : vector<32x32xf32>
    %66 = vector.extract_strided_slice %19 {offsets = [0, 16], sizes = [32, 8], strides = [1, 1]} : vector<32x128xf32> to vector<32x8xf32>
    %67 = vector.extract_strided_slice %22 {offsets = [0, 48], sizes = [32, 8], strides = [1, 1]} : vector<32x128xf32> to vector<32x8xf32>
    %68 = vector.extract_strided_slice %22 {offsets = [0, 80], sizes = [32, 8], strides = [1, 1]} : vector<32x128xf32> to vector<32x8xf32>
    %cst_38 = arith.constant dense<0.000000e+00> : vector<32x32xf32>
    %69 = tpu.matmul %66, %67, %cst_38 {dimension_numbers = #tpu.dot_dimension_numbers<[1], [1], [0], [0], [0, 0, 1, 0], [], []>} : vector<32x8xf32>, vector<32x8xf32>, vector<32x32xf32> -> vector<32x32xf32>
    %cst_39 = arith.constant 0.353553385 : f32
    %70 = vector.broadcast %cst_39 : f32 to vector<32x32xf32>
    %71 = arith.mulf %69, %70 : vector<32x32xf32>
    %72 = arith.addf %71, %7 : vector<32x32xf32>
    %cst_40 = arith.constant dense<0xFF800000> : vector<32xf32>
    %73 = vector.multi_reduction <maximumf>, %72, %cst_40 [1] : vector<32x32xf32> to vector<32xf32>
    %74 = vector.shape_cast %73 : vector<32xf32> to vector<32x1xf32>
    %75 = vector.broadcast %74 : vector<32x1xf32> to vector<32x32xf32>
    %76 = arith.subf %72, %75 : vector<32x32xf32>
    %77 = math.exp %76 : vector<32x32xf32>
    %cst_41 = arith.constant dense<0.000000e+00> : vector<32xf32>
    %78 = vector.multi_reduction <add>, %77, %cst_41 [1] : vector<32x32xf32> to vector<32xf32>
    %79 = vector.shape_cast %78 : vector<32xf32> to vector<32x1xf32>
    %80 = tpu.reciprocal %79 {approx = true} : vector<32x1xf32> -> vector<32x1xf32>
    %81 = vector.broadcast %80 : vector<32x1xf32> to vector<32x32xf32>
    %82 = arith.mulf %77, %81 : vector<32x32xf32>
    %cst_42 = arith.constant dense<0.000000e+00> : vector<32x8xf32>
    %83 = tpu.matmul %82, %68, %cst_42 {dimension_numbers = #tpu.dot_dimension_numbers<[1], [0], [0], [1], [0, 0, 1, 1], [], []>} : vector<32x32xf32>, vector<32x8xf32>, vector<32x8xf32> -> vector<32x8xf32>
    %84 = vector.extract_strided_slice %13 {offsets = [16, 0], sizes = [8, 32], strides = [1, 1]} : vector<32x32xf32> to vector<8x32xf32>
    %cst_43 = arith.constant dense<0.000000e+00> : vector<32x32xf32>
    %85 = tpu.matmul %83, %84, %cst_43 {dimension_numbers = #tpu.dot_dimension_numbers<[1], [0], [0], [1], [0, 0, 1, 1], [], []>} : vector<32x8xf32>, vector<8x32xf32>, vector<32x32xf32> -> vector<32x32xf32>
    %86 = arith.addf %65, %85 : vector<32x32xf32>
    %87 = vector.extract_strided_slice %19 {offsets = [0, 24], sizes = [32, 8], strides = [1, 1]} : vector<32x128xf32> to vector<32x8xf32>
    %88 = vector.extract_strided_slice %22 {offsets = [0, 56], sizes = [32, 8], strides = [1, 1]} : vector<32x128xf32> to vector<32x8xf32>
    %89 = vector.extract_strided_slice %22 {offsets = [0, 88], sizes = [32, 8], strides = [1, 1]} : vector<32x128xf32> to vector<32x8xf32>
    %cst_44 = arith.constant dense<0.000000e+00> : vector<32x32xf32>
    %90 = tpu.matmul %87, %88, %cst_44 {dimension_numbers = #tpu.dot_dimension_numbers<[1], [1], [0], [0], [0, 0, 1, 0], [], []>} : vector<32x8xf32>, vector<32x8xf32>, vector<32x32xf32> -> vector<32x32xf32>
    %cst_45 = arith.constant 0.353553385 : f32
    %91 = vector.broadcast %cst_45 : f32 to vector<32x32xf32>
    %92 = arith.mulf %90, %91 : vector<32x32xf32>
    %93 = arith.addf %92, %7 : vector<32x32xf32>
    %cst_46 = arith.constant dense<0xFF800000> : vector<32xf32>
    %94 = vector.multi_reduction <maximumf>, %93, %cst_46 [1] : vector<32x32xf32> to vector<32xf32>
    %95 = vector.shape_cast %94 : vector<32xf32> to vector<32x1xf32>
    %96 = vector.broadcast %95 : vector<32x1xf32> to vector<32x32xf32>
    %97 = arith.subf %93, %96 : vector<32x32xf32>
    %98 = math.exp %97 : vector<32x32xf32>
    %cst_47 = arith.constant dense<0.000000e+00> : vector<32xf32>
    %99 = vector.multi_reduction <add>, %98, %cst_47 [1] : vector<32x32xf32> to vector<32xf32>
    %100 = vector.shape_cast %99 : vector<32xf32> to vector<32x1xf32>
    %101 = tpu.reciprocal %100 {approx = true} : vector<32x1xf32> -> vector<32x1xf32>
    %102 = vector.broadcast %101 : vector<32x1xf32> to vector<32x32xf32>
    %103 = arith.mulf %98, %102 : vector<32x32xf32>
    %cst_48 = arith.constant dense<0.000000e+00> : vector<32x8xf32>
    %104 = tpu.matmul %103, %89, %cst_48 {dimension_numbers = #tpu.dot_dimension_numbers<[1], [0], [0], [1], [0, 0, 1, 1], [], []>} : vector<32x32xf32>, vector<32x8xf32>, vector<32x8xf32> -> vector<32x8xf32>
    %105 = vector.extract_strided_slice %13 {offsets = [24, 0], sizes = [8, 32], strides = [1, 1]} : vector<32x32xf32> to vector<8x32xf32>
    %cst_49 = arith.constant dense<0.000000e+00> : vector<32x32xf32>
    %106 = tpu.matmul %104, %105, %cst_49 {dimension_numbers = #tpu.dot_dimension_numbers<[1], [0], [0], [1], [0, 0, 1, 1], [], []>} : vector<32x8xf32>, vector<8x32xf32>, vector<32x32xf32> -> vector<32x32xf32>
    %107 = arith.addf %86, %106 : vector<32x32xf32>
    %108 = vector.broadcast %14 : vector<1x32xf32> to vector<32x32xf32>
    %109 = arith.addf %107, %108 : vector<32x32xf32>
    %110 = arith.addf %109, %1 : vector<32x32xf32>
    %cst_50 = arith.constant dense<0.000000e+00> : vector<32xf32>
    %111 = vector.multi_reduction <add>, %110, %cst_50 [1] : vector<32x32xf32> to vector<32xf32>
    %112 = vector.shape_cast %111 : vector<32xf32> to vector<32x1xf32>
    %cst_51 = arith.constant 3.200000e+01 : f32
    %113 = vector.broadcast %cst_51 : f32 to vector<32x1xf32>
    %114 = arith.divf %112, %113 : vector<32x1xf32>
    %115 = vector.broadcast %114 : vector<32x1xf32> to vector<32x32xf32>
    %116 = arith.subf %110, %115 : vector<32x32xf32>
    %117 = arith.mulf %116, %116 : vector<32x32xf32>
    %cst_52 = arith.constant dense<0.000000e+00> : vector<32xf32>
    %118 = vector.multi_reduction <add>, %117, %cst_52 [1] : vector<32x32xf32> to vector<32xf32>
    %119 = vector.shape_cast %118 : vector<32xf32> to vector<32x1xf32>
    %cst_53 = arith.constant 3.200000e+01 : f32
    %120 = vector.broadcast %cst_53 : f32 to vector<32x1xf32>
    %121 = arith.divf %119, %120 : vector<32x1xf32>
    %122 = vector.broadcast %114 : vector<32x1xf32> to vector<32x32xf32>
    %123 = arith.subf %110, %122 : vector<32x32xf32>
    %cst_54 = arith.constant 9.99999996E-13 : f32
    %124 = vector.broadcast %cst_54 : f32 to vector<32x1xf32>
    %125 = arith.addf %121, %124 : vector<32x1xf32>
    %126 = math.rsqrt %125 : vector<32x1xf32>
    %127 = vector.broadcast %126 : vector<32x1xf32> to vector<32x32xf32>
    %128 = arith.mulf %123, %127 : vector<32x32xf32>
    %129 = vector.broadcast %15 : vector<1x32xf32> to vector<32x32xf32>
    %130 = arith.mulf %128, %129 : vector<32x32xf32>
    %131 = vector.broadcast %16 : vector<1x32xf32> to vector<32x32xf32>
    %132 = arith.addf %130, %131 : vector<32x32xf32>
    %cst_55 = arith.constant 5.000000e-01 : f32
    %133 = vector.broadcast %cst_55 : f32 to vector<32x32xf32>
    %134 = arith.mulf %132, %133 : vector<32x32xf32>
    %cst_56 = arith.constant 1.41421354 : f32
    %135 = vector.broadcast %cst_56 : f32 to vector<32x32xf32>
    %136 = arith.divf %132, %135 : vector<32x32xf32>
    %137 = math.erf %136 : vector<32x32xf32>
    %cst_57 = arith.constant 1.000000e+00 : f32
    %138 = vector.broadcast %cst_57 : f32 to vector<32x32xf32>
    %139 = arith.addf %138, %137 : vector<32x32xf32>
    %140 = arith.mulf %134, %139 : vector<32x32xf32>
    %141 = vector.broadcast %5 : vector<32x1xf32> to vector<32x32xf32>
    %142 = arith.mulf %140, %141 : vector<32x32xf32>
    %c0_58 = arith.constant 0 : index
    %c0_59 = arith.constant 0 : index
    %c0_60 = arith.constant 0 : index
    %143 = vector.load %arg4[%c0_58, %c0_59, %c0_60] : memref<1x32x32xf32, #tpu.memory_space<vmem>>, vector<1x32x32xf32>
    %144 = vector.shape_cast %143 : vector<1x32x32xf32> to vector<32x32xf32>
    %c1_61 = arith.constant 1 : index
    %c0_62 = arith.constant 0 : index
    %c0_63 = arith.constant 0 : index
    %145 = vector.load %arg6[%c1_61, %c0_62, %c0_63] : memref<2x32x128xf32, #tpu.memory_space<vmem>>, vector<1x32x128xf32>
    %146 = vector.shape_cast %145 : vector<1x32x128xf32> to vector<32x128xf32>
    %c1_64 = arith.constant 1 : index
    %c0_65 = arith.constant 0 : index
    %c0_66 = arith.constant 0 : index
    %147 = vector.load %arg10[%c1_64, %c0_65, %c0_66] : memref<2x1x128xf32, #tpu.memory_space<vmem>>, vector<1x1x128xf32>
    %148 = vector.shape_cast %147 : vector<1x1x128xf32> to vector<1x128xf32>
    %c1_67 = arith.constant 1 : index
    %c0_68 = arith.constant 0 : index
    %c0_69 = arith.constant 0 : index
    %149 = vector.load %arg7[%c1_67, %c0_68, %c0_69] : memref<2x32x32xf32, #tpu.memory_space<vmem>>, vector<1x32x32xf32>
    %150 = vector.shape_cast %149 : vector<1x32x32xf32> to vector<32x32xf32>
    %c3 = arith.constant 3 : index
    %c0_70 = arith.constant 0 : index
    %151 = vector.load %arg11[%c3, %c0_70] : memref<9x32xf32, #tpu.memory_space<vmem>>, vector<1x32xf32>
    %c4 = arith.constant 4 : index
    %c0_71 = arith.constant 0 : index
    %152 = vector.load %arg11[%c4, %c0_71] : memref<9x32xf32, #tpu.memory_space<vmem>>, vector<1x32xf32>
    %c5 = arith.constant 5 : index
    %c0_72 = arith.constant 0 : index
    %153 = vector.load %arg11[%c5, %c0_72] : memref<9x32xf32, #tpu.memory_space<vmem>>, vector<1x32xf32>
    %cst_73 = arith.constant dense<0.000000e+00> : vector<32x128xf32>
    %154 = tpu.matmul %142, %146, %cst_73 {dimension_numbers = #tpu.dot_dimension_numbers<[1], [0], [0], [1], [0, 0, 1, 1], [], []>} : vector<32x32xf32>, vector<32x128xf32>, vector<32x128xf32> -> vector<32x128xf32>
    %155 = vector.broadcast %148 : vector<1x128xf32> to vector<32x128xf32>
    %156 = arith.addf %154, %155 : vector<32x128xf32>
    %cst_74 = arith.constant 0.000000e+00 : f32
    %157 = vector.broadcast %cst_74 : f32 to vector<32x32xf32>
    %158 = vector.extract_strided_slice %156 {offsets = [0, 0], sizes = [32, 8], strides = [1, 1]} : vector<32x128xf32> to vector<32x8xf32>
    %159 = vector.extract_strided_slice %156 {offsets = [0, 32], sizes = [32, 8], strides = [1, 1]} : vector<32x128xf32> to vector<32x8xf32>
    %160 = vector.extract_strided_slice %156 {offsets = [0, 64], sizes = [32, 8], strides = [1, 1]} : vector<32x128xf32> to vector<32x8xf32>
    %cst_75 = arith.constant dense<0.000000e+00> : vector<32x32xf32>
    %161 = tpu.matmul %158, %159, %cst_75 {dimension_numbers = #tpu.dot_dimension_numbers<[1], [1], [0], [0], [0, 0, 1, 0], [], []>} : vector<32x8xf32>, vector<32x8xf32>, vector<32x32xf32> -> vector<32x32xf32>
    %cst_76 = arith.constant 0.353553385 : f32
    %162 = vector.broadcast %cst_76 : f32 to vector<32x32xf32>
    %163 = arith.mulf %161, %162 : vector<32x32xf32>
    %164 = arith.addf %163, %144 : vector<32x32xf32>
    %cst_77 = arith.constant dense<0xFF800000> : vector<32xf32>
    %165 = vector.multi_reduction <maximumf>, %164, %cst_77 [1] : vector<32x32xf32> to vector<32xf32>
    %166 = vector.shape_cast %165 : vector<32xf32> to vector<32x1xf32>
    %167 = vector.broadcast %166 : vector<32x1xf32> to vector<32x32xf32>
    %168 = arith.subf %164, %167 : vector<32x32xf32>
    %169 = math.exp %168 : vector<32x32xf32>
    %cst_78 = arith.constant dense<0.000000e+00> : vector<32xf32>
    %170 = vector.multi_reduction <add>, %169, %cst_78 [1] : vector<32x32xf32> to vector<32xf32>
    %171 = vector.shape_cast %170 : vector<32xf32> to vector<32x1xf32>
    %172 = tpu.reciprocal %171 {approx = true} : vector<32x1xf32> -> vector<32x1xf32>
    %173 = vector.broadcast %172 : vector<32x1xf32> to vector<32x32xf32>
    %174 = arith.mulf %169, %173 : vector<32x32xf32>
    %cst_79 = arith.constant dense<0.000000e+00> : vector<32x8xf32>
    %175 = tpu.matmul %174, %160, %cst_79 {dimension_numbers = #tpu.dot_dimension_numbers<[1], [0], [0], [1], [0, 0, 1, 1], [], []>} : vector<32x32xf32>, vector<32x8xf32>, vector<32x8xf32> -> vector<32x8xf32>
    %176 = vector.extract_strided_slice %150 {offsets = [0, 0], sizes = [8, 32], strides = [1, 1]} : vector<32x32xf32> to vector<8x32xf32>
    %cst_80 = arith.constant dense<0.000000e+00> : vector<32x32xf32>
    %177 = tpu.matmul %175, %176, %cst_80 {dimension_numbers = #tpu.dot_dimension_numbers<[1], [0], [0], [1], [0, 0, 1, 1], [], []>} : vector<32x8xf32>, vector<8x32xf32>, vector<32x32xf32> -> vector<32x32xf32>
    %178 = arith.addf %157, %177 : vector<32x32xf32>
    %179 = vector.extract_strided_slice %156 {offsets = [0, 8], sizes = [32, 8], strides = [1, 1]} : vector<32x128xf32> to vector<32x8xf32>
    %180 = vector.extract_strided_slice %156 {offsets = [0, 40], sizes = [32, 8], strides = [1, 1]} : vector<32x128xf32> to vector<32x8xf32>
    %181 = vector.extract_strided_slice %156 {offsets = [0, 72], sizes = [32, 8], strides = [1, 1]} : vector<32x128xf32> to vector<32x8xf32>
    %cst_81 = arith.constant dense<0.000000e+00> : vector<32x32xf32>
    %182 = tpu.matmul %179, %180, %cst_81 {dimension_numbers = #tpu.dot_dimension_numbers<[1], [1], [0], [0], [0, 0, 1, 0], [], []>} : vector<32x8xf32>, vector<32x8xf32>, vector<32x32xf32> -> vector<32x32xf32>
    %cst_82 = arith.constant 0.353553385 : f32
    %183 = vector.broadcast %cst_82 : f32 to vector<32x32xf32>
    %184 = arith.mulf %182, %183 : vector<32x32xf32>
    %185 = arith.addf %184, %144 : vector<32x32xf32>
    %cst_83 = arith.constant dense<0xFF800000> : vector<32xf32>
    %186 = vector.multi_reduction <maximumf>, %185, %cst_83 [1] : vector<32x32xf32> to vector<32xf32>
    %187 = vector.shape_cast %186 : vector<32xf32> to vector<32x1xf32>
    %188 = vector.broadcast %187 : vector<32x1xf32> to vector<32x32xf32>
    %189 = arith.subf %185, %188 : vector<32x32xf32>
    %190 = math.exp %189 : vector<32x32xf32>
    %cst_84 = arith.constant dense<0.000000e+00> : vector<32xf32>
    %191 = vector.multi_reduction <add>, %190, %cst_84 [1] : vector<32x32xf32> to vector<32xf32>
    %192 = vector.shape_cast %191 : vector<32xf32> to vector<32x1xf32>
    %193 = tpu.reciprocal %192 {approx = true} : vector<32x1xf32> -> vector<32x1xf32>
    %194 = vector.broadcast %193 : vector<32x1xf32> to vector<32x32xf32>
    %195 = arith.mulf %190, %194 : vector<32x32xf32>
    %cst_85 = arith.constant dense<0.000000e+00> : vector<32x8xf32>
    %196 = tpu.matmul %195, %181, %cst_85 {dimension_numbers = #tpu.dot_dimension_numbers<[1], [0], [0], [1], [0, 0, 1, 1], [], []>} : vector<32x32xf32>, vector<32x8xf32>, vector<32x8xf32> -> vector<32x8xf32>
    %197 = vector.extract_strided_slice %150 {offsets = [8, 0], sizes = [8, 32], strides = [1, 1]} : vector<32x32xf32> to vector<8x32xf32>
    %cst_86 = arith.constant dense<0.000000e+00> : vector<32x32xf32>
    %198 = tpu.matmul %196, %197, %cst_86 {dimension_numbers = #tpu.dot_dimension_numbers<[1], [0], [0], [1], [0, 0, 1, 1], [], []>} : vector<32x8xf32>, vector<8x32xf32>, vector<32x32xf32> -> vector<32x32xf32>
    %199 = arith.addf %178, %198 : vector<32x32xf32>
    %200 = vector.extract_strided_slice %156 {offsets = [0, 16], sizes = [32, 8], strides = [1, 1]} : vector<32x128xf32> to vector<32x8xf32>
    %201 = vector.extract_strided_slice %156 {offsets = [0, 48], sizes = [32, 8], strides = [1, 1]} : vector<32x128xf32> to vector<32x8xf32>
    %202 = vector.extract_strided_slice %156 {offsets = [0, 80], sizes = [32, 8], strides = [1, 1]} : vector<32x128xf32> to vector<32x8xf32>
    %cst_87 = arith.constant dense<0.000000e+00> : vector<32x32xf32>
    %203 = tpu.matmul %200, %201, %cst_87 {dimension_numbers = #tpu.dot_dimension_numbers<[1], [1], [0], [0], [0, 0, 1, 0], [], []>} : vector<32x8xf32>, vector<32x8xf32>, vector<32x32xf32> -> vector<32x32xf32>
    %cst_88 = arith.constant 0.353553385 : f32
    %204 = vector.broadcast %cst_88 : f32 to vector<32x32xf32>
    %205 = arith.mulf %203, %204 : vector<32x32xf32>
    %206 = arith.addf %205, %144 : vector<32x32xf32>
    %cst_89 = arith.constant dense<0xFF800000> : vector<32xf32>
    %207 = vector.multi_reduction <maximumf>, %206, %cst_89 [1] : vector<32x32xf32> to vector<32xf32>
    %208 = vector.shape_cast %207 : vector<32xf32> to vector<32x1xf32>
    %209 = vector.broadcast %208 : vector<32x1xf32> to vector<32x32xf32>
    %210 = arith.subf %206, %209 : vector<32x32xf32>
    %211 = math.exp %210 : vector<32x32xf32>
    %cst_90 = arith.constant dense<0.000000e+00> : vector<32xf32>
    %212 = vector.multi_reduction <add>, %211, %cst_90 [1] : vector<32x32xf32> to vector<32xf32>
    %213 = vector.shape_cast %212 : vector<32xf32> to vector<32x1xf32>
    %214 = tpu.reciprocal %213 {approx = true} : vector<32x1xf32> -> vector<32x1xf32>
    %215 = vector.broadcast %214 : vector<32x1xf32> to vector<32x32xf32>
    %216 = arith.mulf %211, %215 : vector<32x32xf32>
    %cst_91 = arith.constant dense<0.000000e+00> : vector<32x8xf32>
    %217 = tpu.matmul %216, %202, %cst_91 {dimension_numbers = #tpu.dot_dimension_numbers<[1], [0], [0], [1], [0, 0, 1, 1], [], []>} : vector<32x32xf32>, vector<32x8xf32>, vector<32x8xf32> -> vector<32x8xf32>
    %218 = vector.extract_strided_slice %150 {offsets = [16, 0], sizes = [8, 32], strides = [1, 1]} : vector<32x32xf32> to vector<8x32xf32>
    %cst_92 = arith.constant dense<0.000000e+00> : vector<32x32xf32>
    %219 = tpu.matmul %217, %218, %cst_92 {dimension_numbers = #tpu.dot_dimension_numbers<[1], [0], [0], [1], [0, 0, 1, 1], [], []>} : vector<32x8xf32>, vector<8x32xf32>, vector<32x32xf32> -> vector<32x32xf32>
    %220 = arith.addf %199, %219 : vector<32x32xf32>
    %221 = vector.extract_strided_slice %156 {offsets = [0, 24], sizes = [32, 8], strides = [1, 1]} : vector<32x128xf32> to vector<32x8xf32>
    %222 = vector.extract_strided_slice %156 {offsets = [0, 56], sizes = [32, 8], strides = [1, 1]} : vector<32x128xf32> to vector<32x8xf32>
    %223 = vector.extract_strided_slice %156 {offsets = [0, 88], sizes = [32, 8], strides = [1, 1]} : vector<32x128xf32> to vector<32x8xf32>
    %cst_93 = arith.constant dense<0.000000e+00> : vector<32x32xf32>
    %224 = tpu.matmul %221, %222, %cst_93 {dimension_numbers = #tpu.dot_dimension_numbers<[1], [1], [0], [0], [0, 0, 1, 0], [], []>} : vector<32x8xf32>, vector<32x8xf32>, vector<32x32xf32> -> vector<32x32xf32>
    %cst_94 = arith.constant 0.353553385 : f32
    %225 = vector.broadcast %cst_94 : f32 to vector<32x32xf32>
    %226 = arith.mulf %224, %225 : vector<32x32xf32>
    %227 = arith.addf %226, %144 : vector<32x32xf32>
    %cst_95 = arith.constant dense<0xFF800000> : vector<32xf32>
    %228 = vector.multi_reduction <maximumf>, %227, %cst_95 [1] : vector<32x32xf32> to vector<32xf32>
    %229 = vector.shape_cast %228 : vector<32xf32> to vector<32x1xf32>
    %230 = vector.broadcast %229 : vector<32x1xf32> to vector<32x32xf32>
    %231 = arith.subf %227, %230 : vector<32x32xf32>
    %232 = math.exp %231 : vector<32x32xf32>
    %cst_96 = arith.constant dense<0.000000e+00> : vector<32xf32>
    %233 = vector.multi_reduction <add>, %232, %cst_96 [1] : vector<32x32xf32> to vector<32xf32>
    %234 = vector.shape_cast %233 : vector<32xf32> to vector<32x1xf32>
    %235 = tpu.reciprocal %234 {approx = true} : vector<32x1xf32> -> vector<32x1xf32>
    %236 = vector.broadcast %235 : vector<32x1xf32> to vector<32x32xf32>
    %237 = arith.mulf %232, %236 : vector<32x32xf32>
    %cst_97 = arith.constant dense<0.000000e+00> : vector<32x8xf32>
    %238 = tpu.matmul %237, %223, %cst_97 {dimension_numbers = #tpu.dot_dimension_numbers<[1], [0], [0], [1], [0, 0, 1, 1], [], []>} : vector<32x32xf32>, vector<32x8xf32>, vector<32x8xf32> -> vector<32x8xf32>
    %239 = vector.extract_strided_slice %150 {offsets = [24, 0], sizes = [8, 32], strides = [1, 1]} : vector<32x32xf32> to vector<8x32xf32>
    %cst_98 = arith.constant dense<0.000000e+00> : vector<32x32xf32>
    %240 = tpu.matmul %238, %239, %cst_98 {dimension_numbers = #tpu.dot_dimension_numbers<[1], [0], [0], [1], [0, 0, 1, 1], [], []>} : vector<32x8xf32>, vector<8x32xf32>, vector<32x32xf32> -> vector<32x32xf32>
    %241 = arith.addf %220, %240 : vector<32x32xf32>
    %242 = vector.broadcast %151 : vector<1x32xf32> to vector<32x32xf32>
    %243 = arith.addf %241, %242 : vector<32x32xf32>
    %244 = arith.addf %243, %142 : vector<32x32xf32>
    %cst_99 = arith.constant dense<0.000000e+00> : vector<32xf32>
    %245 = vector.multi_reduction <add>, %244, %cst_99 [1] : vector<32x32xf32> to vector<32xf32>
    %246 = vector.shape_cast %245 : vector<32xf32> to vector<32x1xf32>
    %cst_100 = arith.constant 3.200000e+01 : f32
    %247 = vector.broadcast %cst_100 : f32 to vector<32x1xf32>
    %248 = arith.divf %246, %247 : vector<32x1xf32>
    %249 = vector.broadcast %248 : vector<32x1xf32> to vector<32x32xf32>
    %250 = arith.subf %244, %249 : vector<32x32xf32>
    %251 = arith.mulf %250, %250 : vector<32x32xf32>
    %cst_101 = arith.constant dense<0.000000e+00> : vector<32xf32>
    %252 = vector.multi_reduction <add>, %251, %cst_101 [1] : vector<32x32xf32> to vector<32xf32>
    %253 = vector.shape_cast %252 : vector<32xf32> to vector<32x1xf32>
    %cst_102 = arith.constant 3.200000e+01 : f32
    %254 = vector.broadcast %cst_102 : f32 to vector<32x1xf32>
    %255 = arith.divf %253, %254 : vector<32x1xf32>
    %256 = vector.broadcast %248 : vector<32x1xf32> to vector<32x32xf32>
    %257 = arith.subf %244, %256 : vector<32x32xf32>
    %cst_103 = arith.constant 9.99999996E-13 : f32
    %258 = vector.broadcast %cst_103 : f32 to vector<32x1xf32>
    %259 = arith.addf %255, %258 : vector<32x1xf32>
    %260 = math.rsqrt %259 : vector<32x1xf32>
    %261 = vector.broadcast %260 : vector<32x1xf32> to vector<32x32xf32>
    %262 = arith.mulf %257, %261 : vector<32x32xf32>
    %263 = vector.broadcast %152 : vector<1x32xf32> to vector<32x32xf32>
    %264 = arith.mulf %262, %263 : vector<32x32xf32>
    %265 = vector.broadcast %153 : vector<1x32xf32> to vector<32x32xf32>
    %266 = arith.addf %264, %265 : vector<32x32xf32>
    %cst_104 = arith.constant 5.000000e-01 : f32
    %267 = vector.broadcast %cst_104 : f32 to vector<32x32xf32>
    %268 = arith.mulf %266, %267 : vector<32x32xf32>
    %cst_105 = arith.constant 1.41421354 : f32
    %269 = vector.broadcast %cst_105 : f32 to vector<32x32xf32>
    %270 = arith.divf %266, %269 : vector<32x32xf32>
    %271 = math.erf %270 : vector<32x32xf32>
    %cst_106 = arith.constant 1.000000e+00 : f32
    %272 = vector.broadcast %cst_106 : f32 to vector<32x32xf32>
    %273 = arith.addf %272, %271 : vector<32x32xf32>
    %274 = arith.mulf %268, %273 : vector<32x32xf32>
    %275 = vector.broadcast %5 : vector<32x1xf32> to vector<32x32xf32>
    %276 = arith.mulf %274, %275 : vector<32x32xf32>
    %c0_107 = arith.constant 0 : index
    %c0_108 = arith.constant 0 : index
    %277 = vector.load %arg8[%c0_107, %c0_108] : memref<32x64xf32, #tpu.memory_space<vmem>>, vector<32x64xf32>
    %cst_109 = arith.constant dense<0.000000e+00> : vector<32x64xf32>
    %278 = tpu.matmul %276, %277, %cst_109 {dimension_numbers = #tpu.dot_dimension_numbers<[1], [0], [0], [1], [0, 0, 1, 1], [], []>} : vector<32x32xf32>, vector<32x64xf32>, vector<32x64xf32> -> vector<32x64xf32>
    %c0_110 = arith.constant 0 : index
    %c0_111 = arith.constant 0 : index
    %279 = vector.load %arg12[%c0_110, %c0_111] : memref<1x64xf32, #tpu.memory_space<vmem>>, vector<1x64xf32>
    %280 = vector.broadcast %279 : vector<1x64xf32> to vector<32x64xf32>
    %281 = arith.addf %278, %280 : vector<32x64xf32>
    %cst_112 = arith.constant 5.000000e-01 : f32
    %282 = vector.broadcast %cst_112 : f32 to vector<32x64xf32>
    %283 = arith.mulf %281, %282 : vector<32x64xf32>
    %cst_113 = arith.constant 1.41421354 : f32
    %284 = vector.broadcast %cst_113 : f32 to vector<32x64xf32>
    %285 = arith.divf %281, %284 : vector<32x64xf32>
    %286 = math.erf %285 : vector<32x64xf32>
    %cst_114 = arith.constant 1.000000e+00 : f32
    %287 = vector.broadcast %cst_114 : f32 to vector<32x64xf32>
    %288 = arith.addf %287, %286 : vector<32x64xf32>
    %289 = arith.mulf %283, %288 : vector<32x64xf32>
    %290 = vector.broadcast %5 : vector<32x1xf32> to vector<32x64xf32>
    %291 = arith.mulf %289, %290 : vector<32x64xf32>
    %c0_115 = arith.constant 0 : index
    %c0_116 = arith.constant 0 : index
    %292 = vector.load %arg9[%c0_115, %c0_116] : memref<64x32xf32, #tpu.memory_space<vmem>>, vector<64x32xf32>
    %cst_117 = arith.constant dense<0.000000e+00> : vector<32x32xf32>
    %293 = tpu.matmul %291, %292, %cst_117 {dimension_numbers = #tpu.dot_dimension_numbers<[1], [0], [0], [1], [0, 0, 1, 1], [], []>} : vector<32x64xf32>, vector<64x32xf32>, vector<32x32xf32> -> vector<32x32xf32>
    %c6 = arith.constant 6 : index
    %c0_118 = arith.constant 0 : index
    %294 = vector.load %arg11[%c6, %c0_118] : memref<9x32xf32, #tpu.memory_space<vmem>>, vector<1x32xf32>
    %295 = vector.broadcast %294 : vector<1x32xf32> to vector<32x32xf32>
    %296 = arith.addf %293, %295 : vector<32x32xf32>
    %297 = arith.addf %296, %276 : vector<32x32xf32>
    %c7 = arith.constant 7 : index
    %c0_119 = arith.constant 0 : index
    %298 = vector.load %arg11[%c7, %c0_119] : memref<9x32xf32, #tpu.memory_space<vmem>>, vector<1x32xf32>
    %c8 = arith.constant 8 : index
    %c0_120 = arith.constant 0 : index
    %299 = vector.load %arg11[%c8, %c0_120] : memref<9x32xf32, #tpu.memory_space<vmem>>, vector<1x32xf32>
    %cst_121 = arith.constant dense<0.000000e+00> : vector<32xf32>
    %300 = vector.multi_reduction <add>, %297, %cst_121 [1] : vector<32x32xf32> to vector<32xf32>
    %301 = vector.shape_cast %300 : vector<32xf32> to vector<32x1xf32>
    %cst_122 = arith.constant 3.200000e+01 : f32
    %302 = vector.broadcast %cst_122 : f32 to vector<32x1xf32>
    %303 = arith.divf %301, %302 : vector<32x1xf32>
    %304 = vector.broadcast %303 : vector<32x1xf32> to vector<32x32xf32>
    %305 = arith.subf %297, %304 : vector<32x32xf32>
    %306 = arith.mulf %305, %305 : vector<32x32xf32>
    %cst_123 = arith.constant dense<0.000000e+00> : vector<32xf32>
    %307 = vector.multi_reduction <add>, %306, %cst_123 [1] : vector<32x32xf32> to vector<32xf32>
    %308 = vector.shape_cast %307 : vector<32xf32> to vector<32x1xf32>
    %cst_124 = arith.constant 3.200000e+01 : f32
    %309 = vector.broadcast %cst_124 : f32 to vector<32x1xf32>
    %310 = arith.divf %308, %309 : vector<32x1xf32>
    %311 = vector.broadcast %303 : vector<32x1xf32> to vector<32x32xf32>
    %312 = arith.subf %297, %311 : vector<32x32xf32>
    %cst_125 = arith.constant 9.99999996E-13 : f32
    %313 = vector.broadcast %cst_125 : f32 to vector<32x1xf32>
    %314 = arith.addf %310, %313 : vector<32x1xf32>
    %315 = math.rsqrt %314 : vector<32x1xf32>
    %316 = vector.broadcast %315 : vector<32x1xf32> to vector<32x32xf32>
    %317 = arith.mulf %312, %316 : vector<32x32xf32>
    %318 = vector.broadcast %298 : vector<1x32xf32> to vector<32x32xf32>
    %319 = arith.mulf %317, %318 : vector<32x32xf32>
    %320 = vector.broadcast %299 : vector<1x32xf32> to vector<32x32xf32>
    %321 = arith.addf %319, %320 : vector<32x32xf32>
    %322 = vector.broadcast %5 : vector<32x1xf32> to vector<32x32xf32>
    %323 = arith.mulf %321, %322 : vector<32x32xf32>
    %c0_126 = arith.constant 0 : index
    %c0_127 = arith.constant 0 : index
    %c0_128 = arith.constant 0 : index
    %324 = vector.load %arg13[%c0_126, %c0_127, %c0_128] : memref<1x32x32xf32, #tpu.memory_space<vmem>>, vector<1x32x32xf32>
    %325 = vector.shape_cast %324 : vector<1x32x32xf32> to vector<32x32xf32>
    %326 = vector.shape_cast %323 : vector<32x32xf32> to vector<1x32x32xf32>
    tpu.vector_store %arg13[%c0_126, %c0_127, %c0_128], %326 {strides = array<i32>} : memref<1x32x32xf32, #tpu.memory_space<vmem>>, vector<1x32x32xf32>,
    return
  }
  func.func @transform_0(%arg0: i32) -> (i32, i32, i32) {
    %c0_i32 = arith.constant 0 : i32
    %c0_i32_0 = arith.constant 0 : i32
    %c0_i32_1 = arith.constant 0 : i32
    return %arg0, %c0_i32, %c0_i32_0 : i32, i32, i32
  }
  func.func @transform_1(%arg0: i32) -> (i32, i32, i32) {
    %c1_i32 = arith.constant 1 : i32
    %0 = arith.subi %c1_i32, %arg0 : i32
    %c0_i32 = arith.constant 0 : i32
    %c0_i32_0 = arith.constant 0 : i32
    %c0_i32_1 = arith.constant 0 : i32
    return %0, %c0_i32, %c0_i32_0 : i32, i32, i32
  }
  func.func @transform_2(%arg0: i32) -> (i32, i32, i32) {
    %c1_i32 = arith.constant 1 : i32
    %0 = arith.subi %c1_i32, %arg0 : i32
    %c0_i32 = arith.constant 0 : i32
    %c0_i32_0 = arith.constant 0 : i32
    %c0_i32_1 = arith.constant 0 : i32
    return %0, %c0_i32, %c0_i32_0 : i32, i32, i32
  }
  func.func @transform_3(%arg0: i32) -> (i32, i32, i32) {
    %c0_i32 = arith.constant 0 : i32
    %c0_i32_0 = arith.constant 0 : i32
    %c0_i32_1 = arith.constant 0 : i32
    return %arg0, %c0_i32, %c0_i32_0 : i32, i32, i32
  }
  func.func @transform_4(%arg0: i32) -> (i32, i32, i32) {
    %c0_i32 = arith.constant 0 : i32
    %c0_i32_0 = arith.constant 0 : i32
    %c0_i32_1 = arith.constant 0 : i32
    return %arg0, %c0_i32, %c0_i32_0 : i32, i32, i32
  }
  func.func @transform_5(%arg0: i32) -> (i32, i32, i32) {
    %c0_i32 = arith.constant 0 : i32
    %c0_i32_0 = arith.constant 0 : i32
    %c0_i32_1 = arith.constant 0 : i32
    %c0_i32_2 = arith.constant 0 : i32
    return %c0_i32, %c0_i32_0, %c0_i32_1 : i32, i32, i32
  }
  func.func @transform_6(%arg0: i32) -> (i32, i32, i32) {
    %c0_i32 = arith.constant 0 : i32
    %c0_i32_0 = arith.constant 0 : i32
    %c0_i32_1 = arith.constant 0 : i32
    %c0_i32_2 = arith.constant 0 : i32
    return %c0_i32, %c0_i32_0, %c0_i32_1 : i32, i32, i32
  }
  func.func @transform_7(%arg0: i32) -> (i32, i32) {
    %c0_i32 = arith.constant 0 : i32
    %c0_i32_0 = arith.constant 0 : i32
    %c0_i32_1 = arith.constant 0 : i32
    return %c0_i32, %c0_i32_0 : i32, i32
  }
  func.func @transform_8(%arg0: i32) -> (i32, i32) {
    %c0_i32 = arith.constant 0 : i32
    %c0_i32_0 = arith.constant 0 : i32
    %c0_i32_1 = arith.constant 0 : i32
    return %c0_i32, %c0_i32_0 : i32, i32
  }
  func.func @transform_9(%arg0: i32) -> (i32, i32, i32) {
    %c0_i32 = arith.constant 0 : i32
    %c0_i32_0 = arith.constant 0 : i32
    %c0_i32_1 = arith.constant 0 : i32
    %c0_i32_2 = arith.constant 0 : i32
    return %c0_i32, %c0_i32_0, %c0_i32_1 : i32, i32, i32
  }
  func.func @transform_10(%arg0: i32) -> (i32, i32) {
    %c0_i32 = arith.constant 0 : i32
    %c0_i32_0 = arith.constant 0 : i32
    %c0_i32_1 = arith.constant 0 : i32
    return %c0_i32, %c0_i32_0 : i32, i32
  }
  func.func @transform_11(%arg0: i32) -> (i32, i32) {
    %c0_i32 = arith.constant 0 : i32
    %c0_i32_0 = arith.constant 0 : i32
    %c0_i32_1 = arith.constant 0 : i32
    return %c0_i32, %c0_i32_0 : i32, i32
  }
  func.func @transform_12(%arg0: i32) -> (i32, i32, i32) {
    %c0_i32 = arith.constant 0 : i32
    %c0_i32_0 = arith.constant 0 : i32
    %c0_i32_1 = arith.constant 0 : i32
    return %arg0, %c0_i32, %c0_i32_0 : i32, i32, i32
  }
}

</mosaic_0001>

<llo_original>
// kernel: cross_att_layer_forward.1
$region0: #{cross_att_layer_forward.1}
  #allocation0 [shape = 'u32[]', space=smem, size = 0x4, offset = 0x4, fixed_abs, tag = 'smem constant byte address 0x4 - core index']
  #allocation1 [shape = 'u32[144,128]{1,0:T(1,128)}', space=vmem, size = 0x12000, scoped, tag = 'internal scratch']
  %s0 = inlined_call_operand.vmem [shape: f32[2,32,32], index: 0, kind: input, shape index: {}, may-alias: {0,1}]
  %s1 = inlined_call_operand.vmem [shape: f32[2,32,32], index: 1, kind: input, shape index: {}, may-alias: {0,1}]
  %s2 = inlined_call_operand.vmem [shape: f32[2,32,32], index: 2, kind: input, shape index: {}, may-alias: {2,3}]
  %s3 = inlined_call_operand.vmem [shape: f32[2,32,32], index: 3, kind: input, shape index: {}, may-alias: {2,3}]
  %s4 = inlined_call_operand.vmem [shape: f32[2,32,1], index: 4, kind: input, shape index: {}]
  %s5 = inlined_call_operand.vmem [shape: f32[2,32,128], index: 5, kind: input, shape index: {}]
  %s6 = inlined_call_operand.vmem [shape: f32[2,32,32], index: 6, kind: input, shape index: {}]
  %s7 = inlined_call_operand.vmem [shape: f32[32,64], index: 7, kind: input, shape index: {}]
  %s8 = inlined_call_operand.vmem [shape: f32[64,32], index: 8, kind: input, shape index: {}]
  %s9 = inlined_call_operand.vmem [shape: f32[2,1,128], index: 9, kind: input, shape index: {}]
  %s10 = inlined_call_operand.vmem [shape: f32[9,32], index: 10, kind: input, shape index: {}]
  %s11 = inlined_call_operand.vmem [shape: f32[1,64], index: 11, kind: input, shape index: {}]
  %s12 = inlined_call_operand.vmem [shape: f32[2,32,32], index: 12, kind: output, shape index: {}]
  %s13 = sld [smem:[#allocation0]]
  $region81: #{cross_att_layer_forward.1} parent=0
    _
  %s15 = ssub.s32 1, %s13
  %s16 = scalar_select 0, %s15, %s13
  loop: start=0, step=1, limit=4
  $region2: #{cross_att_layer_forward.1} parent=0 // loop_pre_header
    _
  $region3: #{cross_att_layer_forward.1} parent=0 // loop_header
    %s18 = sphi 0, %s22
    %p19 = scmp.ge.s32.totalorder %s18, 4
    %s28 = sphi 0, %s30
    %s31 = sphi 0, %s28
    %s32 = sphi 0, %s31
    %s48 = sphi 0, %s32
    %s56 = sphi 0, %s58
    %s59 = sphi 0, %s56
    %s60 = sphi 0, %s59
    %s76 = sphi 0, %s60
    %s84 = sphi 0, %s86
    %s87 = sphi 0, %s84
    %s88 = sphi 0, %s87
    %s104 = sphi 0, %s88
    %s110 = sphi 0, %s112
    %s113 = sphi 0, %s110
    %s114 = sphi 0, %s113
    %s130 = sphi 0, %s114
    %s136 = sphi 0, %s138
    %s139 = sphi 0, %s136
    %s140 = sphi 0, %s139
    %s156 = sphi 0, %s140
    %s160 = sphi 0, %s160
    %s162 = sphi 0, %s160
    %s163 = sphi 0, %s162
    %s177 = sphi 0, %s163
    %s181 = sphi 0, %s181
    %s183 = sphi 0, %s181
    %s184 = sphi 0, %s183
    %s198 = sphi 0, %s184
    %s202 = sphi 0, %s202
    %s204 = sphi 0, %s202
    %s205 = sphi 0, %s204
    %s219 = sphi 0, %s205
    %s223 = sphi 0, %s223
    %s225 = sphi 0, %s223
    %s226 = sphi 0, %s225
    %s240 = sphi 0, %s226
    %s244 = sphi 0, %s244
    %s246 = sphi 0, %s244
    %s247 = sphi 0, %s246
    %s261 = sphi 0, %s247
    %s265 = sphi 0, %s265
    %s267 = sphi 0, %s265
    %s268 = sphi 0, %s267
    %s282 = sphi 0, %s268
    %s286 = sphi 0, %s286
    %s288 = sphi 0, %s286
    %s289 = sphi 0, %s288
    %s303 = sphi 0, %s289
    %s309 = sphi 0, %s311
    %s312 = sphi 0, %s309
    %s313 = sphi 0, %s312
    %s329 = sphi 0, %s313
  $region4: #{cross_att_layer_forward.1} parent=0 // loop_header_branch
    %21 = sbr.rel (%p19) target = $region8
  $region5: #{cross_att_layer_forward.1} parent=0 // loop_body
    %s23 = ssub.s32 %s18, 1
    %s24 = ssub.s32 %s18, 2
    %s25 = sadd.s32 %s18, 1
    %s26 = ssub.s32 %s18, %s25
    %p27 = scmp.eq.s32.totalorder %s26, 0
    %s29 = sadd.s32 %s28, 1
    %s30 = scalar_select %p27, %s28, %s29
    %p33 = pneg %p27
    %p34 = scmp.eq.s32.totalorder %s18, 1
    %p35 = por %p33, %p34
    %p36 = scmp.ne.s32.totalorder %s28, %s31
    %p37 = scmp.eq.s32.totalorder %s18, 0
    %p38 = por %p36, %p37
    %p39 = scmp.ne.s32.totalorder %s28, %s31
    %p40 = scmp.eq.s32.totalorder %s23, 1
    %p41 = por %p39, %p40
    %p42 = scmp.ne.s32.totalorder %s31, %s32
    %p43 = scmp.eq.s32.totalorder %s23, 0
    %p44 = por %p42, %p43
    %p45 = scmp.ne.s32.totalorder %s31, %s32
    %p46 = scmp.eq.s32.totalorder %s24, 1
    %p47 = por %p45, %p46
    %p49 = scmp.ne.s32.totalorder %s32, %s48
    %p50 = scmp.eq.s32.totalorder %s24, 0
    %p51 = por %p49, %p50
    %s52 = ssub.s32 1, %s18
    %s53 = ssub.s32 1, %s25
    %s54 = ssub.s32 %s52, %s53
    %p55 = scmp.eq.s32.totalorder %s54, 0
    %s57 = sadd.s32 %s56, 1
    %s58 = scalar_select %p55, %s56, %s57
    %p61 = pneg %p55
    %p62 = scmp.eq.s32.totalorder %s18, 1
    %p63 = por %p61, %p62
    %p64 = scmp.ne.s32.totalorder %s56, %s59
    %p65 = scmp.eq.s32.totalorder %s18, 0
    %p66 = por %p64, %p65
    %p67 = scmp.ne.s32.totalorder %s56, %s59
    %p68 = scmp.eq.s32.totalorder %s23, 1
    %p69 = por %p67, %p68
    %p70 = scmp.ne.s32.totalorder %s59, %s60
    %p71 = scmp.eq.s32.totalorder %s23, 0
    %p72 = por %p70, %p71
    %p73 = scmp.ne.s32.totalorder %s59, %s60
    %p74 = scmp.eq.s32.totalorder %s24, 1
    %p75 = por %p73, %p74
    %p77 = scmp.ne.s32.totalorder %s60, %s76
    %p78 = scmp.eq.s32.totalorder %s24, 0
    %p79 = por %p77, %p78
    %s80 = ssub.s32 1, %s18
    %s81 = ssub.s32 1, %s25
    %s82 = ssub.s32 %s80, %s81
    %p83 = scmp.eq.s32.totalorder %s82, 0
    %s85 = sadd.s32 %s84, 1
    %s86 = scalar_select %p83, %s84, %s85
    %p89 = pneg %p83
    %p90 = scmp.eq.s32.totalorder %s18, 1
    %p91 = por %p89, %p90
    %p92 = scmp.ne.s32.totalorder %s84, %s87
    %p93 = scmp.eq.s32.totalorder %s18, 0
    %p94 = por %p92, %p93
    %p95 = scmp.ne.s32.totalorder %s84, %s87
    %p96 = scmp.eq.s32.totalorder %s23, 1
    %p97 = por %p95, %p96
    %p98 = scmp.ne.s32.totalorder %s87, %s88
    %p99 = scmp.eq.s32.totalorder %s23, 0
    %p100 = por %p98, %p99
    %p101 = scmp.ne.s32.totalorder %s87, %s88
    %p102 = scmp.eq.s32.totalorder %s24, 1
    %p103 = por %p101, %p102
    %p105 = scmp.ne.s32.totalorder %s88, %s104
    %p106 = scmp.eq.s32.totalorder %s24, 0
    %p107 = por %p105, %p106
    %s108 = ssub.s32 %s18, %s25
    %p109 = scmp.eq.s32.totalorder %s108, 0
    %s111 = sadd.s32 %s110, 1
    %s112 = scalar_select %p109, %s110, %s111
    %p115 = pneg %p109
    %p116 = scmp.eq.s32.totalorder %s18, 1
    %p117 = por %p115, %p116
    %p118 = scmp.ne.s32.totalorder %s110, %s113
    %p119 = scmp.eq.s32.totalorder %s18, 0
    %p120 = por %p118, %p119
    %p121 = scmp.ne.s32.totalorder %s110, %s113
    %p122 = scmp.eq.s32.totalorder %s23, 1
    %p123 = por %p121, %p122
    %p124 = scmp.ne.s32.totalorder %s113, %s114
    %p125 = scmp.eq.s32.totalorder %s23, 0
    %p126 = por %p124, %p125
    %p127 = scmp.ne.s32.totalorder %s113, %s114
    %p128 = scmp.eq.s32.totalorder %s24, 1
    %p129 = por %p127, %p128
    %p131 = scmp.ne.s32.totalorder %s114, %s130
    %p132 = scmp.eq.s32.totalorder %s24, 0
    %p133 = por %p131, %p132
    %s134 = ssub.s32 %s18, %s25
    %p135 = scmp.eq.s32.totalorder %s134, 0
    %s137 = sadd.s32 %s136, 1
    %s138 = scalar_select %p135, %s136, %s137
    %p141 = pneg %p135
    %p142 = scmp.eq.s32.totalorder %s18, 1
    %p143 = por %p141, %p142
    %p144 = scmp.ne.s32.totalorder %s136, %s139
    %p145 = scmp.eq.s32.totalorder %s18, 0
    %p146 = por %p144, %p145
    %p147 = scmp.ne.s32.totalorder %s136, %s139
    %p148 = scmp.eq.s32.totalorder %s23, 1
    %p149 = por %p147, %p148
    %p150 = scmp.ne.s32.totalorder %s139, %s140
    %p151 = scmp.eq.s32.totalorder %s23, 0
    %p152 = por %p150, %p151
    %p153 = scmp.ne.s32.totalorder %s139, %s140
    %p154 = scmp.eq.s32.totalorder %s24, 1
    %p155 = por %p153, %p154
    %p157 = scmp.ne.s32.totalorder %s140, %s156
    %p158 = scmp.eq.s32.totalorder %s24, 0
    %p159 = por %p157, %p158
    %s161 = sadd.s32 %s160, 1
    %p164 = scmp.eq.s32.totalorder %s18, 1
    %p165 = scmp.ne.s32.totalorder %s160, %s162
    %p166 = scmp.eq.s32.totalorder %s18, 0
    %p167 = por %p165, %p166
    %p168 = scmp.ne.s32.totalorder %s160, %s162
    %p169 = scmp.eq.s32.totalorder %s23, 1
    %p170 = por %p168, %p169
    %p171 = scmp.ne.s32.totalorder %s162, %s163
    %p172 = scmp.eq.s32.totalorder %s23, 0
    %p173 = por %p171, %p172
    %p174 = scmp.ne.s32.totalorder %s162, %s163
    %p175 = scmp.eq.s32.totalorder %s24, 1
    %p176 = por %p174, %p175
    %p178 = scmp.ne.s32.totalorder %s163, %s177
    %p179 = scmp.eq.s32.totalorder %s24, 0
    %p180 = por %p178, %p179
    %s182 = sadd.s32 %s181, 1
    %p185 = scmp.eq.s32.totalorder %s18, 1
    %p186 = scmp.ne.s32.totalorder %s181, %s183
    %p187 = scmp.eq.s32.totalorder %s18, 0
    %p188 = por %p186, %p187
    %p189 = scmp.ne.s32.totalorder %s181, %s183
    %p190 = scmp.eq.s32.totalorder %s23, 1
    %p191 = por %p189, %p190
    %p192 = scmp.ne.s32.totalorder %s183, %s184
    %p193 = scmp.eq.s32.totalorder %s23, 0
    %p194 = por %p192, %p193
    %p195 = scmp.ne.s32.totalorder %s183, %s184
    %p196 = scmp.eq.s32.totalorder %s24, 1
    %p197 = por %p195, %p196
    %p199 = scmp.ne.s32.totalorder %s184, %s198
    %p200 = scmp.eq.s32.totalorder %s24, 0
    %p201 = por %p199, %p200
    %s203 = sadd.s32 %s202, 1
    %p206 = scmp.eq.s32.totalorder %s18, 1
    %p207 = scmp.ne.s32.totalorder %s202, %s204
    %p208 = scmp.eq.s32.totalorder %s18, 0
    %p209 = por %p207, %p208
    %p210 = scmp.ne.s32.totalorder %s202, %s204
    %p211 = scmp.eq.s32.totalorder %s23, 1
    %p212 = por %p210, %p211
    %p213 = scmp.ne.s32.totalorder %s204, %s205
    %p214 = scmp.eq.s32.totalorder %s23, 0
    %p215 = por %p213, %p214
    %p216 = scmp.ne.s32.totalorder %s204, %s205
    %p217 = scmp.eq.s32.totalorder %s24, 1
    %p218 = por %p216, %p217
    %p220 = scmp.ne.s32.totalorder %s205, %s219
    %p221 = scmp.eq.s32.totalorder %s24, 0
    %p222 = por %p220, %p221
    %s224 = sadd.s32 %s223, 1
    %p227 = scmp.eq.s32.totalorder %s18, 1
    %p228 = scmp.ne.s32.totalorder %s223, %s225
    %p229 = scmp.eq.s32.totalorder %s18, 0
    %p230 = por %p228, %p229
    %p231 = scmp.ne.s32.totalorder %s223, %s225
    %p232 = scmp.eq.s32.totalorder %s23, 1
    %p233 = por %p231, %p232
    %p234 = scmp.ne.s32.totalorder %s225, %s226
    %p235 = scmp.eq.s32.totalorder %s23, 0
    %p236 = por %p234, %p235
    %p237 = scmp.ne.s32.totalorder %s225, %s226
    %p238 = scmp.eq.s32.totalorder %s24, 1
    %p239 = por %p237, %p238
    %p241 = scmp.ne.s32.totalorder %s226, %s240
    %p242 = scmp.eq.s32.totalorder %s24, 0
    %p243 = por %p241, %p242
    %s245 = sadd.s32 %s244, 1
    %p248 = scmp.eq.s32.totalorder %s18, 1
    %p249 = scmp.ne.s32.totalorder %s244, %s246
    %p250 = scmp.eq.s32.totalorder %s18, 0
    %p251 = por %p249, %p250
    %p252 = scmp.ne.s32.totalorder %s244, %s246
    %p253 = scmp.eq.s32.totalorder %s23, 1
    %p254 = por %p252, %p253
    %p255 = scmp.ne.s32.totalorder %s246, %s247
    %p256 = scmp.eq.s32.totalorder %s23, 0
    %p257 = por %p255, %p256
    %p258 = scmp.ne.s32.totalorder %s246, %s247
    %p259 = scmp.eq.s32.totalorder %s24, 1
    %p260 = por %p258, %p259
    %p262 = scmp.ne.s32.totalorder %s247, %s261
    %p263 = scmp.eq.s32.totalorder %s24, 0
    %p264 = por %p262, %p263
    %s266 = sadd.s32 %s265, 1
    %p269 = scmp.eq.s32.totalorder %s18, 1
    %p270 = scmp.ne.s32.totalorder %s265, %s267
    %p271 = scmp.eq.s32.totalorder %s18, 0
    %p272 = por %p270, %p271
    %p273 = scmp.ne.s32.totalorder %s265, %s267
    %p274 = scmp.eq.s32.totalorder %s23, 1
    %p275 = por %p273, %p274
    %p276 = scmp.ne.s32.totalorder %s267, %s268
    %p277 = scmp.eq.s32.totalorder %s23, 0
    %p278 = por %p276, %p277
    %p279 = scmp.ne.s32.totalorder %s267, %s268
    %p280 = scmp.eq.s32.totalorder %s24, 1
    %p281 = por %p279, %p280
    %p283 = scmp.ne.s32.totalorder %s268, %s282
    %p284 = scmp.eq.s32.totalorder %s24, 0
    %p285 = por %p283, %p284
    %s287 = sadd.s32 %s286, 1
    %p290 = scmp.eq.s32.totalorder %s18, 1
    %p291 = scmp.ne.s32.totalorder %s286, %s288
    %p292 = scmp.eq.s32.totalorder %s18, 0
    %p293 = por %p291, %p292
    %p294 = scmp.ne.s32.totalorder %s286, %s288
    %p295 = scmp.eq.s32.totalorder %s23, 1
    %p296 = por %p294, %p295
    %p297 = scmp.ne.s32.totalorder %s288, %s289
    %p298 = scmp.eq.s32.totalorder %s23, 0
    %p299 = por %p297, %p298
    %p300 = scmp.ne.s32.totalorder %s288, %s289
    %p301 = scmp.eq.s32.totalorder %s24, 1
    %p302 = por %p300, %p301
    %p304 = scmp.ne.s32.totalorder %s289, %s303
    %p305 = scmp.eq.s32.totalorder %s24, 0
    %p306 = por %p304, %p305
    %s307 = ssub.s32 %s18, %s25
    %p308 = scmp.eq.s32.totalorder %s307, 0
    %s310 = sadd.s32 %s309, 1
    %s311 = scalar_select %p308, %s309, %s310
    %p314 = pneg %p308
    %p315 = scmp.eq.s32.totalorder %s18, 1
    %p316 = por %p314, %p315
    %p317 = scmp.ne.s32.totalorder %s309, %s312
    %p318 = scmp.eq.s32.totalorder %s18, 0
    %p319 = por %p317, %p318
    %p320 = scmp.ne.s32.totalorder %s309, %s312
    %p321 = scmp.eq.s32.totalorder %s23, 1
    %p322 = por %p320, %p321
    %p323 = scmp.ne.s32.totalorder %s312, %s313
    %p324 = scmp.eq.s32.totalorder %s23, 0
    %p325 = por %p323, %p324
    %p326 = scmp.ne.s32.totalorder %s312, %s313
    %p327 = scmp.eq.s32.totalorder %s24, 1
    %p328 = por %p326, %p327
    %p330 = scmp.ne.s32.totalorder %s313, %s329
    %p331 = scmp.eq.s32.totalorder %s24, 0
    %p332 = por %p330, %p331
    %p333 = scmp.le.s32.totalorder 1, %s18
    %p334 = scmp.lt.s32.totalorder %s18, 3
    %p335 = pnand %p333, %p334
    %p336 = pneg %p335
    // Predicated region
    $region9: #{cross_att_layer_forward.1} parent=5 // pred_check
      _
    $region10: #{cross_att_layer_forward.1} parent=5 // pred_check_branch
      %338 = sbr.rel (%p335) target = $region12
    $region11: #{cross_att_layer_forward.1} parent=5 // pred_region
      %s339 = ssub.s32 %s18, 1
      // Predicated region
      $region13: #{cross_att_layer_forward.1} parent=11 // pred_check
        %p340 = pneg %p173
      $region14: #{cross_att_layer_forward.1} parent=11 // pred_check_branch
        %342 = sbr.rel (%p340) target = $region16
      $region15: #{cross_att_layer_forward.1} parent=11 // pred_region
        _
      $region16: #{cross_att_layer_forward.1} parent=11 // pred_fallthru
        _
      // Predicated region
      $region17: #{cross_att_layer_forward.1} parent=11 // pred_check
        %p343 = pneg %p194
      $region18: #{cross_att_layer_forward.1} parent=11 // pred_check_branch
        %345 = sbr.rel (%p343) target = $region20
      $region19: #{cross_att_layer_forward.1} parent=11 // pred_region
        _
      $region20: #{cross_att_layer_forward.1} parent=11 // pred_fallthru
        _
      // Predicated region
      $region21: #{cross_att_layer_forward.1} parent=11 // pred_check
        %p346 = pneg %p215
      $region22: #{cross_att_layer_forward.1} parent=11 // pred_check_branch
        %348 = sbr.rel (%p346) target = $region24
      $region23: #{cross_att_layer_forward.1} parent=11 // pred_region
        _
      $region24: #{cross_att_layer_forward.1} parent=11 // pred_fallthru
        _
      // Predicated region
      $region25: #{cross_att_layer_forward.1} parent=11 // pred_check
        %p349 = pneg %p236
      $region26: #{cross_att_layer_forward.1} parent=11 // pred_check_branch
        %351 = sbr.rel (%p349) target = $region28
      $region27: #{cross_att_layer_forward.1} parent=11 // pred_region
        _
      $region28: #{cross_att_layer_forward.1} parent=11 // pred_fallthru
        _
      // Predicated region
      $region29: #{cross_att_layer_forward.1} parent=11 // pred_check
        %p352 = pneg %p257
      $region30: #{cross_att_layer_forward.1} parent=11 // pred_check_branch
        %354 = sbr.rel (%p352) target = $region32
      $region31: #{cross_att_layer_forward.1} parent=11 // pred_region
        _
      $region32: #{cross_att_layer_forward.1} parent=11 // pred_fallthru
        _
      // Predicated region
      $region33: #{cross_att_layer_forward.1} parent=11 // pred_check
        %p355 = pneg %p278
      $region34: #{cross_att_layer_forward.1} parent=11 // pred_check_branch
        %357 = sbr.rel (%p355) target = $region36
      $region35: #{cross_att_layer_forward.1} parent=11 // pred_region
        _
      $region36: #{cross_att_layer_forward.1} parent=11 // pred_fallthru
        _
      // Predicated region
      $region37: #{cross_att_layer_forward.1} parent=11 // pred_check
        %p358 = pneg %p299
      $region38: #{cross_att_layer_forward.1} parent=11 // pred_check_branch
        %360 = sbr.rel (%p358) target = $region40
      $region39: #{cross_att_layer_forward.1} parent=11 // pred_region
        _
      $region40: #{cross_att_layer_forward.1} parent=11 // pred_fallthru
        _
    $region12: #{cross_att_layer_forward.1} parent=5 // pred_fallthru
      _
    %p361 = scmp.lt.s32.totalorder %s18, 2
    // Predicated region
    $region41: #{cross_att_layer_forward.1} parent=5 // pred_check
      %p362 = pneg %p361
    $region42: #{cross_att_layer_forward.1} parent=5 // pred_check_branch
      %364 = sbr.rel (%p362) target = $region44
    $region43: #{cross_att_layer_forward.1} parent=5 // pred_region
      // Predicated region
      $region45: #{cross_att_layer_forward.1} parent=43 // pred_check
        %p365 = pneg %p38
      $region46: #{cross_att_layer_forward.1} parent=43 // pred_check_branch
        %367 = sbr.rel (%p365) target = $region48
      $region47: #{cross_att_layer_forward.1} parent=43 // pred_region
        %p368 = scmp.lt.s32.totalorder %s18, 1
        %s369 = scalar_select %p368, %s18, 1
        %s370 = smul.addr %s369, 4
        %s371 = smul.addr %s370, 8
        %s372 = scalar_lea.vmem %s0, %s371
      $region48: #{cross_att_layer_forward.1} parent=43 // pred_fallthru
        _
      // Predicated region
      $region49: #{cross_att_layer_forward.1} parent=43 // pred_check
        %p373 = pneg %p66
      $region50: #{cross_att_layer_forward.1} parent=43 // pred_check_branch
        %375 = sbr.rel (%p373) target = $region52
      $region51: #{cross_att_layer_forward.1} parent=43 // pred_region
        %s376 = ssub.s32 1, %s18
        %p377 = scmp.lt.s32.totalorder %s376, 1
        %s378 = scalar_select %p377, %s376, 1
        %s379 = smul.addr %s378, 4
        %s380 = smul.addr %s379, 8
        %s381 = scalar_lea.vmem %s1, %s380
        %s382 = ssub.s32 1, %s18
      $region52: #{cross_att_layer_forward.1} parent=43 // pred_fallthru
        _
      // Predicated region
      $region53: #{cross_att_layer_forward.1} parent=43 // pred_check
        %p383 = pneg %p94
      $region54: #{cross_att_layer_forward.1} parent=43 // pred_check_branch
        %385 = sbr.rel (%p383) target = $region56
      $region55: #{cross_att_layer_forward.1} parent=43 // pred_region
        %s386 = ssub.s32 1, %s18
        %p387 = scmp.lt.s32.totalorder %s386, 1
        %s388 = scalar_select %p387, %s386, 1
        %s389 = smul.addr %s388, 4
        %s390 = smul.addr %s389, 8
        %s391 = scalar_lea.vmem %s2, %s390
        %s392 = ssub.s32 1, %s18
      $region56: #{cross_att_layer_forward.1} parent=43 // pred_fallthru
        _
      // Predicated region
      $region57: #{cross_att_layer_forward.1} parent=43 // pred_check
        %p393 = pneg %p120
      $region58: #{cross_att_layer_forward.1} parent=43 // pred_check_branch
        %395 = sbr.rel (%p393) target = $region60
      $region59: #{cross_att_layer_forward.1} parent=43 // pred_region
        %p396 = scmp.lt.s32.totalorder %s18, 1
        %s397 = scalar_select %p396, %s18, 1
        %s398 = smul.addr %s397, 4
        %s399 = smul.addr %s398, 8
        %s400 = scalar_lea.vmem %s3, %s399
      $region60: #{cross_att_layer_forward.1} parent=43 // pred_fallthru
        _
      // Predicated region
      $region61: #{cross_att_layer_forward.1} parent=43 // pred_check
        %p401 = pneg %p146
      $region62: #{cross_att_layer_forward.1} parent=43 // pred_check_branch
        %403 = sbr.rel (%p401) target = $region64
      $region63: #{cross_att_layer_forward.1} parent=43 // pred_region
        %p404 = scmp.lt.s32.totalorder %s18, 1
        %s405 = scalar_select %p404, %s18, 1
        %s406 = smul.addr %s405, 4
        %s407 = smul.addr %s406, 8
        %s408 = scalar_lea.vmem %s4, %s407
      $region64: #{cross_att_layer_forward.1} parent=43 // pred_fallthru
        _
    $region44: #{cross_att_layer_forward.1} parent=5 // pred_fallthru
      _
    %p409 = scmp.le.s32.totalorder 1, %s18
    %p410 = scmp.lt.s32.totalorder %s18, 3
    %p411 = pnand %p409, %p410
    %p412 = pneg %p411
    // Predicated region
    $region65: #{cross_att_layer_forward.1} parent=5 // pred_check
      _
    $region66: #{cross_att_layer_forward.1} parent=5 // pred_check_branch
      %414 = sbr.rel (%p411) target = $region68
    $region67: #{cross_att_layer_forward.1} parent=5 // pred_region
      %s415 = ssub.s32 %s18, 1
      %p416 = scmp.lt.s32.totalorder %s23, 1
      %s417 = scalar_select %p416, %s23, 1
      %s418 = smul.addr %s417, 4
      %s419 = smul.addr %s418, 8
      %s420 = scalar_lea.vmem %s0, %s419
      %p421 = pneg %p44
      %p422 = pneg %p41
      %s423 = ssub.s32 1, %s23
      %p424 = scmp.lt.s32.totalorder %s423, 1
      %s425 = scalar_select %p424, %s423, 1
      %s426 = smul.addr %s425, 4
      %s427 = smul.addr %s426, 8
      %s428 = scalar_lea.vmem %s1, %s427
      %p429 = pneg %p72
      %p430 = pneg %p69
      %s431 = ssub.s32 1, %s23
      %p432 = scmp.lt.s32.totalorder %s431, 1
      %s433 = scalar_select %p432, %s431, 1
      %s434 = smul.addr %s433, 4
      %s435 = smul.addr %s434, 8
      %s436 = scalar_lea.vmem %s2, %s435
      %p437 = pneg %p100
      %p438 = pneg %p97
      %p439 = scmp.lt.s32.totalorder %s23, 1
      %s440 = scalar_select %p439, %s23, 1
      %s441 = smul.addr %s440, 4
      %s442 = smul.addr %s441, 8
      %s443 = scalar_lea.vmem %s3, %s442
      %p444 = pneg %p126
      %p445 = pneg %p123
      %p446 = scmp.lt.s32.totalorder %s23, 1
      %s447 = scalar_select %p446, %s23, 1
      %s448 = smul.addr %s447, 4
      %s449 = smul.addr %s448, 8
      %s450 = scalar_lea.vmem %s4, %s449
      %p451 = pneg %p152
      %p452 = pneg %p149
      %p453 = pneg %p173
      %p454 = pneg %p170
      %p455 = pneg %p194
      %p456 = pneg %p191
      %p457 = pneg %p215
      %p458 = pneg %p212
      %p459 = pneg %p236
      %p460 = pneg %p233
      %p461 = pneg %p257
      %p462 = pneg %p254
      %p463 = pneg %p278
      %p464 = pneg %p275
      %p465 = pneg %p299
      %p466 = pneg %p296
      %p467 = pneg %p325
      %p468 = pneg %p322
      %p469 = scmp.lt.s32.totalorder %s23, 1
      %s470 = scalar_select %p469, %s23, 1
      %s471 = smul.addr %s470, 4
      %s472 = smul.addr %s471, 8
      %s473 = scalar_lea.vmem %s12, %s472
      %p474 = scmp.lt.s32.totalorder %s23, 1
      %s475 = scalar_select %p474, %s23, 1
      %s476 = smul.addr %s475, 4
      %s477 = smul.addr %s476, 8
      %s478 = scalar_lea.vmem %s0, %s477
      %s479 = ssub.s32 1, %s23
      %p480 = scmp.lt.s32.totalorder %s479, 1
      %s481 = scalar_select %p480, %s479, 1
      %s482 = smul.addr %s481, 4
      %s483 = smul.addr %s482, 8
      %s484 = scalar_lea.vmem %s1, %s483
      %s485 = ssub.s32 1, %s23
      %s486 = ssub.s32 1, %s23
      %p487 = scmp.lt.s32.totalorder %s486, 1
      %s488 = scalar_select %p487, %s486, 1
      %s489 = smul.addr %s488, 4
      %s490 = smul.addr %s489, 8
      %s491 = scalar_lea.vmem %s2, %s490
      %s492 = ssub.s32 1, %s23
      %p493 = scmp.lt.s32.totalorder %s23, 1
      %s494 = scalar_select %p493, %s23, 1
      %s495 = smul.addr %s494, 4
      %s496 = smul.addr %s495, 8
      %s497 = scalar_lea.vmem %s3, %s496
      %p498 = scmp.lt.s32.totalorder %s23, 1
      %s499 = scalar_select %p498, %s23, 1
      %s500 = smul.addr %s499, 4
      %s501 = smul.addr %s500, 8
      %s502 = scalar_lea.vmem %s4, %s501
      %p503 = scmp.lt.s32.totalorder %s23, 1
      %s504 = scalar_select %p503, %s23, 1
      %s505 = smul.addr %s504, 4
      %s506 = smul.addr %s505, 8
      %s507 = scalar_lea.vmem %s12, %s506
      %v508 = vld [vmem:[%s478] sm:$0xff]
      %v509 = vld [vmem:[%s478 + $0x8] sm:$0xff]
      %v510 = vld [vmem:[%s478 + $0x10] sm:$0xff]
      %v511 = vld [vmem:[%s478 + $0x18] sm:$0xff]
      %v512 = vld [vmem:[%s484] sm:$0xff]
      %v513 = vld [vmem:[%s484 + $0x8] sm:$0xff]
      %v514 = vld [vmem:[%s484 + $0x10] sm:$0xff]
      %v515 = vld [vmem:[%s484 + $0x18] sm:$0xff]
      %v516 = vld [vmem:[%s502] sm:$0xff]
      %v517 = vld [vmem:[%s502 + $0x8] sm:$0xff]
      %v518 = vld [vmem:[%s502 + $0x10] sm:$0xff]
      %v519 = vld [vmem:[%s502 + $0x18] sm:$0xff]
      %v520 = vld [vmem:[%s491] sm:$0xff]
      %v521 = vld [vmem:[%s491 + $0x8] sm:$0xff]
      %v522 = vld [vmem:[%s491 + $0x10] sm:$0xff]
      %v523 = vld [vmem:[%s491 + $0x18] sm:$0xff]
      %v524 = vld [vmem:[%s5] sm:$0xff]
      %v525 = vld [vmem:[%s5 + $0x8] sm:$0xff]
      %v526 = vld [vmem:[%s5 + $0x10] sm:$0xff]
      %v527 = vld [vmem:[%s5 + $0x18] sm:$0xff]
      %v528 = vld [vmem:[%s9] sm:$0x1]
      %v529 = vld [vmem:[%s6] sm:$0xff]
      %v530 = vld [vmem:[%s6 + $0x8] sm:$0xff]
      %v531 = vld [vmem:[%s6 + $0x10] sm:$0xff]
      %v532 = vld [vmem:[%s6 + $0x18] sm:$0xff]
      %v533 = vld [vmem:[%s10] sm:$0x1]
      %v534 = vld [vmem:[%s10 + $0x1] sm:$0x1]
      %v535 = vld [vmem:[%s10 + $0x2] sm:$0x1]
      %v537 = vlaneseq
      %v538 = vshrl.u32 %v537, 7
      %v539 = vsub.s32 0, %v538
      %v540 = vrot.slane %v528, %v539
      %vm542 = vcmask 261120
      %v544 = vsel %vm542, %v508, 0
      %v547 = vsel %vm542, %v509, 0
      %v550 = vsel %vm542, %v510, 0
      %v553 = vsel %vm542, %v511, 0
      %555 = vmatprep.subr.mxu0 0.0
      %556 = vmatpush1.msra.mxu0 %v524
      %557 = vmatprep.subr.mxu0 0.0
      %558 = vmatpush1.msra.mxu0 %v525
      %559 = vmatprep.subr.mxu0 0.0
      %560 = vmatpush1.msra.mxu0 %v526
      %561 = vmatprep.subr.mxu0 0.0
      %562 = vmatpush1.msra.mxu0 %v527
      %563 = vmatprep.subr.mxu0 0.0
      %564 = vmatpush1.msra.mxu0 0.0
      %565 = vmatprep.subr.mxu0 0.0
      %566 = vmatpush1.msra.mxu0 0.0
      %567 = vmatprep.subr.mxu0 0.0
      %568 = vmatpush1.msra.mxu0 0.0
      %569 = vmatprep.subr.mxu0 0.0
      %570 = vmatpush1.msra.mxu0 0.0
      %571 = vmatprep.subr.mxu0 0.0
      %572 = vmatpush1.msra.mxu0 0.0
      %573 = vmatprep.subr.mxu0 0.0
      %574 = vmatpush1.msra.mxu0 0.0
      %575 = vmatprep.subr.mxu0 0.0
      %576 = vmatpush1.msra.mxu0 0.0
      %577 = vmatprep.subr.mxu0 0.0
      %578 = vmatpush1.msra.mxu0 0.0
      %579 = vmatprep.subr.mxu0 0.0
      %580 = vmatpush1.msra.mxu0 0.0
      %581 = vmatprep.subr.mxu0 0.0
      %582 = vmatpush1.msra.mxu0 0.0
      %583 = vmatprep.subr.mxu0 0.0
      %584 = vmatpush1.msra.mxu0 0.0
      %585 = vmatprep.subr.mxu0 0.0
      %586 = vmatpush1.msra.mxu0 0.0
      %587 = vmatprep.subr.mxu0 0.0
      %588 = vmatpush1.msra.mxu0 0.0
      %589 = vmatprep.subr.mxu0 0.0
      %590 = vmatpush1.msra.mxu0 0.0
      %591 = vmatprep.subr.mxu0 0.0
      %592 = vmatpush1.msra.mxu0 0.0
      %593 = vmatprep.subr.mxu0 0.0
      %594 = vmatpush1.msra.mxu0 0.0
      %595 = vmatprep.subr.mxu0 0.0
      %596 = vmatpush1.msra.mxu0 0.0
      %597 = vmatprep.subr.mxu0 0.0
      %598 = vmatpush1.msra.mxu0 0.0
      %599 = vmatprep.subr.mxu0 0.0
      %600 = vmatpush1.msra.mxu0 0.0
      %601 = vmatprep.subr.mxu0 0.0
      %602 = vmatpush1.msra.mxu0 0.0
      %603 = vmatprep.subr.mxu0 0.0
      %604 = vmatpush1.msra.mxu0 0.0
      %605 = vmatprep.subr.mxu0 0.0
      %606 = vmatpush1.msra.mxu0 0.0
      %607 = vmatprep.subr.mxu0 0.0
      %608 = vmatpush1.msra.mxu0 0.0
      %609 = vmatprep.subr.mxu0 0.0
      %610 = vmatpush1.msra.mxu0 0.0
      %611 = vmatprep.subr.mxu0 0.0
      %612 = vmatpush1.msra.mxu0 0.0
      %613 = vmatprep.subr.mxu0 0.0
      %614 = vmatpush1.msra.mxu0 0.0
      %615 = vmatprep.subr.mxu0 0.0
      %616 = vmatpush1.msra.mxu0 0.0
      %617 = vmatprep.subr.mxu0 0.0
      %618 = vmatpush1.msra.mxu0 0.0
      %619 = vmatprep.mubr.f32.mxu0 0.0
      %620 = vmatmul.mubr.f32.gmra.mrb[0].mxu0 %v544
      %v621 = vpop.f32.mrb[0].mxu0
      %v622 = vadd.f32 %v540, %v621
      %v623 = vpop.f32.mrb[0].mxu0
      %624 = vmatprep.mubr.f32.mxu0 0.0
      %625 = vmatmul.mubr.f32.gmra.mrb[0].mxu0 %v547
      %v626 = vpop.f32.mrb[0].mxu0
      %v627 = vadd.f32 %v540, %v626
      %v628 = vpop.f32.mrb[0].mxu0
      %629 = vmatprep.mubr.f32.mxu0 0.0
      %630 = vmatmul.mubr.f32.gmra.mrb[0].mxu0 %v550
      %v631 = vpop.f32.mrb[0].mxu0
      %v632 = vadd.f32 %v540, %v631
      %v633 = vpop.f32.mrb[0].mxu0
      %634 = vmatprep.mubr.f32.mxu0 0.0
      %635 = vmatmul.mubr.f32.gmra.mrb[0].mxu0 %v553
      %v636 = vpop.f32.mrb[0].mxu0
      %v637 = vadd.f32 %v540, %v636
      %v638 = vpop.f32.mrb[0].mxu0
      %639 = vdwg.mxu0
      %v641 = vsel %vm542, %v512, 0
      %v644 = vsel %vm542, %v513, 0
      %v647 = vsel %vm542, %v514, 0
      %v650 = vsel %vm542, %v515, 0
      %652 = vmatprep.subr.mxu0 0.0
      %653 = vmatpush1.msra.mxu0 %v524
      %654 = vmatprep.subr.mxu0 0.0
      %655 = vmatpush1.msra.mxu0 %v525
      %656 = vmatprep.subr.mxu0 0.0
      %657 = vmatpush1.msra.mxu0 %v526
      %658 = vmatprep.subr.mxu0 0.0
      %659 = vmatpush1.msra.mxu0 %v527
      %660 = vmatprep.subr.mxu0 0.0
      %661 = vmatpush1.msra.mxu0 0.0
      %662 = vmatprep.subr.mxu0 0.0
      %663 = vmatpush1.msra.mxu0 0.0
      %664 = vmatprep.subr.mxu0 0.0
      %665 = vmatpush1.msra.mxu0 0.0
      %666 = vmatprep.subr.mxu0 0.0
      %667 = vmatpush1.msra.mxu0 0.0
      %668 = vmatprep.subr.mxu0 0.0
      %669 = vmatpush1.msra.mxu0 0.0
      %670 = vmatprep.subr.mxu0 0.0
      %671 = vmatpush1.msra.mxu0 0.0
      %672 = vmatprep.subr.mxu0 0.0
      %673 = vmatpush1.msra.mxu0 0.0
      %674 = vmatprep.subr.mxu0 0.0
      %675 = vmatpush1.msra.mxu0 0.0
      %676 = vmatprep.subr.mxu0 0.0
      %677 = vmatpush1.msra.mxu0 0.0
      %678 = vmatprep.subr.mxu0 0.0
      %679 = vmatpush1.msra.mxu0 0.0
      %680 = vmatprep.subr.mxu0 0.0
      %681 = vmatpush1.msra.mxu0 0.0
      %682 = vmatprep.subr.mxu0 0.0
      %683 = vmatpush1.msra.mxu0 0.0
      %684 = vmatprep.subr.mxu0 0.0
      %685 = vmatpush1.msra.mxu0 0.0
      %686 = vmatprep.subr.mxu0 0.0
      %687 = vmatpush1.msra.mxu0 0.0
      %688 = vmatprep.subr.mxu0 0.0
      %689 = vmatpush1.msra.mxu0 0.0
      %690 = vmatprep.subr.mxu0 0.0
      %691 = vmatpush1.msra.mxu0 0.0
      %692 = vmatprep.subr.mxu0 0.0
      %693 = vmatpush1.msra.mxu0 0.0
      %694 = vmatprep.subr.mxu0 0.0
      %695 = vmatpush1.msra.mxu0 0.0
      %696 = vmatprep.subr.mxu0 0.0
      %697 = vmatpush1.msra.mxu0 0.0
      %698 = vmatprep.subr.mxu0 0.0
      %699 = vmatpush1.msra.mxu0 0.0
      %700 = vmatprep.subr.mxu0 0.0
      %701 = vmatpush1.msra.mxu0 0.0
      %702 = vmatprep.subr.mxu0 0.0
      %703 = vmatpush1.msra.mxu0 0.0
      %704 = vmatprep.subr.mxu0 0.0
      %705 = vmatpush1.msra.mxu0 0.0
      %706 = vmatprep.subr.mxu0 0.0
      %707 = vmatpush1.msra.mxu0 0.0
      %708 = vmatprep.subr.mxu0 0.0
      %709 = vmatpush1.msra.mxu0 0.0
      %710 = vmatprep.subr.mxu0 0.0
      %711 = vmatpush1.msra.mxu0 0.0
      %712 = vmatprep.subr.mxu0 0.0
      %713 = vmatpush1.msra.mxu0 0.0
      %714 = vmatprep.subr.mxu0 0.0
      %715 = vmatpush1.msra.mxu0 0.0
      %716 = vmatprep.mubr.f32.mxu0 0.0
      %717 = vmatmul.mubr.f32.gmra.mrb[0].mxu0 %v641
      %v718 = vpop.f32.mrb[0].mxu0
      %v719 = vadd.f32 %v540, %v718
      %v720 = vpop.f32.mrb[0].mxu0
      %721 = vmatprep.mubr.f32.mxu0 0.0
      %722 = vmatmul.mubr.f32.gmra.mrb[0].mxu0 %v644
      %v723 = vpop.f32.mrb[0].mxu0
      %v724 = vadd.f32 %v540, %v723
      %v725 = vpop.f32.mrb[0].mxu0
      %726 = vmatprep.mubr.f32.mxu0 0.0
      %727 = vmatmul.mubr.f32.gmra.mrb[0].mxu0 %v647
      %v728 = vpop.f32.mrb[0].mxu0
      %v729 = vadd.f32 %v540, %v728
      %v730 = vpop.f32.mrb[0].mxu0
      %731 = vmatprep.mubr.f32.mxu0 0.0
      %732 = vmatmul.mubr.f32.gmra.mrb[0].mxu0 %v650
      %v733 = vpop.f32.mrb[0].mxu0
      %v734 = vadd.f32 %v540, %v733
      %v735 = vpop.f32.mrb[0].mxu0
      %736 = vdwg.mxu0
      %741 = vrot.lane.b32.xlu0 %v719, 96
      %v742 = vpop.permute.xlu0 %741
      %743 = vrot.lane.b32.xlu0 %v724, 96
      %v744 = vpop.permute.xlu0 %743
      %745 = vrot.lane.b32.xlu0 %v729, 96
      %v746 = vpop.permute.xlu0 %745
      %747 = vrot.lane.b32.xlu0 %v734, 96
      %v748 = vpop.permute.xlu0 %747
      %vm749 = vcmask 64512
      %v751 = vsel %vm749, %v622, 0
      %v754 = vsel %vm749, %v627, 0
      %v757 = vsel %vm749, %v632, 0
      %v760 = vsel %vm749, %v637, 0
      %v762 = vsel %vm749, %v742, 0
      %v764 = vsel %vm749, %v744, 0
      %v766 = vsel %vm749, %v746, 0
      %v768 = vsel %vm749, %v748, 0
      %770 = vmatprep.subr.mxu0 0.0
      %771 = vmatpush1.xpose.msra.mxu0 %v762
      %772 = vmatprep.subr.mxu0 0.0
      %773 = vmatpush1.xpose.msra.mxu0 %v764
      %774 = vmatprep.subr.mxu0 0.0
      %775 = vmatpush1.xpose.msra.mxu0 %v766
      %776 = vmatprep.subr.mxu0 0.0
      %777 = vmatpush1.xpose.msra.mxu0 %v768
      %778 = vmatprep.subr.mxu0 0.0
      %779 = vmatpush1.xpose.msra.mxu0 0.0
      %780 = vmatprep.subr.mxu0 0.0
      %781 = vmatpush1.xpose.msra.mxu0 0.0
      %782 = vmatprep.subr.mxu0 0.0
      %783 = vmatpush1.xpose.msra.mxu0 0.0
      %784 = vmatprep.subr.mxu0 0.0
      %785 = vmatpush1.xpose.msra.mxu0 0.0
      %786 = vmatprep.subr.mxu0 0.0
      %787 = vmatpush1.xpose.msra.mxu0 0.0
      %788 = vmatprep.subr.mxu0 0.0
      %789 = vmatpush1.xpose.msra.mxu0 0.0
      %790 = vmatprep.subr.mxu0 0.0
      %791 = vmatpush1.xpose.msra.mxu0 0.0
      %792 = vmatprep.subr.mxu0 0.0
      %793 = vmatpush1.xpose.msra.mxu0 0.0
      %794 = vmatprep.subr.mxu0 0.0
      %795 = vmatpush1.xpose.msra.mxu0 0.0
      %796 = vmatprep.subr.mxu0 0.0
      %797 = vmatpush1.xpose.msra.mxu0 0.0
      %798 = vmatprep.subr.mxu0 0.0
      %799 = vmatpush1.xpose.msra.mxu0 0.0
      %800 = vmatprep.subr.mxu0 0.0
      %801 = vmatpush1.xpose.msra.mxu0 0.0
      %802 = vmatprep.subr.mxu0 0.0
      %803 = vmatpush1.xpose.msra.mxu0 0.0
      %804 = vmatprep.subr.mxu0 0.0
      %805 = vmatpush1.xpose.msra.mxu0 0.0
      %806 = vmatprep.subr.mxu0 0.0
      %807 = vmatpush1.xpose.msra.mxu0 0.0
      %808 = vmatprep.subr.mxu0 0.0
      %809 = vmatpush1.xpose.msra.mxu0 0.0
      %810 = vmatprep.subr.mxu0 0.0
      %811 = vmatpush1.xpose.msra.mxu0 0.0
      %812 = vmatprep.subr.mxu0 0.0
      %813 = vmatpush1.xpose.msra.mxu0 0.0
      %814 = vmatprep.subr.mxu0 0.0
      %815 = vmatpush1.xpose.msra.mxu0 0.0
      %816 = vmatprep.subr.mxu0 0.0
      %817 = vmatpush1.xpose.msra.mxu0 0.0
      %818 = vmatprep.subr.mxu0 0.0
      %819 = vmatpush1.xpose.msra.mxu0 0.0
      %820 = vmatprep.subr.mxu0 0.0
      %821 = vmatpush1.xpose.msra.mxu0 0.0
      %822 = vmatprep.subr.mxu0 0.0
      %823 = vmatpush1.xpose.msra.mxu0 0.0
      %824 = vmatprep.subr.mxu0 0.0
      %825 = vmatpush1.xpose.msra.mxu0 0.0
      %826 = vmatprep.subr.mxu0 0.0
      %827 = vmatpush1.xpose.msra.mxu0 0.0
      %828 = vmatprep.subr.mxu0 0.0
      %829 = vmatpush1.xpose.msra.mxu0 0.0
      %830 = vmatprep.subr.mxu0 0.0
      %831 = vmatpush1.xpose.msra.mxu0 0.0
      %832 = vmatprep.subr.mxu0 0.0
      %833 = vmatpush1.xpose.msra.mxu0 0.0
      %834 = vmatprep.mubr.f32.mxu0 0.0
      %835 = vmatmul.mubr.f32.gmra.mrb[0].mxu0 %v751
      %v836 = vpop.f32.mrb[0].mxu0
      %v837 = vadd.f32 0.0, %v836
      %v838 = vpop.f32.mrb[0].mxu0
      %839 = vmatprep.mubr.f32.mxu0 0.0
      %840 = vmatmul.mubr.f32.gmra.mrb[0].mxu0 %v754
      %v841 = vpop.f32.mrb[0].mxu0
      %v842 = vadd.f32 0.0, %v841
      %v843 = vpop.f32.mrb[0].mxu0
      %844 = vmatprep.mubr.f32.mxu0 0.0
      %845 = vmatmul.mubr.f32.gmra.mrb[0].mxu0 %v757
      %v846 = vpop.f32.mrb[0].mxu0
      %v847 = vadd.f32 0.0, %v846
      %v848 = vpop.f32.mrb[0].mxu0
      %849 = vmatprep.mubr.f32.mxu0 0.0
      %850 = vmatmul.mubr.f32.gmra.mrb[0].mxu0 %v760
      %v851 = vpop.f32.mrb[0].mxu0
      %v852 = vadd.f32 0.0, %v851
      %v853 = vpop.f32.mrb[0].mxu0
      %854 = vdwg.mxu0
      %v855 = vmul.f32 %v837, 0.35355338
      %v856 = vmul.f32 %v842, 0.35355338
      %v857 = vmul.f32 %v847, 0.35355338
      %v858 = vmul.f32 %v852, 0.35355338
      %v859 = vadd.f32 %v855, %v520
      %v860 = vadd.f32 %v856, %v521
      %v861 = vadd.f32 %v857, %v522
      %v862 = vadd.f32 %v858, %v523
      %v863 = vsel %vm542, %v859, -inf
      %864 = vmax.xlane.f32.xlu0 %v863
      %v865 = vpop.xlane.xlu0 %864
      %v866 = vsel %vm542, %v860, -inf
      %867 = vmax.xlane.f32.xlu0 %v866
      %v868 = vpop.xlane.xlu0 %867
      %v869 = vsel %vm542, %v861, -inf
      %870 = vmax.xlane.f32.xlu0 %v869
      %v871 = vpop.xlane.xlu0 %870
      %v872 = vsel %vm542, %v862, -inf
      %873 = vmax.xlane.f32.xlu0 %v872
      %v874 = vpop.xlane.xlu0 %873
      %v875 = vsub.f32 %v859, %v865
      %v876 = vsub.f32 %v860, %v868
      %v877 = vsub.f32 %v861, %v871
      %v878 = vsub.f32 %v862, %v874
      %v879 = vmul.f32 %v875, 1.442695
      %v880 = vpow.pop %v879
      %v881 = vmul.f32 %v876, 1.442695
      %v882 = vpow.pop %v881
      %v883 = vmul.f32 %v877, 1.442695
      %v884 = vpow.pop %v883
      %v885 = vmul.f32 %v878, 1.442695
      %v886 = vpow.pop %v885
      %v887 = vsel %vm542, %v880, 0.0
      %888 = vadd.xlane.f32.xlu0 %v887
      %v889 = vpop.xlane.xlu0 %888
      %v890 = vsel %vm542, %v882, 0.0
      %891 = vadd.xlane.f32.xlu0 %v890
      %v892 = vpop.xlane.xlu0 %891
      %v893 = vsel %vm542, %v884, 0.0
      %894 = vadd.xlane.f32.xlu0 %v893
      %v895 = vpop.xlane.xlu0 %894
      %v896 = vsel %vm542, %v886, 0.0
      %897 = vadd.xlane.f32.xlu0 %v896
      %v898 = vpop.xlane.xlu0 %897
      %v899 = vrcp.pop %v889
      %v900 = vrcp.pop %v892
      %v901 = vrcp.pop %v895
      %v902 = vrcp.pop %v898
      %v903 = vmul.f32 %v880, %v899
      %v904 = vmul.f32 %v882, %v900
      %v905 = vmul.f32 %v884, %v901
      %v906 = vmul.f32 %v886, %v902
      %907 = vrot.lane.b32.xlu0 %v719, 64
      %v908 = vpop.permute.xlu0 %907
      %909 = vrot.lane.b32.xlu0 %v724, 64
      %v910 = vpop.permute.xlu0 %909
      %911 = vrot.lane.b32.xlu0 %v729, 64
      %v912 = vpop.permute.xlu0 %911
      %913 = vrot.lane.b32.xlu0 %v734, 64
      %v914 = vpop.permute.xlu0 %913
      %v920 = vsel %vm542, %v903, 0
      %v923 = vsel %vm542, %v904, 0
      %v926 = vsel %vm542, %v905, 0
      %v929 = vsel %vm542, %v906, 0
      %931 = vmatprep.subr.mxu0 0.0
      %932 = vmatpush1.msra.mxu0 %v908
      %933 = vmatprep.subr.mxu0 0.0
      %934 = vmatpush1.msra.mxu0 %v910
      %935 = vmatprep.subr.mxu0 0.0
      %936 = vmatpush1.msra.mxu0 %v912
      %937 = vmatprep.subr.mxu0 0.0
      %938 = vmatpush1.msra.mxu0 %v914
      %939 = vmatprep.subr.mxu0 0.0
      %940 = vmatpush1.msra.mxu0 0.0
      %941 = vmatprep.subr.mxu0 0.0
      %942 = vmatpush1.msra.mxu0 0.0
      %943 = vmatprep.subr.mxu0 0.0
      %944 = vmatpush1.msra.mxu0 0.0
      %945 = vmatprep.subr.mxu0 0.0
      %946 = vmatpush1.msra.mxu0 0.0
      %947 = vmatprep.subr.mxu0 0.0
      %948 = vmatpush1.msra.mxu0 0.0
      %949 = vmatprep.subr.mxu0 0.0
      %950 = vmatpush1.msra.mxu0 0.0
      %951 = vmatprep.subr.mxu0 0.0
      %952 = vmatpush1.msra.mxu0 0.0
      %953 = vmatprep.subr.mxu0 0.0
      %954 = vmatpush1.msra.mxu0 0.0
      %955 = vmatprep.subr.mxu0 0.0
      %956 = vmatpush1.msra.mxu0 0.0
      %957 = vmatprep.subr.mxu0 0.0
      %958 = vmatpush1.msra.mxu0 0.0
      %959 = vmatprep.subr.mxu0 0.0
      %960 = vmatpush1.msra.mxu0 0.0
      %961 = vmatprep.subr.mxu0 0.0
      %962 = vmatpush1.msra.mxu0 0.0
      %963 = vmatprep.subr.mxu0 0.0
      %964 = vmatpush1.msra.mxu0 0.0
      %965 = vmatprep.subr.mxu0 0.0
      %966 = vmatpush1.msra.mxu0 0.0
      %967 = vmatprep.subr.mxu0 0.0
      %968 = vmatpush1.msra.mxu0 0.0
      %969 = vmatprep.subr.mxu0 0.0
      %970 = vmatpush1.msra.mxu0 0.0
      %971 = vmatprep.subr.mxu0 0.0
      %972 = vmatpush1.msra.mxu0 0.0
      %973 = vmatprep.subr.mxu0 0.0
      %974 = vmatpush1.msra.mxu0 0.0
      %975 = vmatprep.subr.mxu0 0.0
      %976 = vmatpush1.msra.mxu0 0.0
      %977 = vmatprep.subr.mxu0 0.0
      %978 = vmatpush1.msra.mxu0 0.0
      %979 = vmatprep.subr.mxu0 0.0
      %980 = vmatpush1.msra.mxu0 0.0
      %981 = vmatprep.subr.mxu0 0.0
      %982 = vmatpush1.msra.mxu0 0.0
      %983 = vmatprep.subr.mxu0 0.0
      %984 = vmatpush1.msra.mxu0 0.0
      %985 = vmatprep.subr.mxu0 0.0
      %986 = vmatpush1.msra.mxu0 0.0
      %987 = vmatprep.subr.mxu0 0.0
      %988 = vmatpush1.msra.mxu0 0.0
      %989 = vmatprep.subr.mxu0 0.0
      %990 = vmatpush1.msra.mxu0 0.0
      %991 = vmatprep.subr.mxu0 0.0
      %992 = vmatpush1.msra.mxu0 0.0
      %993 = vmatprep.subr.mxu0 0.0
      %994 = vmatpush1.msra.mxu0 0.0
      %995 = vmatprep.mubr.f32.mxu0 0.0
      %996 = vmatmul.mubr.f32.gmra.mrb[0].mxu0 %v920
      %v997 = vpop.f32.mrb[0].mxu0
      %v998 = vadd.f32 0.0, %v997
      %v999 = vpop.f32.mrb[0].mxu0
      %1000 = vmatprep.mubr.f32.mxu0 0.0
      %1001 = vmatmul.mubr.f32.gmra.mrb[0].mxu0 %v923
      %v1002 = vpop.f32.mrb[0].mxu0
      %v1003 = vadd.f32 0.0, %v1002
      %v1004 = vpop.f32.mrb[0].mxu0
      %1005 = vmatprep.mubr.f32.mxu0 0.0
      %1006 = vmatmul.mubr.f32.gmra.mrb[0].mxu0 %v926
      %v1007 = vpop.f32.mrb[0].mxu0
      %v1008 = vadd.f32 0.0, %v1007
      %v1009 = vpop.f32.mrb[0].mxu0
      %1010 = vmatprep.mubr.f32.mxu0 0.0
      %1011 = vmatmul.mubr.f32.gmra.mrb[0].mxu0 %v929
      %v1012 = vpop.f32.mrb[0].mxu0
      %v1013 = vadd.f32 0.0, %v1012
      %v1014 = vpop.f32.mrb[0].mxu0
      %1015 = vdwg.mxu0
      %1016 = vrot.lane.b32.xlu0 %v622, 120
      %v1017 = vpop.permute.xlu0 %1016
      %1018 = vrot.lane.b32.xlu0 %v627, 120
      %v1019 = vpop.permute.xlu0 %1018
      %1020 = vrot.lane.b32.xlu0 %v632, 120
      %v1021 = vpop.permute.xlu0 %1020
      %1022 = vrot.lane.b32.xlu0 %v637, 120
      %v1023 = vpop.permute.xlu0 %1022
      %1024 = vrot.lane.b32.xlu0 %v719, 88
      %v1025 = vpop.permute.xlu0 %1024
      %1026 = vrot.lane.b32.xlu0 %v724, 88
      %v1027 = vpop.permute.xlu0 %1026
      %1028 = vrot.lane.b32.xlu0 %v729, 88
      %v1029 = vpop.permute.xlu0 %1028
      %1030 = vrot.lane.b32.xlu0 %v734, 88
      %v1031 = vpop.permute.xlu0 %1030
      %v1032 = vsel %vm749, %v1017, 0
      %v1034 = vsel %vm749, %v1019, 0
      %v1036 = vsel %vm749, %v1021, 0
      %v1038 = vsel %vm749, %v1023, 0
      %v1040 = vsel %vm749, %v1025, 0
      %v1042 = vsel %vm749, %v1027, 0
      %v1044 = vsel %vm749, %v1029, 0
      %v1046 = vsel %vm749, %v1031, 0
      %1048 = vmatprep.subr.mxu0 0.0
      %1049 = vmatpush1.xpose.msra.mxu0 %v1040
      %1050 = vmatprep.subr.mxu0 0.0
      %1051 = vmatpush1.xpose.msra.mxu0 %v1042
      %1052 = vmatprep.subr.mxu0 0.0
      %1053 = vmatpush1.xpose.msra.mxu0 %v1044
      %1054 = vmatprep.subr.mxu0 0.0
      %1055 = vmatpush1.xpose.msra.mxu0 %v1046
      %1056 = vmatprep.subr.mxu0 0.0
      %1057 = vmatpush1.xpose.msra.mxu0 0.0
      %1058 = vmatprep.subr.mxu0 0.0
      %1059 = vmatpush1.xpose.msra.mxu0 0.0
      %1060 = vmatprep.subr.mxu0 0.0
      %1061 = vmatpush1.xpose.msra.mxu0 0.0
      %1062 = vmatprep.subr.mxu0 0.0
      %1063 = vmatpush1.xpose.msra.mxu0 0.0
      %1064 = vmatprep.subr.mxu0 0.0
      %1065 = vmatpush1.xpose.msra.mxu0 0.0
      %1066 = vmatprep.subr.mxu0 0.0
      %1067 = vmatpush1.xpose.msra.mxu0 0.0
      %1068 = vmatprep.subr.mxu0 0.0
      %1069 = vmatpush1.xpose.msra.mxu0 0.0
      %1070 = vmatprep.subr.mxu0 0.0
      %1071 = vmatpush1.xpose.msra.mxu0 0.0
      %1072 = vmatprep.subr.mxu0 0.0
      %1073 = vmatpush1.xpose.msra.mxu0 0.0
      %1074 = vmatprep.subr.mxu0 0.0
      %1075 = vmatpush1.xpose.msra.mxu0 0.0
      %1076 = vmatprep.subr.mxu0 0.0
      %1077 = vmatpush1.xpose.msra.mxu0 0.0
      %1078 = vmatprep.subr.mxu0 0.0
      %1079 = vmatpush1.xpose.msra.mxu0 0.0
      %1080 = vmatprep.subr.mxu0 0.0
      %1081 = vmatpush1.xpose.msra.mxu0 0.0
      %1082 = vmatprep.subr.mxu0 0.0
      %1083 = vmatpush1.xpose.msra.mxu0 0.0
      %1084 = vmatprep.subr.mxu0 0.0
      %1085 = vmatpush1.xpose.msra.mxu0 0.0
      %1086 = vmatprep.subr.mxu0 0.0
      %1087 = vmatpush1.xpose.msra.mxu0 0.0
      %1088 = vmatprep.subr.mxu0 0.0
      %1089 = vmatpush1.xpose.msra.mxu0 0.0
      %1090 = vmatprep.subr.mxu0 0.0
      %1091 = vmatpush1.xpose.msra.mxu0 0.0
      %1092 = vmatprep.subr.mxu0 0.0
      %1093 = vmatpush1.xpose.msra.mxu0 0.0
      %1094 = vmatprep.subr.mxu0 0.0
      %1095 = vmatpush1.xpose.msra.mxu0 0.0
      %1096 = vmatprep.subr.mxu0 0.0
      %1097 = vmatpush1.xpose.msra.mxu0 0.0
      %1098 = vmatprep.subr.mxu0 0.0
      %1099 = vmatpush1.xpose.msra.mxu0 0.0
      %1100 = vmatprep.subr.mxu0 0.0
      %1101 = vmatpush1.xpose.msra.mxu0 0.0
      %1102 = vmatprep.subr.mxu0 0.0
      %1103 = vmatpush1.xpose.msra.mxu0 0.0
      %1104 = vmatprep.subr.mxu0 0.0
      %1105 = vmatpush1.xpose.msra.mxu0 0.0
      %1106 = vmatprep.subr.mxu0 0.0
      %1107 = vmatpush1.xpose.msra.mxu0 0.0
      %1108 = vmatprep.subr.mxu0 0.0
      %1109 = vmatpush1.xpose.msra.mxu0 0.0
      %1110 = vmatprep.subr.mxu0 0.0
      %1111 = vmatpush1.xpose.msra.mxu0 0.0
      %1112 = vmatprep.mubr.f32.mxu0 0.0
      %1113 = vmatmul.mubr.f32.gmra.mrb[0].mxu0 %v1032
      %v1114 = vpop.f32.mrb[0].mxu0
      %v1115 = vadd.f32 0.0, %v1114
      %v1116 = vpop.f32.mrb[0].mxu0
      %1117 = vmatprep.mubr.f32.mxu0 0.0
      %1118 = vmatmul.mubr.f32.gmra.mrb[0].mxu0 %v1034
      %v1119 = vpop.f32.mrb[0].mxu0
      %v1120 = vadd.f32 0.0, %v1119
      %v1121 = vpop.f32.mrb[0].mxu0
      %1122 = vmatprep.mubr.f32.mxu0 0.0
      %1123 = vmatmul.mubr.f32.gmra.mrb[0].mxu0 %v1036
      %v1124 = vpop.f32.mrb[0].mxu0
      %v1125 = vadd.f32 0.0, %v1124
      %v1126 = vpop.f32.mrb[0].mxu0
      %1127 = vmatprep.mubr.f32.mxu0 0.0
      %1128 = vmatmul.mubr.f32.gmra.mrb[0].mxu0 %v1038
      %v1129 = vpop.f32.mrb[0].mxu0
      %v1130 = vadd.f32 0.0, %v1129
      %v1131 = vpop.f32.mrb[0].mxu0
      %1132 = vdwg.mxu0
      %v1133 = vmul.f32 %v1115, 0.35355338
      %v1134 = vmul.f32 %v1120, 0.35355338
      %v1135 = vmul.f32 %v1125, 0.35355338
      %v1136 = vmul.f32 %v1130, 0.35355338
      %v1137 = vadd.f32 %v1133, %v520
      %v1138 = vadd.f32 %v1134, %v521
      %v1139 = vadd.f32 %v1135, %v522
      %v1140 = vadd.f32 %v1136, %v523
      %v1141 = vsel %vm542, %v1137, -inf
      %1142 = vmax.xlane.f32.xlu0 %v1141
      %v1143 = vpop.xlane.xlu0 %1142
      %v1144 = vsel %vm542, %v1138, -inf
      %1145 = vmax.xlane.f32.xlu0 %v1144
      %v1146 = vpop.xlane.xlu0 %1145
      %v1147 = vsel %vm542, %v1139, -inf
      %1148 = vmax.xlane.f32.xlu0 %v1147
      %v1149 = vpop.xlane.xlu0 %1148
      %v1150 = vsel %vm542, %v1140, -inf
      %1151 = vmax.xlane.f32.xlu0 %v1150
      %v1152 = vpop.xlane.xlu0 %1151
      %v1153 = vsub.f32 %v1137, %v1143
      %v1154 = vsub.f32 %v1138, %v1146
      %v1155 = vsub.f32 %v1139, %v1149
      %v1156 = vsub.f32 %v1140, %v1152
      %v1157 = vmul.f32 %v1153, 1.442695
      %v1158 = vpow.pop %v1157
      %v1159 = vmul.f32 %v1154, 1.442695
      %v1160 = vpow.pop %v1159
      %v1161 = vmul.f32 %v1155, 1.442695
      %v1162 = vpow.pop %v1161
      %v1163 = vmul.f32 %v1156, 1.442695
      %v1164 = vpow.pop %v1163
      %v1165 = vsel %vm542, %v1158, 0.0
      %1166 = vadd.xlane.f32.xlu0 %v1165
      %v1167 = vpop.xlane.xlu0 %1166
      %v1168 = vsel %vm542, %v1160, 0.0
      %1169 = vadd.xlane.f32.xlu0 %v1168
      %v1170 = vpop.xlane.xlu0 %1169
      %v1171 = vsel %vm542, %v1162, 0.0
      %1172 = vadd.xlane.f32.xlu0 %v1171
      %v1173 = vpop.xlane.xlu0 %1172
      %v1174 = vsel %vm542, %v1164, 0.0
      %1175 = vadd.xlane.f32.xlu0 %v1174
      %v1176 = vpop.xlane.xlu0 %1175
      %v1177 = vrcp.pop %v1167
      %v1178 = vrcp.pop %v1170
      %v1179 = vrcp.pop %v1173
      %v1180 = vrcp.pop %v1176
      %v1181 = vmul.f32 %v1158, %v1177
      %v1182 = vmul.f32 %v1160, %v1178
      %v1183 = vmul.f32 %v1162, %v1179
      %v1184 = vmul.f32 %v1164, %v1180
      %1185 = vrot.lane.b32.xlu0 %v719, 56
      %v1186 = vpop.permute.xlu0 %1185
      %1187 = vrot.lane.b32.xlu0 %v724, 56
      %v1188 = vpop.permute.xlu0 %1187
      %1189 = vrot.lane.b32.xlu0 %v729, 56
      %v1190 = vpop.permute.xlu0 %1189
      %1191 = vrot.lane.b32.xlu0 %v734, 56
      %v1192 = vpop.permute.xlu0 %1191
      %v1198 = vsel %vm542, %v1181, 0
      %v1201 = vsel %vm542, %v1182, 0
      %v1204 = vsel %vm542, %v1183, 0
      %v1207 = vsel %vm542, %v1184, 0
      %1209 = vmatprep.subr.mxu0 0.0
      %1210 = vmatpush1.msra.mxu0 %v1186
      %1211 = vmatprep.subr.mxu0 0.0
      %1212 = vmatpush1.msra.mxu0 %v1188
      %1213 = vmatprep.subr.mxu0 0.0
      %1214 = vmatpush1.msra.mxu0 %v1190
      %1215 = vmatprep.subr.mxu0 0.0
      %1216 = vmatpush1.msra.mxu0 %v1192
      %1217 = vmatprep.subr.mxu0 0.0
      %1218 = vmatpush1.msra.mxu0 0.0
      %1219 = vmatprep.subr.mxu0 0.0
      %1220 = vmatpush1.msra.mxu0 0.0
      %1221 = vmatprep.subr.mxu0 0.0
      %1222 = vmatpush1.msra.mxu0 0.0
      %1223 = vmatprep.subr.mxu0 0.0
      %1224 = vmatpush1.msra.mxu0 0.0
      %1225 = vmatprep.subr.mxu0 0.0
      %1226 = vmatpush1.msra.mxu0 0.0
      %1227 = vmatprep.subr.mxu0 0.0
      %1228 = vmatpush1.msra.mxu0 0.0
      %1229 = vmatprep.subr.mxu0 0.0
      %1230 = vmatpush1.msra.mxu0 0.0
      %1231 = vmatprep.subr.mxu0 0.0
      %1232 = vmatpush1.msra.mxu0 0.0
      %1233 = vmatprep.subr.mxu0 0.0
      %1234 = vmatpush1.msra.mxu0 0.0
      %1235 = vmatprep.subr.mxu0 0.0
      %1236 = vmatpush1.msra.mxu0 0.0
      %1237 = vmatprep.subr.mxu0 0.0
      %1238 = vmatpush1.msra.mxu0 0.0
      %1239 = vmatprep.subr.mxu0 0.0
      %1240 = vmatpush1.msra.mxu0 0.0
      %1241 = vmatprep.subr.mxu0 0.0
      %1242 = vmatpush1.msra.mxu0 0.0
      %1243 = vmatprep.subr.mxu0 0.0
      %1244 = vmatpush1.msra.mxu0 0.0
      %1245 = vmatprep.subr.mxu0 0.0
      %1246 = vmatpush1.msra.mxu0 0.0
      %1247 = vmatprep.subr.mxu0 0.0
      %1248 = vmatpush1.msra.mxu0 0.0
      %1249 = vmatprep.subr.mxu0 0.0
      %1250 = vmatpush1.msra.mxu0 0.0
      %1251 = vmatprep.subr.mxu0 0.0
      %1252 = vmatpush1.msra.mxu0 0.0
      %1253 = vmatprep.subr.mxu0 0.0
      %1254 = vmatpush1.msra.mxu0 0.0
      %1255 = vmatprep.subr.mxu0 0.0
      %1256 = vmatpush1.msra.mxu0 0.0
      %1257 = vmatprep.subr.mxu0 0.0
      %1258 = vmatpush1.msra.mxu0 0.0
      %1259 = vmatprep.subr.mxu0 0.0
      %1260 = vmatpush1.msra.mxu0 0.0
      %1261 = vmatprep.subr.mxu0 0.0
      %1262 = vmatpush1.msra.mxu0 0.0
      %1263 = vmatprep.subr.mxu0 0.0
      %1264 = vmatpush1.msra.mxu0 0.0
      %1265 = vmatprep.subr.mxu0 0.0
      %1266 = vmatpush1.msra.mxu0 0.0
      %1267 = vmatprep.subr.mxu0 0.0
      %1268 = vmatpush1.msra.mxu0 0.0
      %1269 = vmatprep.subr.mxu0 0.0
      %1270 = vmatpush1.msra.mxu0 0.0
      %1271 = vmatprep.subr.mxu0 0.0
      %1272 = vmatpush1.msra.mxu0 0.0
      %1273 = vmatprep.mubr.f32.mxu0 0.0
      %1274 = vmatmul.mubr.f32.gmra.mrb[0].mxu0 %v1198
      %v1275 = vpop.f32.mrb[0].mxu0
      %v1276 = vadd.f32 0.0, %v1275
      %v1277 = vpop.f32.mrb[0].mxu0
      %1278 = vmatprep.mubr.f32.mxu0 0.0
      %1279 = vmatmul.mubr.f32.gmra.mrb[0].mxu0 %v1201
      %v1280 = vpop.f32.mrb[0].mxu0
      %v1281 = vadd.f32 0.0, %v1280
      %v1282 = vpop.f32.mrb[0].mxu0
      %1283 = vmatprep.mubr.f32.mxu0 0.0
      %1284 = vmatmul.mubr.f32.gmra.mrb[0].mxu0 %v1204
      %v1285 = vpop.f32.mrb[0].mxu0
      %v1286 = vadd.f32 0.0, %v1285
      %v1287 = vpop.f32.mrb[0].mxu0
      %1288 = vmatprep.mubr.f32.mxu0 0.0
      %1289 = vmatmul.mubr.f32.gmra.mrb[0].mxu0 %v1207
      %v1290 = vpop.f32.mrb[0].mxu0
      %v1291 = vadd.f32 0.0, %v1290
      %v1292 = vpop.f32.mrb[0].mxu0
      %1293 = vdwg.mxu0
      %v1295 = vsel %vm749, %v1276, 0
      %v1298 = vsel %vm749, %v1281, 0
      %v1301 = vsel %vm749, %v1286, 0
      %v1304 = vsel %vm749, %v1291, 0
      %1306 = vmatprep.subr.mxu0 0.0
      %1307 = vmatpush1.msra.mxu0 %v530
      %1308 = vmatprep.subr.mxu0 0.0
      %1309 = vmatpush1.msra.mxu0 0.0
      %1310 = vmatprep.subr.mxu0 0.0
      %1311 = vmatpush1.msra.mxu0 0.0
      %1312 = vmatprep.subr.mxu0 0.0
      %1313 = vmatpush1.msra.mxu0 0.0
      %1314 = vmatprep.subr.mxu0 0.0
      %1315 = vmatpush1.msra.mxu0 0.0
      %1316 = vmatprep.subr.mxu0 0.0
      %1317 = vmatpush1.msra.mxu0 0.0
      %1318 = vmatprep.subr.mxu0 0.0
      %1319 = vmatpush1.msra.mxu0 0.0
      %1320 = vmatprep.subr.mxu0 0.0
      %1321 = vmatpush1.msra.mxu0 0.0
      %1322 = vmatprep.subr.mxu0 0.0
      %1323 = vmatpush1.msra.mxu0 0.0
      %1324 = vmatprep.subr.mxu0 0.0
      %1325 = vmatpush1.msra.mxu0 0.0
      %1326 = vmatprep.subr.mxu0 0.0
      %1327 = vmatpush1.msra.mxu0 0.0
      %1328 = vmatprep.subr.mxu0 0.0
      %1329 = vmatpush1.msra.mxu0 0.0
      %1330 = vmatprep.subr.mxu0 0.0
      %1331 = vmatpush1.msra.mxu0 0.0
      %1332 = vmatprep.subr.mxu0 0.0
      %1333 = vmatpush1.msra.mxu0 0.0
      %1334 = vmatprep.subr.mxu0 0.0
      %1335 = vmatpush1.msra.mxu0 0.0
      %1336 = vmatprep.subr.mxu0 0.0
      %1337 = vmatpush1.msra.mxu0 0.0
      %1338 = vmatprep.subr.mxu0 0.0
      %1339 = vmatpush1.msra.mxu0 0.0
      %1340 = vmatprep.subr.mxu0 0.0
      %1341 = vmatpush1.msra.mxu0 0.0
      %1342 = vmatprep.subr.mxu0 0.0
      %1343 = vmatpush1.msra.mxu0 0.0
      %1344 = vmatprep.subr.mxu0 0.0
      %1345 = vmatpush1.msra.mxu0 0.0
      %1346 = vmatprep.subr.mxu0 0.0
      %1347 = vmatpush1.msra.mxu0 0.0
      %1348 = vmatprep.subr.mxu0 0.0
      %1349 = vmatpush1.msra.mxu0 0.0
      %1350 = vmatprep.subr.mxu0 0.0
      %1351 = vmatpush1.msra.mxu0 0.0
      %1352 = vmatprep.subr.mxu0 0.0
      %1353 = vmatpush1.msra.mxu0 0.0
      %1354 = vmatprep.subr.mxu0 0.0
      %1355 = vmatpush1.msra.mxu0 0.0
      %1356 = vmatprep.subr.mxu0 0.0
      %1357 = vmatpush1.msra.mxu0 0.0
      %1358 = vmatprep.subr.mxu0 0.0
      %1359 = vmatpush1.msra.mxu0 0.0
      %1360 = vmatprep.subr.mxu0 0.0
      %1361 = vmatpush1.msra.mxu0 0.0
      %1362 = vmatprep.subr.mxu0 0.0
      %1363 = vmatpush1.msra.mxu0 0.0
      %1364 = vmatprep.subr.mxu0 0.0
      %1365 = vmatpush1.msra.mxu0 0.0
      %1366 = vmatprep.subr.mxu0 0.0
      %1367 = vmatpush1.msra.mxu0 0.0
      %1368 = vmatprep.subr.mxu0 0.0
      %1369 = vmatpush1.msra.mxu0 0.0
      %1370 = vmatprep.mubr.f32.mxu0 0.0
      %1371 = vmatmul.mubr.f32.gmra.mrb[0].mxu0 %v1295
      %v1372 = vpop.f32.mrb[0].mxu0
      %v1373 = vadd.f32 0.0, %v1372
      %v1374 = vpop.f32.mrb[0].mxu0
      %1375 = vmatprep.mubr.f32.mxu0 0.0
      %1376 = vmatmul.mubr.f32.gmra.mrb[0].mxu0 %v1298
      %v1377 = vpop.f32.mrb[0].mxu0
      %v1378 = vadd.f32 0.0, %v1377
      %v1379 = vpop.f32.mrb[0].mxu0
      %1380 = vmatprep.mubr.f32.mxu0 0.0
      %1381 = vmatmul.mubr.f32.gmra.mrb[0].mxu0 %v1301
      %v1382 = vpop.f32.mrb[0].mxu0
      %v1383 = vadd.f32 0.0, %v1382
      %v1384 = vpop.f32.mrb[0].mxu0
      %1385 = vmatprep.mubr.f32.mxu0 0.0
      %1386 = vmatmul.mubr.f32.gmra.mrb[0].mxu0 %v1304
      %v1387 = vpop.f32.mrb[0].mxu0
      %v1388 = vadd.f32 0.0, %v1387
      %v1389 = vpop.f32.mrb[0].mxu0
      %1390 = vdwg.mxu0
      %v1392 = vsel %vm749, %v998, 0
      %v1395 = vsel %vm749, %v1003, 0
      %v1398 = vsel %vm749, %v1008, 0
      %v1401 = vsel %vm749, %v1013, 0
      %1403 = vmatprep.subr.mxu0 0.0
      %1404 = vmatpush1.msra.mxu0 %v529
      %1405 = vmatprep.subr.mxu0 0.0
      %1406 = vmatpush1.msra.mxu0 0.0
      %1407 = vmatprep.subr.mxu0 0.0
      %1408 = vmatpush1.msra.mxu0 0.0
      %1409 = vmatprep.subr.mxu0 0.0
      %1410 = vmatpush1.msra.mxu0 0.0
      %1411 = vmatprep.subr.mxu0 0.0
      %1412 = vmatpush1.msra.mxu0 0.0
      %1413 = vmatprep.subr.mxu0 0.0
      %1414 = vmatpush1.msra.mxu0 0.0
      %1415 = vmatprep.subr.mxu0 0.0
      %1416 = vmatpush1.msra.mxu0 0.0
      %1417 = vmatprep.subr.mxu0 0.0
      %1418 = vmatpush1.msra.mxu0 0.0
      %1419 = vmatprep.subr.mxu0 0.0
      %1420 = vmatpush1.msra.mxu0 0.0
      %1421 = vmatprep.subr.mxu0 0.0
      %1422 = vmatpush1.msra.mxu0 0.0
      %1423 = vmatprep.subr.mxu0 0.0
      %1424 = vmatpush1.msra.mxu0 0.0
      %1425 = vmatprep.subr.mxu0 0.0
      %1426 = vmatpush1.msra.mxu0 0.0
      %1427 = vmatprep.subr.mxu0 0.0
      %1428 = vmatpush1.msra.mxu0 0.0
      %1429 = vmatprep.subr.mxu0 0.0
      %1430 = vmatpush1.msra.mxu0 0.0
      %1431 = vmatprep.subr.mxu0 0.0
      %1432 = vmatpush1.msra.mxu0 0.0
      %1433 = vmatprep.subr.mxu0 0.0
      %1434 = vmatpush1.msra.mxu0 0.0
      %1435 = vmatprep.subr.mxu0 0.0
      %1436 = vmatpush1.msra.mxu0 0.0
      %1437 = vmatprep.subr.mxu0 0.0
      %1438 = vmatpush1.msra.mxu0 0.0
      %1439 = vmatprep.subr.mxu0 0.0
      %1440 = vmatpush1.msra.mxu0 0.0
      %1441 = vmatprep.subr.mxu0 0.0
      %1442 = vmatpush1.msra.mxu0 0.0
      %1443 = vmatprep.subr.mxu0 0.0
      %1444 = vmatpush1.msra.mxu0 0.0
      %1445 = vmatprep.subr.mxu0 0.0
      %1446 = vmatpush1.msra.mxu0 0.0
      %1447 = vmatprep.subr.mxu0 0.0
      %1448 = vmatpush1.msra.mxu0 0.0
      %1449 = vmatprep.subr.mxu0 0.0
      %1450 = vmatpush1.msra.mxu0 0.0
      %1451 = vmatprep.subr.mxu0 0.0
      %1452 = vmatpush1.msra.mxu0 0.0
      %1453 = vmatprep.subr.mxu0 0.0
      %1454 = vmatpush1.msra.mxu0 0.0
      %1455 = vmatprep.subr.mxu0 0.0
      %1456 = vmatpush1.msra.mxu0 0.0
      %1457 = vmatprep.subr.mxu0 0.0
      %1458 = vmatpush1.msra.mxu0 0.0
      %1459 = vmatprep.subr.mxu0 0.0
      %1460 = vmatpush1.msra.mxu0 0.0
      %1461 = vmatprep.subr.mxu0 0.0
      %1462 = vmatpush1.msra.mxu0 0.0
      %1463 = vmatprep.subr.mxu0 0.0
      %1464 = vmatpush1.msra.mxu0 0.0
      %1465 = vmatprep.subr.mxu0 0.0
      %1466 = vmatpush1.msra.mxu0 0.0
      %1467 = vmatprep.mubr.f32.mxu0 0.0
      %1468 = vmatmul.mubr.f32.gmra.mrb[0].mxu0 %v1392
      %v1469 = vpop.f32.mrb[0].mxu0
      %v1470 = vadd.f32 %v1373, %v1469
      %v1471 = vpop.f32.mrb[0].mxu0
      %1472 = vmatprep.mubr.f32.mxu0 0.0
      %1473 = vmatmul.mubr.f32.gmra.mrb[0].mxu0 %v1395
      %v1474 = vpop.f32.mrb[0].mxu0
      %v1475 = vadd.f32 %v1378, %v1474
      %v1476 = vpop.f32.mrb[0].mxu0
      %1477 = vmatprep.mubr.f32.mxu0 0.0
      %1478 = vmatmul.mubr.f32.gmra.mrb[0].mxu0 %v1398
      %v1479 = vpop.f32.mrb[0].mxu0
      %v1480 = vadd.f32 %v1383, %v1479
      %v1481 = vpop.f32.mrb[0].mxu0
      %1482 = vmatprep.mubr.f32.mxu0 0.0
      %1483 = vmatmul.mubr.f32.gmra.mrb[0].mxu0 %v1401
      %v1484 = vpop.f32.mrb[0].mxu0
      %v1485 = vadd.f32 %v1388, %v1484
      %v1486 = vpop.f32.mrb[0].mxu0
      %1487 = vdwg.mxu0
      %1488 = vrot.lane.b32.xlu0 %v622, 112
      %v1489 = vpop.permute.xlu0 %1488
      %1490 = vrot.lane.b32.xlu0 %v627, 112
      %v1491 = vpop.permute.xlu0 %1490
      %1492 = vrot.lane.b32.xlu0 %v632, 112
      %v1493 = vpop.permute.xlu0 %1492
      %1494 = vrot.lane.b32.xlu0 %v637, 112
      %v1495 = vpop.permute.xlu0 %1494
      %1496 = vrot.lane.b32.xlu0 %v719, 80
      %v1497 = vpop.permute.xlu0 %1496
      %1498 = vrot.lane.b32.xlu0 %v724, 80
      %v1499 = vpop.permute.xlu0 %1498
      %1500 = vrot.lane.b32.xlu0 %v729, 80
      %v1501 = vpop.permute.xlu0 %1500
      %1502 = vrot.lane.b32.xlu0 %v734, 80
      %v1503 = vpop.permute.xlu0 %1502
      %v1504 = vsel %vm749, %v1489, 0
      %v1506 = vsel %vm749, %v1491, 0
      %v1508 = vsel %vm749, %v1493, 0
      %v1510 = vsel %vm749, %v1495, 0
      %v1512 = vsel %vm749, %v1497, 0
      %v1514 = vsel %vm749, %v1499, 0
      %v1516 = vsel %vm749, %v1501, 0
      %v1518 = vsel %vm749, %v1503, 0
      %1520 = vmatprep.subr.mxu0 0.0
      %1521 = vmatpush1.xpose.msra.mxu0 %v1512
      %1522 = vmatprep.subr.mxu0 0.0
      %1523 = vmatpush1.xpose.msra.mxu0 %v1514
      %1524 = vmatprep.subr.mxu0 0.0
      %1525 = vmatpush1.xpose.msra.mxu0 %v1516
      %1526 = vmatprep.subr.mxu0 0.0
      %1527 = vmatpush1.xpose.msra.mxu0 %v1518
      %1528 = vmatprep.subr.mxu0 0.0
      %1529 = vmatpush1.xpose.msra.mxu0 0.0
      %1530 = vmatprep.subr.mxu0 0.0
      %1531 = vmatpush1.xpose.msra.mxu0 0.0
      %1532 = vmatprep.subr.mxu0 0.0
      %1533 = vmatpush1.xpose.msra.mxu0 0.0
      %1534 = vmatprep.subr.mxu0 0.0
      %1535 = vmatpush1.xpose.msra.mxu0 0.0
      %1536 = vmatprep.subr.mxu0 0.0
      %1537 = vmatpush1.xpose.msra.mxu0 0.0
      %1538 = vmatprep.subr.mxu0 0.0
      %1539 = vmatpush1.xpose.msra.mxu0 0.0
      %1540 = vmatprep.subr.mxu0 0.0
      %1541 = vmatpush1.xpose.msra.mxu0 0.0
      %1542 = vmatprep.subr.mxu0 0.0
      %1543 = vmatpush1.xpose.msra.mxu0 0.0
      %1544 = vmatprep.subr.mxu0 0.0
      %1545 = vmatpush1.xpose.msra.mxu0 0.0
      %1546 = vmatprep.subr.mxu0 0.0
      %1547 = vmatpush1.xpose.msra.mxu0 0.0
      %1548 = vmatprep.subr.mxu0 0.0
      %1549 = vmatpush1.xpose.msra.mxu0 0.0
      %1550 = vmatprep.subr.mxu0 0.0
      %1551 = vmatpush1.xpose.msra.mxu0 0.0
      %1552 = vmatprep.subr.mxu0 0.0
      %1553 = vmatpush1.xpose.msra.mxu0 0.0
      %1554 = vmatprep.subr.mxu0 0.0
      %1555 = vmatpush1.xpose.msra.mxu0 0.0
      %1556 = vmatprep.subr.mxu0 0.0
      %1557 = vmatpush1.xpose.msra.mxu0 0.0
      %1558 = vmatprep.subr.mxu0 0.0
      %1559 = vmatpush1.xpose.msra.mxu0 0.0
      %1560 = vmatprep.subr.mxu0 0.0
      %1561 = vmatpush1.xpose.msra.mxu0 0.0
      %1562 = vmatprep.subr.mxu0 0.0
      %1563 = vmatpush1.xpose.msra.mxu0 0.0
      %1564 = vmatprep.subr.mxu0 0.0
      %1565 = vmatpush1.xpose.msra.mxu0 0.0
      %1566 = vmatprep.subr.mxu0 0.0
      %1567 = vmatpush1.xpose.msra.mxu0 0.0
      %1568 = vmatprep.subr.mxu0 0.0
      %1569 = vmatpush1.xpose.msra.mxu0 0.0
      %1570 = vmatprep.subr.mxu0 0.0
      %1571 = vmatpush1.xpose.msra.mxu0 0.0
      %1572 = vmatprep.subr.mxu0 0.0
      %1573 = vmatpush1.xpose.msra.mxu0 0.0
      %1574 = vmatprep.subr.mxu0 0.0
      %1575 = vmatpush1.xpose.msra.mxu0 0.0
      %1576 = vmatprep.subr.mxu0 0.0
      %1577 = vmatpush1.xpose.msra.mxu0 0.0
      %1578 = vmatprep.subr.mxu0 0.0
      %1579 = vmatpush1.xpose.msra.mxu0 0.0
      %1580 = vmatprep.subr.mxu0 0.0
      %1581 = vmatpush1.xpose.msra.mxu0 0.0
      %1582 = vmatprep.subr.mxu0 0.0
      %1583 = vmatpush1.xpose.msra.mxu0 0.0
      %1584 = vmatprep.mubr.f32.mxu0 0.0
      %1585 = vmatmul.mubr.f32.gmra.mrb[0].mxu0 %v1504
      %v1586 = vpop.f32.mrb[0].mxu0
      %v1587 = vadd.f32 0.0, %v1586
      %v1588 = vpop.f32.mrb[0].mxu0
      %1589 = vmatprep.mubr.f32.mxu0 0.0
      %1590 = vmatmul.mubr.f32.gmra.mrb[0].mxu0 %v1506
      %v1591 = vpop.f32.mrb[0].mxu0
      %v1592 = vadd.f32 0.0, %v1591
      %v1593 = vpop.f32.mrb[0].mxu0
      %1594 = vmatprep.mubr.f32.mxu0 0.0
      %1595 = vmatmul.mubr.f32.gmra.mrb[0].mxu0 %v1508
      %v1596 = vpop.f32.mrb[0].mxu0
      %v1597 = vadd.f32 0.0, %v1596
      %v1598 = vpop.f32.mrb[0].mxu0
      %1599 = vmatprep.mubr.f32.mxu0 0.0
      %1600 = vmatmul.mubr.f32.gmra.mrb[0].mxu0 %v1510
      %v1601 = vpop.f32.mrb[0].mxu0
      %v1602 = vadd.f32 0.0, %v1601
      %v1603 = vpop.f32.mrb[0].mxu0
      %1604 = vdwg.mxu0
      %v1605 = vmul.f32 %v1587, 0.35355338
      %v1606 = vmul.f32 %v1592, 0.35355338
      %v1607 = vmul.f32 %v1597, 0.35355338
      %v1608 = vmul.f32 %v1602, 0.35355338
      %v1609 = vadd.f32 %v1605, %v520
      %v1610 = vadd.f32 %v1606, %v521
      %v1611 = vadd.f32 %v1607, %v522
      %v1612 = vadd.f32 %v1608, %v523
      %v1613 = vsel %vm542, %v1609, -inf
      %1614 = vmax.xlane.f32.xlu0 %v1613
      %v1615 = vpop.xlane.xlu0 %1614
      %v1616 = vsel %vm542, %v1610, -inf
      %1617 = vmax.xlane.f32.xlu0 %v1616
      %v1618 = vpop.xlane.xlu0 %1617
      %v1619 = vsel %vm542, %v1611, -inf
      %1620 = vmax.xlane.f32.xlu0 %v1619
      %v1621 = vpop.xlane.xlu0 %1620
      %v1622 = vsel %vm542, %v1612, -inf
      %1623 = vmax.xlane.f32.xlu0 %v1622
      %v1624 = vpop.xlane.xlu0 %1623
      %v1625 = vsub.f32 %v1609, %v1615
      %v1626 = vsub.f32 %v1610, %v1618
      %v1627 = vsub.f32 %v1611, %v1621
      %v1628 = vsub.f32 %v1612, %v1624
      %v1629 = vmul.f32 %v1625, 1.442695
      %v1630 = vpow.pop %v1629
      %v1631 = vmul.f32 %v1626, 1.442695
      %v1632 = vpow.pop %v1631
      %v1633 = vmul.f32 %v1627, 1.442695
      %v1634 = vpow.pop %v1633
      %v1635 = vmul.f32 %v1628, 1.442695
      %v1636 = vpow.pop %v1635
      %v1637 = vsel %vm542, %v1630, 0.0
      %1638 = vadd.xlane.f32.xlu0 %v1637
      %v1639 = vpop.xlane.xlu0 %1638
      %v1640 = vsel %vm542, %v1632, 0.0
      %1641 = vadd.xlane.f32.xlu0 %v1640
      %v1642 = vpop.xlane.xlu0 %1641
      %v1643 = vsel %vm542, %v1634, 0.0
      %1644 = vadd.xlane.f32.xlu0 %v1643
      %v1645 = vpop.xlane.xlu0 %1644
      %v1646 = vsel %vm542, %v1636, 0.0
      %1647 = vadd.xlane.f32.xlu0 %v1646
      %v1648 = vpop.xlane.xlu0 %1647
      %v1649 = vrcp.pop %v1639
      %v1650 = vrcp.pop %v1642
      %v1651 = vrcp.pop %v1645
      %v1652 = vrcp.pop %v1648
      %v1653 = vmul.f32 %v1630, %v1649
      %v1654 = vmul.f32 %v1632, %v1650
      %v1655 = vmul.f32 %v1634, %v1651
      %v1656 = vmul.f32 %v1636, %v1652
      %1657 = vrot.lane.b32.xlu0 %v719, 48
      %v1658 = vpop.permute.xlu0 %1657
      %1659 = vrot.lane.b32.xlu0 %v724, 48
      %v1660 = vpop.permute.xlu0 %1659
      %1661 = vrot.lane.b32.xlu0 %v729, 48
      %v1662 = vpop.permute.xlu0 %1661
      %1663 = vrot.lane.b32.xlu0 %v734, 48
      %v1664 = vpop.permute.xlu0 %1663
      %v1670 = vsel %vm542, %v1653, 0
      %v1673 = vsel %vm542, %v1654, 0
      %v1676 = vsel %vm542, %v1655, 0
      %v1679 = vsel %vm542, %v1656, 0
      %1681 = vmatprep.subr.mxu0 0.0
      %1682 = vmatpush1.msra.mxu0 %v1658
      %1683 = vmatprep.subr.mxu0 0.0
      %1684 = vmatpush1.msra.mxu0 %v1660
      %1685 = vmatprep.subr.mxu0 0.0
      %1686 = vmatpush1.msra.mxu0 %v1662
      %1687 = vmatprep.subr.mxu0 0.0
      %1688 = vmatpush1.msra.mxu0 %v1664
      %1689 = vmatprep.subr.mxu0 0.0
      %1690 = vmatpush1.msra.mxu0 0.0
      %1691 = vmatprep.subr.mxu0 0.0
      %1692 = vmatpush1.msra.mxu0 0.0
      %1693 = vmatprep.subr.mxu0 0.0
      %1694 = vmatpush1.msra.mxu0 0.0
      %1695 = vmatprep.subr.mxu0 0.0
      %1696 = vmatpush1.msra.mxu0 0.0
      %1697 = vmatprep.subr.mxu0 0.0
      %1698 = vmatpush1.msra.mxu0 0.0
      %1699 = vmatprep.subr.mxu0 0.0
      %1700 = vmatpush1.msra.mxu0 0.0
      %1701 = vmatprep.subr.mxu0 0.0
      %1702 = vmatpush1.msra.mxu0 0.0
      %1703 = vmatprep.subr.mxu0 0.0
      %1704 = vmatpush1.msra.mxu0 0.0
      %1705 = vmatprep.subr.mxu0 0.0
      %1706 = vmatpush1.msra.mxu0 0.0
      %1707 = vmatprep.subr.mxu0 0.0
      %1708 = vmatpush1.msra.mxu0 0.0
      %1709 = vmatprep.subr.mxu0 0.0
      %1710 = vmatpush1.msra.mxu0 0.0
      %1711 = vmatprep.subr.mxu0 0.0
      %1712 = vmatpush1.msra.mxu0 0.0
      %1713 = vmatprep.subr.mxu0 0.0
      %1714 = vmatpush1.msra.mxu0 0.0
      %1715 = vmatprep.subr.mxu0 0.0
      %1716 = vmatpush1.msra.mxu0 0.0
      %1717 = vmatprep.subr.mxu0 0.0
      %1718 = vmatpush1.msra.mxu0 0.0
      %1719 = vmatprep.subr.mxu0 0.0
      %1720 = vmatpush1.msra.mxu0 0.0
      %1721 = vmatprep.subr.mxu0 0.0
      %1722 = vmatpush1.msra.mxu0 0.0
      %1723 = vmatprep.subr.mxu0 0.0
      %1724 = vmatpush1.msra.mxu0 0.0
      %1725 = vmatprep.subr.mxu0 0.0
      %1726 = vmatpush1.msra.mxu0 0.0
      %1727 = vmatprep.subr.mxu0 0.0
      %1728 = vmatpush1.msra.mxu0 0.0
      %1729 = vmatprep.subr.mxu0 0.0
      %1730 = vmatpush1.msra.mxu0 0.0
      %1731 = vmatprep.subr.mxu0 0.0
      %1732 = vmatpush1.msra.mxu0 0.0
      %1733 = vmatprep.subr.mxu0 0.0
      %1734 = vmatpush1.msra.mxu0 0.0
      %1735 = vmatprep.subr.mxu0 0.0
      %1736 = vmatpush1.msra.mxu0 0.0
      %1737 = vmatprep.subr.mxu0 0.0
      %1738 = vmatpush1.msra.mxu0 0.0
      %1739 = vmatprep.subr.mxu0 0.0
      %1740 = vmatpush1.msra.mxu0 0.0
      %1741 = vmatprep.subr.mxu0 0.0
      %1742 = vmatpush1.msra.mxu0 0.0
      %1743 = vmatprep.subr.mxu0 0.0
      %1744 = vmatpush1.msra.mxu0 0.0
      %1745 = vmatprep.mubr.f32.mxu0 0.0
      %1746 = vmatmul.mubr.f32.gmra.mrb[0].mxu0 %v1670
      %v1747 = vpop.f32.mrb[0].mxu0
      %v1748 = vadd.f32 0.0, %v1747
      %v1749 = vpop.f32.mrb[0].mxu0
      %1750 = vmatprep.mubr.f32.mxu0 0.0
      %1751 = vmatmul.mubr.f32.gmra.mrb[0].mxu0 %v1673
      %v1752 = vpop.f32.mrb[0].mxu0
      %v1753 = vadd.f32 0.0, %v1752
      %v1754 = vpop.f32.mrb[0].mxu0
      %1755 = vmatprep.mubr.f32.mxu0 0.0
      %1756 = vmatmul.mubr.f32.gmra.mrb[0].mxu0 %v1676
      %v1757 = vpop.f32.mrb[0].mxu0
      %v1758 = vadd.f32 0.0, %v1757
      %v1759 = vpop.f32.mrb[0].mxu0
      %1760 = vmatprep.mubr.f32.mxu0 0.0
      %1761 = vmatmul.mubr.f32.gmra.mrb[0].mxu0 %v1679
      %v1762 = vpop.f32.mrb[0].mxu0
      %v1763 = vadd.f32 0.0, %v1762
      %v1764 = vpop.f32.mrb[0].mxu0
      %1765 = vdwg.mxu0
      %v1767 = vsel %vm749, %v1748, 0
      %v1770 = vsel %vm749, %v1753, 0
      %v1773 = vsel %vm749, %v1758, 0
      %v1776 = vsel %vm749, %v1763, 0
      %1778 = vmatprep.subr.mxu0 0.0
      %1779 = vmatpush1.msra.mxu0 %v531
      %1780 = vmatprep.subr.mxu0 0.0
      %1781 = vmatpush1.msra.mxu0 0.0
      %1782 = vmatprep.subr.mxu0 0.0
      %1783 = vmatpush1.msra.mxu0 0.0
      %1784 = vmatprep.subr.mxu0 0.0
      %1785 = vmatpush1.msra.mxu0 0.0
      %1786 = vmatprep.subr.mxu0 0.0
      %1787 = vmatpush1.msra.mxu0 0.0
      %1788 = vmatprep.subr.mxu0 0.0
      %1789 = vmatpush1.msra.mxu0 0.0
      %1790 = vmatprep.subr.mxu0 0.0
      %1791 = vmatpush1.msra.mxu0 0.0
      %1792 = vmatprep.subr.mxu0 0.0
      %1793 = vmatpush1.msra.mxu0 0.0
      %1794 = vmatprep.subr.mxu0 0.0
      %1795 = vmatpush1.msra.mxu0 0.0
      %1796 = vmatprep.subr.mxu0 0.0
      %1797 = vmatpush1.msra.mxu0 0.0
      %1798 = vmatprep.subr.mxu0 0.0
      %1799 = vmatpush1.msra.mxu0 0.0
      %1800 = vmatprep.subr.mxu0 0.0
      %1801 = vmatpush1.msra.mxu0 0.0
      %1802 = vmatprep.subr.mxu0 0.0
      %1803 = vmatpush1.msra.mxu0 0.0
      %1804 = vmatprep.subr.mxu0 0.0
      %1805 = vmatpush1.msra.mxu0 0.0
      %1806 = vmatprep.subr.mxu0 0.0
      %1807 = vmatpush1.msra.mxu0 0.0
      %1808 = vmatprep.subr.mxu0 0.0
      %1809 = vmatpush1.msra.mxu0 0.0
      %1810 = vmatprep.subr.mxu0 0.0
      %1811 = vmatpush1.msra.mxu0 0.0
      %1812 = vmatprep.subr.mxu0 0.0
      %1813 = vmatpush1.msra.mxu0 0.0
      %1814 = vmatprep.subr.mxu0 0.0
      %1815 = vmatpush1.msra.mxu0 0.0
      %1816 = vmatprep.subr.mxu0 0.0
      %1817 = vmatpush1.msra.mxu0 0.0
      %1818 = vmatprep.subr.mxu0 0.0
      %1819 = vmatpush1.msra.mxu0 0.0
      %1820 = vmatprep.subr.mxu0 0.0
      %1821 = vmatpush1.msra.mxu0 0.0
      %1822 = vmatprep.subr.mxu0 0.0
      %1823 = vmatpush1.msra.mxu0 0.0
      %1824 = vmatprep.subr.mxu0 0.0
      %1825 = vmatpush1.msra.mxu0 0.0
      %1826 = vmatprep.subr.mxu0 0.0
      %1827 = vmatpush1.msra.mxu0 0.0
      %1828 = vmatprep.subr.mxu0 0.0
      %1829 = vmatpush1.msra.mxu0 0.0
      %1830 = vmatprep.subr.mxu0 0.0
      %1831 = vmatpush1.msra.mxu0 0.0
      %1832 = vmatprep.subr.mxu0 0.0
      %1833 = vmatpush1.msra.mxu0 0.0
      %1834 = vmatprep.subr.mxu0 0.0
      %1835 = vmatpush1.msra.mxu0 0.0
      %1836 = vmatprep.subr.mxu0 0.0
      %1837 = vmatpush1.msra.mxu0 0.0
      %1838 = vmatprep.subr.mxu0 0.0
      %1839 = vmatpush1.msra.mxu0 0.0
      %1840 = vmatprep.subr.mxu0 0.0
      %1841 = vmatpush1.msra.mxu0 0.0
      %1842 = vmatprep.mubr.f32.mxu0 0.0
      %1843 = vmatmul.mubr.f32.gmra.mrb[0].mxu0 %v1767
      %v1844 = vpop.f32.mrb[0].mxu0
      %v1845 = vadd.f32 0.0, %v1844
      %v1846 = vpop.f32.mrb[0].mxu0
      %1847 = vmatprep.mubr.f32.mxu0 0.0
      %1848 = vmatmul.mubr.f32.gmra.mrb[0].mxu0 %v1770
      %v1849 = vpop.f32.mrb[0].mxu0
      %v1850 = vadd.f32 0.0, %v1849
      %v1851 = vpop.f32.mrb[0].mxu0
      %1852 = vmatprep.mubr.f32.mxu0 0.0
      %1853 = vmatmul.mubr.f32.gmra.mrb[0].mxu0 %v1773
      %v1854 = vpop.f32.mrb[0].mxu0
      %v1855 = vadd.f32 0.0, %v1854
      %v1856 = vpop.f32.mrb[0].mxu0
      %1857 = vmatprep.mubr.f32.mxu0 0.0
      %1858 = vmatmul.mubr.f32.gmra.mrb[0].mxu0 %v1776
      %v1859 = vpop.f32.mrb[0].mxu0
      %v1860 = vadd.f32 0.0, %v1859
      %v1861 = vpop.f32.mrb[0].mxu0
      %1862 = vdwg.mxu0
      %v1863 = vadd.f32 %v1470, %v1845
      %v1864 = vadd.f32 %v1475, %v1850
      %v1865 = vadd.f32 %v1480, %v1855
      %v1866 = vadd.f32 %v1485, %v1860
      %1867 = vrot.lane.b32.xlu0 %v622, 104
      %v1868 = vpop.permute.xlu0 %1867
      %1869 = vrot.lane.b32.xlu0 %v627, 104
      %v1870 = vpop.permute.xlu0 %1869
      %1871 = vrot.lane.b32.xlu0 %v632, 104
      %v1872 = vpop.permute.xlu0 %1871
      %1873 = vrot.lane.b32.xlu0 %v637, 104
      %v1874 = vpop.permute.xlu0 %1873
      %1875 = vrot.lane.b32.xlu0 %v719, 72
      %v1876 = vpop.permute.xlu0 %1875
      %1877 = vrot.lane.b32.xlu0 %v724, 72
      %v1878 = vpop.permute.xlu0 %1877
      %1879 = vrot.lane.b32.xlu0 %v729, 72
      %v1880 = vpop.permute.xlu0 %1879
      %1881 = vrot.lane.b32.xlu0 %v734, 72
      %v1882 = vpop.permute.xlu0 %1881
      %v1883 = vsel %vm749, %v1868, 0
      %v1885 = vsel %vm749, %v1870, 0
      %v1887 = vsel %vm749, %v1872, 0
      %v1889 = vsel %vm749, %v1874, 0
      %v1891 = vsel %vm749, %v1876, 0
      %v1893 = vsel %vm749, %v1878, 0
      %v1895 = vsel %vm749, %v1880, 0
      %v1897 = vsel %vm749, %v1882, 0
      %1899 = vmatprep.subr.mxu0 0.0
      %1900 = vmatpush1.xpose.msra.mxu0 %v1891
      %1901 = vmatprep.subr.mxu0 0.0
      %1902 = vmatpush1.xpose.msra.mxu0 %v1893
      %1903 = vmatprep.subr.mxu0 0.0
      %1904 = vmatpush1.xpose.msra.mxu0 %v1895
      %1905 = vmatprep.subr.mxu0 0.0
      %1906 = vmatpush1.xpose.msra.mxu0 %v1897
      %1907 = vmatprep.subr.mxu0 0.0
      %1908 = vmatpush1.xpose.msra.mxu0 0.0
      %1909 = vmatprep.subr.mxu0 0.0
      %1910 = vmatpush1.xpose.msra.mxu0 0.0
      %1911 = vmatprep.subr.mxu0 0.0
      %1912 = vmatpush1.xpose.msra.mxu0 0.0
      %1913 = vmatprep.subr.mxu0 0.0
      %1914 = vmatpush1.xpose.msra.mxu0 0.0
      %1915 = vmatprep.subr.mxu0 0.0
      %1916 = vmatpush1.xpose.msra.mxu0 0.0
      %1917 = vmatprep.subr.mxu0 0.0
      %1918 = vmatpush1.xpose.msra.mxu0 0.0
      %1919 = vmatprep.subr.mxu0 0.0
      %1920 = vmatpush1.xpose.msra.mxu0 0.0
      %1921 = vmatprep.subr.mxu0 0.0
      %1922 = vmatpush1.xpose.msra.mxu0 0.0
      %1923 = vmatprep.subr.mxu0 0.0
      %1924 = vmatpush1.xpose.msra.mxu0 0.0
      %1925 = vmatprep.subr.mxu0 0.0
      %1926 = vmatpush1.xpose.msra.mxu0 0.0
      %1927 = vmatprep.subr.mxu0 0.0
      %1928 = vmatpush1.xpose.msra.mxu0 0.0
      %1929 = vmatprep.subr.mxu0 0.0
      %1930 = vmatpush1.xpose.msra.mxu0 0.0
      %1931 = vmatprep.subr.mxu0 0.0
      %1932 = vmatpush1.xpose.msra.mxu0 0.0
      %1933 = vmatprep.subr.mxu0 0.0
      %1934 = vmatpush1.xpose.msra.mxu0 0.0
      %1935 = vmatprep.subr.mxu0 0.0
      %1936 = vmatpush1.xpose.msra.mxu0 0.0
      %1937 = vmatprep.subr.mxu0 0.0
      %1938 = vmatpush1.xpose.msra.mxu0 0.0
      %1939 = vmatprep.subr.mxu0 0.0
      %1940 = vmatpush1.xpose.msra.mxu0 0.0
      %1941 = vmatprep.subr.mxu0 0.0
      %1942 = vmatpush1.xpose.msra.mxu0 0.0
      %1943 = vmatprep.subr.mxu0 0.0
      %1944 = vmatpush1.xpose.msra.mxu0 0.0
      %1945 = vmatprep.subr.mxu0 0.0
      %1946 = vmatpush1.xpose.msra.mxu0 0.0
      %1947 = vmatprep.subr.mxu0 0.0
      %1948 = vmatpush1.xpose.msra.mxu0 0.0
      %1949 = vmatprep.subr.mxu0 0.0
      %1950 = vmatpush1.xpose.msra.mxu0 0.0
      %1951 = vmatprep.subr.mxu0 0.0
      %1952 = vmatpush1.xpose.msra.mxu0 0.0
      %1953 = vmatprep.subr.mxu0 0.0
      %1954 = vmatpush1.xpose.msra.mxu0 0.0
      %1955 = vmatprep.subr.mxu0 0.0
      %1956 = vmatpush1.xpose.msra.mxu0 0.0
      %1957 = vmatprep.subr.mxu0 0.0
      %1958 = vmatpush1.xpose.msra.mxu0 0.0
      %1959 = vmatprep.subr.mxu0 0.0
      %1960 = vmatpush1.xpose.msra.mxu0 0.0
      %1961 = vmatprep.subr.mxu0 0.0
      %1962 = vmatpush1.xpose.msra.mxu0 0.0
      %1963 = vmatprep.mubr.f32.mxu0 0.0
      %1964 = vmatmul.mubr.f32.gmra.mrb[0].mxu0 %v1883
      %v1965 = vpop.f32.mrb[0].mxu0
      %v1966 = vadd.f32 0.0, %v1965
      %v1967 = vpop.f32.mrb[0].mxu0
      %1968 = vmatprep.mubr.f32.mxu0 0.0
      %1969 = vmatmul.mubr.f32.gmra.mrb[0].mxu0 %v1885
      %v1970 = vpop.f32.mrb[0].mxu0
      %v1971 = vadd.f32 0.0, %v1970
      %v1972 = vpop.f32.mrb[0].mxu0
      %1973 = vmatprep.mubr.f32.mxu0 0.0
      %1974 = vmatmul.mubr.f32.gmra.mrb[0].mxu0 %v1887
      %v1975 = vpop.f32.mrb[0].mxu0
      %v1976 = vadd.f32 0.0, %v1975
      %v1977 = vpop.f32.mrb[0].mxu0
      %1978 = vmatprep.mubr.f32.mxu0 0.0
      %1979 = vmatmul.mubr.f32.gmra.mrb[0].mxu0 %v1889
      %v1980 = vpop.f32.mrb[0].mxu0
      %v1981 = vadd.f32 0.0, %v1980
      %v1982 = vpop.f32.mrb[0].mxu0
      %1983 = vdwg.mxu0
      %v1984 = vmul.f32 %v1966, 0.35355338
      %v1985 = vmul.f32 %v1971, 0.35355338
      %v1986 = vmul.f32 %v1976, 0.35355338
      %v1987 = vmul.f32 %v1981, 0.35355338
      %v1988 = vadd.f32 %v1984, %v520
      %v1989 = vadd.f32 %v1985, %v521
      %v1990 = vadd.f32 %v1986, %v522
      %v1991 = vadd.f32 %v1987, %v523
      %v1992 = vsel %vm542, %v1988, -inf
      %1993 = vmax.xlane.f32.xlu0 %v1992
      %v1994 = vpop.xlane.xlu0 %1993
      %v1995 = vsel %vm542, %v1989, -inf
      %1996 = vmax.xlane.f32.xlu0 %v1995
      %v1997 = vpop.xlane.xlu0 %1996
      %v1998 = vsel %vm542, %v1990, -inf
      %1999 = vmax.xlane.f32.xlu0 %v1998
      %v2000 = vpop.xlane.xlu0 %1999
      %v2001 = vsel %vm542, %v1991, -inf
      %2002 = vmax.xlane.f32.xlu0 %v2001
      %v2003 = vpop.xlane.xlu0 %2002
      %v2004 = vsub.f32 %v1988, %v1994
      %v2005 = vsub.f32 %v1989, %v1997
      %v2006 = vsub.f32 %v1990, %v2000
      %v2007 = vsub.f32 %v1991, %v2003
      %v2008 = vmul.f32 %v2004, 1.442695
      %v2009 = vpow.pop %v2008
      %v2010 = vmul.f32 %v2005, 1.442695
      %v2011 = vpow.pop %v2010
      %v2012 = vmul.f32 %v2006, 1.442695
      %v2013 = vpow.pop %v2012
      %v2014 = vmul.f32 %v2007, 1.442695
      %v2015 = vpow.pop %v2014
      %v2016 = vsel %vm542, %v2009, 0.0
      %2017 = vadd.xlane.f32.xlu0 %v2016
      %v2018 = vpop.xlane.xlu0 %2017
      %v2019 = vsel %vm542, %v2011, 0.0
      %2020 = vadd.xlane.f32.xlu0 %v2019
      %v2021 = vpop.xlane.xlu0 %2020
      %v2022 = vsel %vm542, %v2013, 0.0
      %2023 = vadd.xlane.f32.xlu0 %v2022
      %v2024 = vpop.xlane.xlu0 %2023
      %v2025 = vsel %vm542, %v2015, 0.0
      %2026 = vadd.xlane.f32.xlu0 %v2025
      %v2027 = vpop.xlane.xlu0 %2026
      %v2028 = vrcp.pop %v2018
      %v2029 = vrcp.pop %v2021
      %v2030 = vrcp.pop %v2024
      %v2031 = vrcp.pop %v2027
      %v2032 = vmul.f32 %v2009, %v2028
      %v2033 = vmul.f32 %v2011, %v2029
      %v2034 = vmul.f32 %v2013, %v2030
      %v2035 = vmul.f32 %v2015, %v2031
      %2036 = vrot.lane.b32.xlu0 %v719, 40
      %v2037 = vpop.permute.xlu0 %2036
      %2038 = vrot.lane.b32.xlu0 %v724, 40
      %v2039 = vpop.permute.xlu0 %2038
      %2040 = vrot.lane.b32.xlu0 %v729, 40
      %v2041 = vpop.permute.xlu0 %2040
      %2042 = vrot.lane.b32.xlu0 %v734, 40
      %v2043 = vpop.permute.xlu0 %2042
      %v2049 = vsel %vm542, %v2032, 0
      %v2052 = vsel %vm542, %v2033, 0
      %v2055 = vsel %vm542, %v2034, 0
      %v2058 = vsel %vm542, %v2035, 0
      %2060 = vmatprep.subr.mxu0 0.0
      %2061 = vmatpush1.msra.mxu0 %v2037
      %2062 = vmatprep.subr.mxu0 0.0
      %2063 = vmatpush1.msra.mxu0 %v2039
      %2064 = vmatprep.subr.mxu0 0.0
      %2065 = vmatpush1.msra.mxu0 %v2041
      %2066 = vmatprep.subr.mxu0 0.0
      %2067 = vmatpush1.msra.mxu0 %v2043
      %2068 = vmatprep.subr.mxu0 0.0
      %2069 = vmatpush1.msra.mxu0 0.0
      %2070 = vmatprep.subr.mxu0 0.0
      %2071 = vmatpush1.msra.mxu0 0.0
      %2072 = vmatprep.subr.mxu0 0.0
      %2073 = vmatpush1.msra.mxu0 0.0
      %2074 = vmatprep.subr.mxu0 0.0
      %2075 = vmatpush1.msra.mxu0 0.0
      %2076 = vmatprep.subr.mxu0 0.0
      %2077 = vmatpush1.msra.mxu0 0.0
      %2078 = vmatprep.subr.mxu0 0.0
      %2079 = vmatpush1.msra.mxu0 0.0
      %2080 = vmatprep.subr.mxu0 0.0
      %2081 = vmatpush1.msra.mxu0 0.0
      %2082 = vmatprep.subr.mxu0 0.0
      %2083 = vmatpush1.msra.mxu0 0.0
      %2084 = vmatprep.subr.mxu0 0.0
      %2085 = vmatpush1.msra.mxu0 0.0
      %2086 = vmatprep.subr.mxu0 0.0
      %2087 = vmatpush1.msra.mxu0 0.0
      %2088 = vmatprep.subr.mxu0 0.0
      %2089 = vmatpush1.msra.mxu0 0.0
      %2090 = vmatprep.subr.mxu0 0.0
      %2091 = vmatpush1.msra.mxu0 0.0
      %2092 = vmatprep.subr.mxu0 0.0
      %2093 = vmatpush1.msra.mxu0 0.0
      %2094 = vmatprep.subr.mxu0 0.0
      %2095 = vmatpush1.msra.mxu0 0.0
      %2096 = vmatprep.subr.mxu0 0.0
      %2097 = vmatpush1.msra.mxu0 0.0
      %2098 = vmatprep.subr.mxu0 0.0
      %2099 = vmatpush1.msra.mxu0 0.0
      %2100 = vmatprep.subr.mxu0 0.0
      %2101 = vmatpush1.msra.mxu0 0.0
      %2102 = vmatprep.subr.mxu0 0.0
      %2103 = vmatpush1.msra.mxu0 0.0
      %2104 = vmatprep.subr.mxu0 0.0
      %2105 = vmatpush1.msra.mxu0 0.0
      %2106 = vmatprep.subr.mxu0 0.0
      %2107 = vmatpush1.msra.mxu0 0.0
      %2108 = vmatprep.subr.mxu0 0.0
      %2109 = vmatpush1.msra.mxu0 0.0
      %2110 = vmatprep.subr.mxu0 0.0
      %2111 = vmatpush1.msra.mxu0 0.0
      %2112 = vmatprep.subr.mxu0 0.0
      %2113 = vmatpush1.msra.mxu0 0.0
      %2114 = vmatprep.subr.mxu0 0.0
      %2115 = vmatpush1.msra.mxu0 0.0
      %2116 = vmatprep.subr.mxu0 0.0
      %2117 = vmatpush1.msra.mxu0 0.0
      %2118 = vmatprep.subr.mxu0 0.0
      %2119 = vmatpush1.msra.mxu0 0.0
      %2120 = vmatprep.subr.mxu0 0.0
      %2121 = vmatpush1.msra.mxu0 0.0
      %2122 = vmatprep.subr.mxu0 0.0
      %2123 = vmatpush1.msra.mxu0 0.0
      %2124 = vmatprep.mubr.f32.mxu0 0.0
      %2125 = vmatmul.mubr.f32.gmra.mrb[0].mxu0 %v2049
      %v2126 = vpop.f32.mrb[0].mxu0
      %v2127 = vadd.f32 0.0, %v2126
      %v2128 = vpop.f32.mrb[0].mxu0
      %2129 = vmatprep.mubr.f32.mxu0 0.0
      %2130 = vmatmul.mubr.f32.gmra.mrb[0].mxu0 %v2052
      %v2131 = vpop.f32.mrb[0].mxu0
      %v2132 = vadd.f32 0.0, %v2131
      %v2133 = vpop.f32.mrb[0].mxu0
      %2134 = vmatprep.mubr.f32.mxu0 0.0
      %2135 = vmatmul.mubr.f32.gmra.mrb[0].mxu0 %v2055
      %v2136 = vpop.f32.mrb[0].mxu0
      %v2137 = vadd.f32 0.0, %v2136
      %v2138 = vpop.f32.mrb[0].mxu0
      %2139 = vmatprep.mubr.f32.mxu0 0.0
      %2140 = vmatmul.mubr.f32.gmra.mrb[0].mxu0 %v2058
      %v2141 = vpop.f32.mrb[0].mxu0
      %v2142 = vadd.f32 0.0, %v2141
      %v2143 = vpop.f32.mrb[0].mxu0
      %2144 = vdwg.mxu0
      %v2146 = vsel %vm749, %v2127, 0
      %v2149 = vsel %vm749, %v2132, 0
      %v2152 = vsel %vm749, %v2137, 0
      %v2155 = vsel %vm749, %v2142, 0
      %2157 = vmatprep.subr.mxu0 0.0
      %2158 = vmatpush1.msra.mxu0 %v532
      %2159 = vmatprep.subr.mxu0 0.0
      %2160 = vmatpush1.msra.mxu0 0.0
      %2161 = vmatprep.subr.mxu0 0.0
      %2162 = vmatpush1.msra.mxu0 0.0
      %2163 = vmatprep.subr.mxu0 0.0
      %2164 = vmatpush1.msra.mxu0 0.0
      %2165 = vmatprep.subr.mxu0 0.0
      %2166 = vmatpush1.msra.mxu0 0.0
      %2167 = vmatprep.subr.mxu0 0.0
      %2168 = vmatpush1.msra.mxu0 0.0
      %2169 = vmatprep.subr.mxu0 0.0
      %2170 = vmatpush1.msra.mxu0 0.0
      %2171 = vmatprep.subr.mxu0 0.0
      %2172 = vmatpush1.msra.mxu0 0.0
      %2173 = vmatprep.subr.mxu0 0.0
      %2174 = vmatpush1.msra.mxu0 0.0
      %2175 = vmatprep.subr.mxu0 0.0
      %2176 = vmatpush1.msra.mxu0 0.0
      %2177 = vmatprep.subr.mxu0 0.0
      %2178 = vmatpush1.msra.mxu0 0.0
      %2179 = vmatprep.subr.mxu0 0.0
      %2180 = vmatpush1.msra.mxu0 0.0
      %2181 = vmatprep.subr.mxu0 0.0
      %2182 = vmatpush1.msra.mxu0 0.0
      %2183 = vmatprep.subr.mxu0 0.0
      %2184 = vmatpush1.msra.mxu0 0.0
      %2185 = vmatprep.subr.mxu0 0.0
      %2186 = vmatpush1.msra.mxu0 0.0
      %2187 = vmatprep.subr.mxu0 0.0
      %2188 = vmatpush1.msra.mxu0 0.0
      %2189 = vmatprep.subr.mxu0 0.0
      %2190 = vmatpush1.msra.mxu0 0.0
      %2191 = vmatprep.subr.mxu0 0.0
      %2192 = vmatpush1.msra.mxu0 0.0
      %2193 = vmatprep.subr.mxu0 0.0
      %2194 = vmatpush1.msra.mxu0 0.0
      %2195 = vmatprep.subr.mxu0 0.0
      %2196 = vmatpush1.msra.mxu0 0.0
      %2197 = vmatprep.subr.mxu0 0.0
      %2198 = vmatpush1.msra.mxu0 0.0
      %2199 = vmatprep.subr.mxu0 0.0
      %2200 = vmatpush1.msra.mxu0 0.0
      %2201 = vmatprep.subr.mxu0 0.0
      %2202 = vmatpush1.msra.mxu0 0.0
      %2203 = vmatprep.subr.mxu0 0.0
      %2204 = vmatpush1.msra.mxu0 0.0
      %2205 = vmatprep.subr.mxu0 0.0
      %2206 = vmatpush1.msra.mxu0 0.0
      %2207 = vmatprep.subr.mxu0 0.0
      %2208 = vmatpush1.msra.mxu0 0.0
      %2209 = vmatprep.subr.mxu0 0.0
      %2210 = vmatpush1.msra.mxu0 0.0
      %2211 = vmatprep.subr.mxu0 0.0
      %2212 = vmatpush1.msra.mxu0 0.0
      %2213 = vmatprep.subr.mxu0 0.0
      %2214 = vmatpush1.msra.mxu0 0.0
      %2215 = vmatprep.subr.mxu0 0.0
      %2216 = vmatpush1.msra.mxu0 0.0
      %2217 = vmatprep.subr.mxu0 0.0
      %2218 = vmatpush1.msra.mxu0 0.0
      %2219 = vmatprep.subr.mxu0 0.0
      %2220 = vmatpush1.msra.mxu0 0.0
      %2221 = vmatprep.mubr.f32.mxu0 0.0
      %2222 = vmatmul.mubr.f32.gmra.mrb[0].mxu0 %v2146
      %v2223 = vpop.f32.mrb[0].mxu0
      %v2224 = vadd.f32 0.0, %v2223
      %v2225 = vpop.f32.mrb[0].mxu0
      %2226 = vmatprep.mubr.f32.mxu0 0.0
      %2227 = vmatmul.mubr.f32.gmra.mrb[0].mxu0 %v2149
      %v2228 = vpop.f32.mrb[0].mxu0
      %v2229 = vadd.f32 0.0, %v2228
      %v2230 = vpop.f32.mrb[0].mxu0
      %2231 = vmatprep.mubr.f32.mxu0 0.0
      %2232 = vmatmul.mubr.f32.gmra.mrb[0].mxu0 %v2152
      %v2233 = vpop.f32.mrb[0].mxu0
      %v2234 = vadd.f32 0.0, %v2233
      %v2235 = vpop.f32.mrb[0].mxu0
      %2236 = vmatprep.mubr.f32.mxu0 0.0
      %2237 = vmatmul.mubr.f32.gmra.mrb[0].mxu0 %v2155
      %v2238 = vpop.f32.mrb[0].mxu0
      %v2239 = vadd.f32 0.0, %v2238
      %v2240 = vpop.f32.mrb[0].mxu0
      %2241 = vdwg.mxu0
      %v2242 = vadd.f32 %v1863, %v2224
      %v2243 = vadd.f32 %v1864, %v2229
      %v2244 = vadd.f32 %v1865, %v2234
      %v2245 = vadd.f32 %v1866, %v2239
      %v2246 = vlaneseq
      %v2247 = vshrl.u32 %v2246, 7
      %v2248 = vsub.s32 0, %v2247
      %v2249 = vrot.slane %v533, %v2248
      %v2250 = vadd.f32 %v2242, %v2249
      %v2251 = vadd.f32 %v2243, %v2249
      %v2252 = vadd.f32 %v2244, %v2249
      %v2253 = vadd.f32 %v2245, %v2249
      %v2254 = vadd.f32 %v2250, %v508
      %v2255 = vadd.f32 %v2251, %v509
      %v2256 = vadd.f32 %v2252, %v510
      %v2257 = vadd.f32 %v2253, %v511
      %v2258 = vsel %vm542, %v2254, 0.0
      %2259 = vadd.xlane.f32.xlu0 %v2258
      %v2260 = vpop.xlane.xlu0 %2259
      %v2261 = vsel %vm542, %v2255, 0.0
      %2262 = vadd.xlane.f32.xlu0 %v2261
      %v2263 = vpop.xlane.xlu0 %2262
      %v2264 = vsel %vm542, %v2256, 0.0
      %2265 = vadd.xlane.f32.xlu0 %v2264
      %v2266 = vpop.xlane.xlu0 %2265
      %v2267 = vsel %vm542, %v2257, 0.0
      %2268 = vadd.xlane.f32.xlu0 %v2267
      %v2269 = vpop.xlane.xlu0 %2268
      %v2270 = vrcp.pop 32.0
      %v2271 = vmul.f32 %v2260, %v2270
      %v2272 = vmul.f32 %v2263, %v2270
      %v2273 = vmul.f32 %v2266, %v2270
      %v2274 = vmul.f32 %v2269, %v2270
      %v2275 = vsub.f32 %v2254, %v2271
      %v2276 = vsub.f32 %v2255, %v2272
      %v2277 = vsub.f32 %v2256, %v2273
      %v2278 = vsub.f32 %v2257, %v2274
      %v2279 = vmul.f32 %v2275, %v2275
      %v2280 = vmul.f32 %v2276, %v2276
      %v2281 = vmul.f32 %v2277, %v2277
      %v2282 = vmul.f32 %v2278, %v2278
      %v2283 = vsel %vm542, %v2279, 0.0
      %2284 = vadd.xlane.f32.xlu0 %v2283
      %v2285 = vpop.xlane.xlu0 %2284
      %v2286 = vsel %vm542, %v2280, 0.0
      %2287 = vadd.xlane.f32.xlu0 %v2286
      %v2288 = vpop.xlane.xlu0 %2287
      %v2289 = vsel %vm542, %v2281, 0.0
      %2290 = vadd.xlane.f32.xlu0 %v2289
      %v2291 = vpop.xlane.xlu0 %2290
      %v2292 = vsel %vm542, %v2282, 0.0
      %2293 = vadd.xlane.f32.xlu0 %v2292
      %v2294 = vpop.xlane.xlu0 %2293
      %v2295 = vmul.f32 %v2285, %v2270
      %v2296 = vmul.f32 %v2288, %v2270
      %v2297 = vmul.f32 %v2291, %v2270
      %v2298 = vmul.f32 %v2294, %v2270
      %v2299 = vadd.f32 %v2295, 1e-12
      %v2300 = vadd.f32 %v2296, 1e-12
      %v2301 = vadd.f32 %v2297, 1e-12
      %v2302 = vadd.f32 %v2298, 1e-12
      %v2303 = vrsqrt.pop %v2299
      %v2304 = vrsqrt.pop %v2300
      %v2305 = vrsqrt.pop %v2301
      %v2306 = vrsqrt.pop %v2302
      %v2307 = vmul.f32 %v2275, %v2303
      %v2308 = vmul.f32 %v2276, %v2304
      %v2309 = vmul.f32 %v2277, %v2305
      %v2310 = vmul.f32 %v2278, %v2306
      %v2311 = vlaneseq
      %v2312 = vshrl.u32 %v2311, 7
      %v2313 = vsub.s32 0, %v2312
      %v2314 = vrot.slane %v534, %v2313
      %v2315 = vmul.f32 %v2307, %v2314
      %v2316 = vmul.f32 %v2308, %v2314
      %v2317 = vmul.f32 %v2309, %v2314
      %v2318 = vmul.f32 %v2310, %v2314
      %v2319 = vlaneseq
      %v2320 = vshrl.u32 %v2319, 7
      %v2321 = vsub.s32 0, %v2320
      %v2322 = vrot.slane %v535, %v2321
      %v2323 = vadd.f32 %v2315, %v2322
      %v2324 = vadd.f32 %v2316, %v2322
      %v2325 = vadd.f32 %v2317, %v2322
      %v2326 = vadd.f32 %v2318, %v2322
      %v2327 = vmul.f32 %v2323, 0.5
      %v2328 = vmul.f32 %v2324, 0.5
      %v2329 = vmul.f32 %v2325, 0.5
      %v2330 = vmul.f32 %v2326, 0.5
      %v2331 = vrcp.pop 1.4142135
      %v2332 = vmul.f32 %v2323, %v2331
      %v2333 = vmul.f32 %v2324, %v2331
      %v2334 = vmul.f32 %v2325, %v2331
      %v2335 = vmul.f32 %v2326, %v2331
      %v2336 = verf.f32.pop %v2332
      %v2337 = verf.f32.pop %v2333
      %v2338 = verf.f32.pop %v2334
      %v2339 = verf.f32.pop %v2335
      %v2340 = vadd.f32 %v2336, 1.0
      %v2341 = vadd.f32 %v2337, 1.0
      %v2342 = vadd.f32 %v2338, 1.0
      %v2343 = vadd.f32 %v2339, 1.0
      %v2344 = vmul.f32 %v2327, %v2340
      %v2345 = vmul.f32 %v2328, %v2341
      %v2346 = vmul.f32 %v2329, %v2342
      %v2347 = vmul.f32 %v2330, %v2343
      %2349 = vset.pattern.permute.xlu0 0
      %2350 = vperm.xlu0 %2349, %v516
      %v2351 = vpop.permute.xlu0 %2350
      %2354 = vset.pattern.permute.xlu0 0
      %2355 = vperm.xlu0 %2354, %v517
      %v2356 = vpop.permute.xlu0 %2355
      %2359 = vset.pattern.permute.xlu0 0
      %2360 = vperm.xlu0 %2359, %v518
      %v2361 = vpop.permute.xlu0 %2360
      %2364 = vset.pattern.permute.xlu0 0
      %2365 = vperm.xlu0 %2364, %v519
      %v2366 = vpop.permute.xlu0 %2365
      %v2368 = vmul.f32 %v2344, %v2351
      %v2369 = vmul.f32 %v2345, %v2356
      %v2370 = vmul.f32 %v2346, %v2361
      %v2371 = vmul.f32 %v2347, %v2366
      %v2372 = vld [vmem:[%s497] sm:$0xff]
      %v2373 = vld [vmem:[%s497 + $0x8] sm:$0xff]
      %v2374 = vld [vmem:[%s497 + $0x10] sm:$0xff]
      %v2375 = vld [vmem:[%s497 + $0x18] sm:$0xff]
      %s2376 = scalar_lea.vmem %s5, 32
      %v2377 = vld [vmem:[%s2376] sm:$0xff]
      %v2378 = vld [vmem:[%s2376 + $0x8] sm:$0xff]
      %v2379 = vld [vmem:[%s2376 + $0x10] sm:$0xff]
      %v2380 = vld [vmem:[%s2376 + $0x18] sm:$0xff]
      %s2381 = scalar_lea.vmem %s9, 1
      %v2382 = vld [vmem:[%s2381] sm:$0x1]
      %s2383 = scalar_lea.vmem %s6, 32
      %v2384 = vld [vmem:[%s2383] sm:$0xff]
      %v2385 = vld [vmem:[%s2383 + $0x8] sm:$0xff]
      %v2386 = vld [vmem:[%s2383 + $0x10] sm:$0xff]
      %v2387 = vld [vmem:[%s2383 + $0x18] sm:$0xff]
      %v2388 = vld [vmem:[%s10 + $0x3] sm:$0x1]
      %v2389 = vld [vmem:[%s10 + $0x4] sm:$0x1]
      %v2390 = vld [vmem:[%s10 + $0x5] sm:$0x1]
      %v2392 = vlaneseq
      %v2393 = vshrl.u32 %v2392, 7
      %v2394 = vsub.s32 0, %v2393
      %v2395 = vrot.slane %v2382, %v2394
      %v2398 = vsel %vm542, %v2368, 0
      %v2401 = vsel %vm542, %v2369, 0
      %v2404 = vsel %vm542, %v2370, 0
      %v2407 = vsel %vm542, %v2371, 0
      %2409 = vmatprep.subr.mxu0 0.0
      %2410 = vmatpush1.msra.mxu0 %v2377
      %2411 = vmatprep.subr.mxu0 0.0
      %2412 = vmatpush1.msra.mxu0 %v2378
      %2413 = vmatprep.subr.mxu0 0.0
      %2414 = vmatpush1.msra.mxu0 %v2379
      %2415 = vmatprep.subr.mxu0 0.0
      %2416 = vmatpush1.msra.mxu0 %v2380
      %2417 = vmatprep.subr.mxu0 0.0
      %2418 = vmatpush1.msra.mxu0 0.0
      %2419 = vmatprep.subr.mxu0 0.0
      %2420 = vmatpush1.msra.mxu0 0.0
      %2421 = vmatprep.subr.mxu0 0.0
      %2422 = vmatpush1.msra.mxu0 0.0
      %2423 = vmatprep.subr.mxu0 0.0
      %2424 = vmatpush1.msra.mxu0 0.0
      %2425 = vmatprep.subr.mxu0 0.0
      %2426 = vmatpush1.msra.mxu0 0.0
      %2427 = vmatprep.subr.mxu0 0.0
      %2428 = vmatpush1.msra.mxu0 0.0
      %2429 = vmatprep.subr.mxu0 0.0
      %2430 = vmatpush1.msra.mxu0 0.0
      %2431 = vmatprep.subr.mxu0 0.0
      %2432 = vmatpush1.msra.mxu0 0.0
      %2433 = vmatprep.subr.mxu0 0.0
      %2434 = vmatpush1.msra.mxu0 0.0
      %2435 = vmatprep.subr.mxu0 0.0
      %2436 = vmatpush1.msra.mxu0 0.0
      %2437 = vmatprep.subr.mxu0 0.0
      %2438 = vmatpush1.msra.mxu0 0.0
      %2439 = vmatprep.subr.mxu0 0.0
      %2440 = vmatpush1.msra.mxu0 0.0
      %2441 = vmatprep.subr.mxu0 0.0
      %2442 = vmatpush1.msra.mxu0 0.0
      %2443 = vmatprep.subr.mxu0 0.0
      %2444 = vmatpush1.msra.mxu0 0.0
      %2445 = vmatprep.subr.mxu0 0.0
      %2446 = vmatpush1.msra.mxu0 0.0
      %2447 = vmatprep.subr.mxu0 0.0
      %2448 = vmatpush1.msra.mxu0 0.0
      %2449 = vmatprep.subr.mxu0 0.0
      %2450 = vmatpush1.msra.mxu0 0.0
      %2451 = vmatprep.subr.mxu0 0.0
      %2452 = vmatpush1.msra.mxu0 0.0
      %2453 = vmatprep.subr.mxu0 0.0
      %2454 = vmatpush1.msra.mxu0 0.0
      %2455 = vmatprep.subr.mxu0 0.0
      %2456 = vmatpush1.msra.mxu0 0.0
      %2457 = vmatprep.subr.mxu0 0.0
      %2458 = vmatpush1.msra.mxu0 0.0
      %2459 = vmatprep.subr.mxu0 0.0
      %2460 = vmatpush1.msra.mxu0 0.0
      %2461 = vmatprep.subr.mxu0 0.0
      %2462 = vmatpush1.msra.mxu0 0.0
      %2463 = vmatprep.subr.mxu0 0.0
      %2464 = vmatpush1.msra.mxu0 0.0
      %2465 = vmatprep.subr.mxu0 0.0
      %2466 = vmatpush1.msra.mxu0 0.0
      %2467 = vmatprep.subr.mxu0 0.0
      %2468 = vmatpush1.msra.mxu0 0.0
      %2469 = vmatprep.subr.mxu0 0.0
      %2470 = vmatpush1.msra.mxu0 0.0
      %2471 = vmatprep.subr.mxu0 0.0
      %2472 = vmatpush1.msra.mxu0 0.0
      %2473 = vmatprep.mubr.f32.mxu0 0.0
      %2474 = vmatmul.mubr.f32.gmra.mrb[0].mxu0 %v2398
      %v2475 = vpop.f32.mrb[0].mxu0
      %v2476 = vadd.f32 %v2395, %v2475
      %v2477 = vpop.f32.mrb[0].mxu0
      %2478 = vmatprep.mubr.f32.mxu0 0.0
      %2479 = vmatmul.mubr.f32.gmra.mrb[0].mxu0 %v2401
      %v2480 = vpop.f32.mrb[0].mxu0
      %v2481 = vadd.f32 %v2395, %v2480
      %v2482 = vpop.f32.mrb[0].mxu0
      %2483 = vmatprep.mubr.f32.mxu0 0.0
      %2484 = vmatmul.mubr.f32.gmra.mrb[0].mxu0 %v2404
      %v2485 = vpop.f32.mrb[0].mxu0
      %v2486 = vadd.f32 %v2395, %v2485
      %v2487 = vpop.f32.mrb[0].mxu0
      %2488 = vmatprep.mubr.f32.mxu0 0.0
      %2489 = vmatmul.mubr.f32.gmra.mrb[0].mxu0 %v2407
      %v2490 = vpop.f32.mrb[0].mxu0
      %v2491 = vadd.f32 %v2395, %v2490
      %v2492 = vpop.f32.mrb[0].mxu0
      %2493 = vdwg.mxu0
      %2498 = vrot.lane.b32.xlu0 %v2476, 96
      %v2499 = vpop.permute.xlu0 %2498
      %2500 = vrot.lane.b32.xlu0 %v2481, 96
      %v2501 = vpop.permute.xlu0 %2500
      %2502 = vrot.lane.b32.xlu0 %v2486, 96
      %v2503 = vpop.permute.xlu0 %2502
      %2504 = vrot.lane.b32.xlu0 %v2491, 96
      %v2505 = vpop.permute.xlu0 %2504
      %v2506 = vsel %vm749, %v2476, 0
      %v2508 = vsel %vm749, %v2481, 0
      %v2510 = vsel %vm749, %v2486, 0
      %v2512 = vsel %vm749, %v2491, 0
      %v2514 = vsel %vm749, %v2499, 0
      %v2516 = vsel %vm749, %v2501, 0
      %v2518 = vsel %vm749, %v2503, 0
      %v2520 = vsel %vm749, %v2505, 0
      %2522 = vmatprep.subr.mxu0 0.0
      %2523 = vmatpush1.xpose.msra.mxu0 %v2514
      %2524 = vmatprep.subr.mxu0 0.0
      %2525 = vmatpush1.xpose.msra.mxu0 %v2516
      %2526 = vmatprep.subr.mxu0 0.0
      %2527 = vmatpush1.xpose.msra.mxu0 %v2518
      %2528 = vmatprep.subr.mxu0 0.0
      %2529 = vmatpush1.xpose.msra.mxu0 %v2520
      %2530 = vmatprep.subr.mxu0 0.0
      %2531 = vmatpush1.xpose.msra.mxu0 0.0
      %2532 = vmatprep.subr.mxu0 0.0
      %2533 = vmatpush1.xpose.msra.mxu0 0.0
      %2534 = vmatprep.subr.mxu0 0.0
      %2535 = vmatpush1.xpose.msra.mxu0 0.0
      %2536 = vmatprep.subr.mxu0 0.0
      %2537 = vmatpush1.xpose.msra.mxu0 0.0
      %2538 = vmatprep.subr.mxu0 0.0
      %2539 = vmatpush1.xpose.msra.mxu0 0.0
      %2540 = vmatprep.subr.mxu0 0.0
      %2541 = vmatpush1.xpose.msra.mxu0 0.0
      %2542 = vmatprep.subr.mxu0 0.0
      %2543 = vmatpush1.xpose.msra.mxu0 0.0
      %2544 = vmatprep.subr.mxu0 0.0
      %2545 = vmatpush1.xpose.msra.mxu0 0.0
      %2546 = vmatprep.subr.mxu0 0.0
      %2547 = vmatpush1.xpose.msra.mxu0 0.0
      %2548 = vmatprep.subr.mxu0 0.0
      %2549 = vmatpush1.xpose.msra.mxu0 0.0
      %2550 = vmatprep.subr.mxu0 0.0
      %2551 = vmatpush1.xpose.msra.mxu0 0.0
      %2552 = vmatprep.subr.mxu0 0.0
      %2553 = vmatpush1.xpose.msra.mxu0 0.0
      %2554 = vmatprep.subr.mxu0 0.0
      %2555 = vmatpush1.xpose.msra.mxu0 0.0
      %2556 = vmatprep.subr.mxu0 0.0
      %2557 = vmatpush1.xpose.msra.mxu0 0.0
      %2558 = vmatprep.subr.mxu0 0.0
      %2559 = vmatpush1.xpose.msra.mxu0 0.0
      %2560 = vmatprep.subr.mxu0 0.0
      %2561 = vmatpush1.xpose.msra.mxu0 0.0
      %2562 = vmatprep.subr.mxu0 0.0
      %2563 = vmatpush1.xpose.msra.mxu0 0.0
      %2564 = vmatprep.subr.mxu0 0.0
      %2565 = vmatpush1.xpose.msra.mxu0 0.0
      %2566 = vmatprep.subr.mxu0 0.0
      %2567 = vmatpush1.xpose.msra.mxu0 0.0
      %2568 = vmatprep.subr.mxu0 0.0
      %2569 = vmatpush1.xpose.msra.mxu0 0.0
      %2570 = vmatprep.subr.mxu0 0.0
      %2571 = vmatpush1.xpose.msra.mxu0 0.0
      %2572 = vmatprep.subr.mxu0 0.0
      %2573 = vmatpush1.xpose.msra.mxu0 0.0
      %2574 = vmatprep.subr.mxu0 0.0
      %2575 = vmatpush1.xpose.msra.mxu0 0.0
      %2576 = vmatprep.subr.mxu0 0.0
      %2577 = vmatpush1.xpose.msra.mxu0 0.0
      %2578 = vmatprep.subr.mxu0 0.0
      %2579 = vmatpush1.xpose.msra.mxu0 0.0
      %2580 = vmatprep.subr.mxu0 0.0
      %2581 = vmatpush1.xpose.msra.mxu0 0.0
      %2582 = vmatprep.subr.mxu0 0.0
      %2583 = vmatpush1.xpose.msra.mxu0 0.0
      %2584 = vmatprep.subr.mxu0 0.0
      %2585 = vmatpush1.xpose.msra.mxu0 0.0
      %2586 = vmatprep.mubr.f32.mxu0 0.0
      %2587 = vmatmul.mubr.f32.gmra.mrb[0].mxu0 %v2506
      %v2588 = vpop.f32.mrb[0].mxu0
      %v2589 = vadd.f32 0.0, %v2588
      %v2590 = vpop.f32.mrb[0].mxu0
      %2591 = vmatprep.mubr.f32.mxu0 0.0
      %2592 = vmatmul.mubr.f32.gmra.mrb[0].mxu0 %v2508
      %v2593 = vpop.f32.mrb[0].mxu0
      %v2594 = vadd.f32 0.0, %v2593
      %v2595 = vpop.f32.mrb[0].mxu0
      %2596 = vmatprep.mubr.f32.mxu0 0.0
      %2597 = vmatmul.mubr.f32.gmra.mrb[0].mxu0 %v2510
      %v2598 = vpop.f32.mrb[0].mxu0
      %v2599 = vadd.f32 0.0, %v2598
      %v2600 = vpop.f32.mrb[0].mxu0
      %2601 = vmatprep.mubr.f32.mxu0 0.0
      %2602 = vmatmul.mubr.f32.gmra.mrb[0].mxu0 %v2512
      %v2603 = vpop.f32.mrb[0].mxu0
      %v2604 = vadd.f32 0.0, %v2603
      %v2605 = vpop.f32.mrb[0].mxu0
      %2606 = vdwg.mxu0
      %v2607 = vmul.f32 %v2589, 0.35355338
      %v2608 = vmul.f32 %v2594, 0.35355338
      %v2609 = vmul.f32 %v2599, 0.35355338
      %v2610 = vmul.f32 %v2604, 0.35355338
      %v2611 = vadd.f32 %v2607, %v2372
      %v2612 = vadd.f32 %v2608, %v2373
      %v2613 = vadd.f32 %v2609, %v2374
      %v2614 = vadd.f32 %v2610, %v2375
      %v2615 = vsel %vm542, %v2611, -inf
      %2616 = vmax.xlane.f32.xlu0 %v2615
      %v2617 = vpop.xlane.xlu0 %2616
      %v2618 = vsel %vm542, %v2612, -inf
      %2619 = vmax.xlane.f32.xlu0 %v2618
      %v2620 = vpop.xlane.xlu0 %2619
      %v2621 = vsel %vm542, %v2613, -inf
      %2622 = vmax.xlane.f32.xlu0 %v2621
      %v2623 = vpop.xlane.xlu0 %2622
      %v2624 = vsel %vm542, %v2614, -inf
      %2625 = vmax.xlane.f32.xlu0 %v2624
      %v2626 = vpop.xlane.xlu0 %2625
      %v2627 = vsub.f32 %v2611, %v2617
      %v2628 = vsub.f32 %v2612, %v2620
      %v2629 = vsub.f32 %v2613, %v2623
      %v2630 = vsub.f32 %v2614, %v2626
      %v2631 = vmul.f32 %v2627, 1.442695
      %v2632 = vpow.pop %v2631
      %v2633 = vmul.f32 %v2628, 1.442695
      %v2634 = vpow.pop %v2633
      %v2635 = vmul.f32 %v2629, 1.442695
      %v2636 = vpow.pop %v2635
      %v2637 = vmul.f32 %v2630, 1.442695
      %v2638 = vpow.pop %v2637
      %v2639 = vsel %vm542, %v2632, 0.0
      %2640 = vadd.xlane.f32.xlu0 %v2639
      %v2641 = vpop.xlane.xlu0 %2640
      %v2642 = vsel %vm542, %v2634, 0.0
      %2643 = vadd.xlane.f32.xlu0 %v2642
      %v2644 = vpop.xlane.xlu0 %2643
      %v2645 = vsel %vm542, %v2636, 0.0
      %2646 = vadd.xlane.f32.xlu0 %v2645
      %v2647 = vpop.xlane.xlu0 %2646
      %v2648 = vsel %vm542, %v2638, 0.0
      %2649 = vadd.xlane.f32.xlu0 %v2648
      %v2650 = vpop.xlane.xlu0 %2649
      %v2651 = vrcp.pop %v2641
      %v2652 = vrcp.pop %v2644
      %v2653 = vrcp.pop %v2647
      %v2654 = vrcp.pop %v2650
      %v2655 = vmul.f32 %v2632, %v2651
      %v2656 = vmul.f32 %v2634, %v2652
      %v2657 = vmul.f32 %v2636, %v2653
      %v2658 = vmul.f32 %v2638, %v2654
      %2659 = vrot.lane.b32.xlu0 %v2476, 64
      %v2660 = vpop.permute.xlu0 %2659
      %2661 = vrot.lane.b32.xlu0 %v2481, 64
      %v2662 = vpop.permute.xlu0 %2661
      %2663 = vrot.lane.b32.xlu0 %v2486, 64
      %v2664 = vpop.permute.xlu0 %2663
      %2665 = vrot.lane.b32.xlu0 %v2491, 64
      %v2666 = vpop.permute.xlu0 %2665
      %v2672 = vsel %vm542, %v2655, 0
      %v2675 = vsel %vm542, %v2656, 0
      %v2678 = vsel %vm542, %v2657, 0
      %v2681 = vsel %vm542, %v2658, 0
      %2683 = vmatprep.subr.mxu0 0.0
      %2684 = vmatpush1.msra.mxu0 %v2660
      %2685 = vmatprep.subr.mxu0 0.0
      %2686 = vmatpush1.msra.mxu0 %v2662
      %2687 = vmatprep.subr.mxu0 0.0
      %2688 = vmatpush1.msra.mxu0 %v2664
      %2689 = vmatprep.subr.mxu0 0.0
      %2690 = vmatpush1.msra.mxu0 %v2666
      %2691 = vmatprep.subr.mxu0 0.0
      %2692 = vmatpush1.msra.mxu0 0.0
      %2693 = vmatprep.subr.mxu0 0.0
      %2694 = vmatpush1.msra.mxu0 0.0
      %2695 = vmatprep.subr.mxu0 0.0
      %2696 = vmatpush1.msra.mxu0 0.0
      %2697 = vmatprep.subr.mxu0 0.0
      %2698 = vmatpush1.msra.mxu0 0.0
      %2699 = vmatprep.subr.mxu0 0.0
      %2700 = vmatpush1.msra.mxu0 0.0
      %2701 = vmatprep.subr.mxu0 0.0
      %2702 = vmatpush1.msra.mxu0 0.0
      %2703 = vmatprep.subr.mxu0 0.0
      %2704 = vmatpush1.msra.mxu0 0.0
      %2705 = vmatprep.subr.mxu0 0.0
      %2706 = vmatpush1.msra.mxu0 0.0
      %2707 = vmatprep.subr.mxu0 0.0
      %2708 = vmatpush1.msra.mxu0 0.0
      %2709 = vmatprep.subr.mxu0 0.0
      %2710 = vmatpush1.msra.mxu0 0.0
      %2711 = vmatprep.subr.mxu0 0.0
      %2712 = vmatpush1.msra.mxu0 0.0
      %2713 = vmatprep.subr.mxu0 0.0
      %2714 = vmatpush1.msra.mxu0 0.0
      %2715 = vmatprep.subr.mxu0 0.0
      %2716 = vmatpush1.msra.mxu0 0.0
      %2717 = vmatprep.subr.mxu0 0.0
      %2718 = vmatpush1.msra.mxu0 0.0
      %2719 = vmatprep.subr.mxu0 0.0
      %2720 = vmatpush1.msra.mxu0 0.0
      %2721 = vmatprep.subr.mxu0 0.0
      %2722 = vmatpush1.msra.mxu0 0.0
      %2723 = vmatprep.subr.mxu0 0.0
      %2724 = vmatpush1.msra.mxu0 0.0
      %2725 = vmatprep.subr.mxu0 0.0
      %2726 = vmatpush1.msra.mxu0 0.0
      %2727 = vmatprep.subr.mxu0 0.0
      %2728 = vmatpush1.msra.mxu0 0.0
      %2729 = vmatprep.subr.mxu0 0.0
      %2730 = vmatpush1.msra.mxu0 0.0
      %2731 = vmatprep.subr.mxu0 0.0
      %2732 = vmatpush1.msra.mxu0 0.0
      %2733 = vmatprep.subr.mxu0 0.0
      %2734 = vmatpush1.msra.mxu0 0.0
      %2735 = vmatprep.subr.mxu0 0.0
      %2736 = vmatpush1.msra.mxu0 0.0
      %2737 = vmatprep.subr.mxu0 0.0
      %2738 = vmatpush1.msra.mxu0 0.0
      %2739 = vmatprep.subr.mxu0 0.0
      %2740 = vmatpush1.msra.mxu0 0.0
      %2741 = vmatprep.subr.mxu0 0.0
      %2742 = vmatpush1.msra.mxu0 0.0
      %2743 = vmatprep.subr.mxu0 0.0
      %2744 = vmatpush1.msra.mxu0 0.0
      %2745 = vmatprep.subr.mxu0 0.0
      %2746 = vmatpush1.msra.mxu0 0.0
      %2747 = vmatprep.mubr.f32.mxu0 0.0
      %2748 = vmatmul.mubr.f32.gmra.mrb[0].mxu0 %v2672
      %v2749 = vpop.f32.mrb[0].mxu0
      %v2750 = vadd.f32 0.0, %v2749
      %v2751 = vpop.f32.mrb[0].mxu0
      %2752 = vmatprep.mubr.f32.mxu0 0.0
      %2753 = vmatmul.mubr.f32.gmra.mrb[0].mxu0 %v2675
      %v2754 = vpop.f32.mrb[0].mxu0
      %v2755 = vadd.f32 0.0, %v2754
      %v2756 = vpop.f32.mrb[0].mxu0
      %2757 = vmatprep.mubr.f32.mxu0 0.0
      %2758 = vmatmul.mubr.f32.gmra.mrb[0].mxu0 %v2678
      %v2759 = vpop.f32.mrb[0].mxu0
      %v2760 = vadd.f32 0.0, %v2759
      %v2761 = vpop.f32.mrb[0].mxu0
      %2762 = vmatprep.mubr.f32.mxu0 0.0
      %2763 = vmatmul.mubr.f32.gmra.mrb[0].mxu0 %v2681
      %v2764 = vpop.f32.mrb[0].mxu0
      %v2765 = vadd.f32 0.0, %v2764
      %v2766 = vpop.f32.mrb[0].mxu0
      %2767 = vdwg.mxu0
      %2768 = vrot.lane.b32.xlu0 %v2476, 120
      %v2769 = vpop.permute.xlu0 %2768
      %2770 = vrot.lane.b32.xlu0 %v2481, 120
      %v2771 = vpop.permute.xlu0 %2770
      %2772 = vrot.lane.b32.xlu0 %v2486, 120
      %v2773 = vpop.permute.xlu0 %2772
      %2774 = vrot.lane.b32.xlu0 %v2491, 120
      %v2775 = vpop.permute.xlu0 %2774
      %2776 = vrot.lane.b32.xlu0 %v2476, 88
      %v2777 = vpop.permute.xlu0 %2776
      %2778 = vrot.lane.b32.xlu0 %v2481, 88
      %v2779 = vpop.permute.xlu0 %2778
      %2780 = vrot.lane.b32.xlu0 %v2486, 88
      %v2781 = vpop.permute.xlu0 %2780
      %2782 = vrot.lane.b32.xlu0 %v2491, 88
      %v2783 = vpop.permute.xlu0 %2782
      %v2784 = vsel %vm749, %v2769, 0
      %v2786 = vsel %vm749, %v2771, 0
      %v2788 = vsel %vm749, %v2773, 0
      %v2790 = vsel %vm749, %v2775, 0
      %v2792 = vsel %vm749, %v2777, 0
      %v2794 = vsel %vm749, %v2779, 0
      %v2796 = vsel %vm749, %v2781, 0
      %v2798 = vsel %vm749, %v2783, 0
      %2800 = vmatprep.subr.mxu0 0.0
      %2801 = vmatpush1.xpose.msra.mxu0 %v2792
      %2802 = vmatprep.subr.mxu0 0.0
      %2803 = vmatpush1.xpose.msra.mxu0 %v2794
      %2804 = vmatprep.subr.mxu0 0.0
      %2805 = vmatpush1.xpose.msra.mxu0 %v2796
      %2806 = vmatprep.subr.mxu0 0.0
      %2807 = vmatpush1.xpose.msra.mxu0 %v2798
      %2808 = vmatprep.subr.mxu0 0.0
      %2809 = vmatpush1.xpose.msra.mxu0 0.0
      %2810 = vmatprep.subr.mxu0 0.0
      %2811 = vmatpush1.xpose.msra.mxu0 0.0
      %2812 = vmatprep.subr.mxu0 0.0
      %2813 = vmatpush1.xpose.msra.mxu0 0.0
      %2814 = vmatprep.subr.mxu0 0.0
      %2815 = vmatpush1.xpose.msra.mxu0 0.0
      %2816 = vmatprep.subr.mxu0 0.0
      %2817 = vmatpush1.xpose.msra.mxu0 0.0
      %2818 = vmatprep.subr.mxu0 0.0
      %2819 = vmatpush1.xpose.msra.mxu0 0.0
      %2820 = vmatprep.subr.mxu0 0.0
      %2821 = vmatpush1.xpose.msra.mxu0 0.0
      %2822 = vmatprep.subr.mxu0 0.0
      %2823 = vmatpush1.xpose.msra.mxu0 0.0
      %2824 = vmatprep.subr.mxu0 0.0
      %2825 = vmatpush1.xpose.msra.mxu0 0.0
      %2826 = vmatprep.subr.mxu0 0.0
      %2827 = vmatpush1.xpose.msra.mxu0 0.0
      %2828 = vmatprep.subr.mxu0 0.0
      %2829 = vmatpush1.xpose.msra.mxu0 0.0
      %2830 = vmatprep.subr.mxu0 0.0
      %2831 = vmatpush1.xpose.msra.mxu0 0.0
      %2832 = vmatprep.subr.mxu0 0.0
      %2833 = vmatpush1.xpose.msra.mxu0 0.0
      %2834 = vmatprep.subr.mxu0 0.0
      %2835 = vmatpush1.xpose.msra.mxu0 0.0
      %2836 = vmatprep.subr.mxu0 0.0
      %2837 = vmatpush1.xpose.msra.mxu0 0.0
      %2838 = vmatprep.subr.mxu0 0.0
      %2839 = vmatpush1.xpose.msra.mxu0 0.0
      %2840 = vmatprep.subr.mxu0 0.0
      %2841 = vmatpush1.xpose.msra.mxu0 0.0
      %2842 = vmatprep.subr.mxu0 0.0
      %2843 = vmatpush1.xpose.msra.mxu0 0.0
      %2844 = vmatprep.subr.mxu0 0.0
      %2845 = vmatpush1.xpose.msra.mxu0 0.0
      %2846 = vmatprep.subr.mxu0 0.0
      %2847 = vmatpush1.xpose.msra.mxu0 0.0
      %2848 = vmatprep.subr.mxu0 0.0
      %2849 = vmatpush1.xpose.msra.mxu0 0.0
      %2850 = vmatprep.subr.mxu0 0.0
      %2851 = vmatpush1.xpose.msra.mxu0 0.0
      %2852 = vmatprep.subr.mxu0 0.0
      %2853 = vmatpush1.xpose.msra.mxu0 0.0
      %2854 = vmatprep.subr.mxu0 0.0
      %2855 = vmatpush1.xpose.msra.mxu0 0.0
      %2856 = vmatprep.subr.mxu0 0.0
      %2857 = vmatpush1.xpose.msra.mxu0 0.0
      %2858 = vmatprep.subr.mxu0 0.0
      %2859 = vmatpush1.xpose.msra.mxu0 0.0
      %2860 = vmatprep.subr.mxu0 0.0
      %2861 = vmatpush1.xpose.msra.mxu0 0.0
      %2862 = vmatprep.subr.mxu0 0.0
      %2863 = vmatpush1.xpose.msra.mxu0 0.0
      %2864 = vmatprep.mubr.f32.mxu0 0.0
      %2865 = vmatmul.mubr.f32.gmra.mrb[0].mxu0 %v2784
      %v2866 = vpop.f32.mrb[0].mxu0
      %v2867 = vadd.f32 0.0, %v2866
      %v2868 = vpop.f32.mrb[0].mxu0
      %2869 = vmatprep.mubr.f32.mxu0 0.0
      %2870 = vmatmul.mubr.f32.gmra.mrb[0].mxu0 %v2786
      %v2871 = vpop.f32.mrb[0].mxu0
      %v2872 = vadd.f32 0.0, %v2871
      %v2873 = vpop.f32.mrb[0].mxu0
      %2874 = vmatprep.mubr.f32.mxu0 0.0
      %2875 = vmatmul.mubr.f32.gmra.mrb[0].mxu0 %v2788
      %v2876 = vpop.f32.mrb[0].mxu0
      %v2877 = vadd.f32 0.0, %v2876
      %v2878 = vpop.f32.mrb[0].mxu0
      %2879 = vmatprep.mubr.f32.mxu0 0.0
      %2880 = vmatmul.mubr.f32.gmra.mrb[0].mxu0 %v2790
      %v2881 = vpop.f32.mrb[0].mxu0
      %v2882 = vadd.f32 0.0, %v2881
      %v2883 = vpop.f32.mrb[0].mxu0
      %2884 = vdwg.mxu0
      %v2885 = vmul.f32 %v2867, 0.35355338
      %v2886 = vmul.f32 %v2872, 0.35355338
      %v2887 = vmul.f32 %v2877, 0.35355338
      %v2888 = vmul.f32 %v2882, 0.35355338
      %v2889 = vadd.f32 %v2885, %v2372
      %v2890 = vadd.f32 %v2886, %v2373
      %v2891 = vadd.f32 %v2887, %v2374
      %v2892 = vadd.f32 %v2888, %v2375
      %v2893 = vsel %vm542, %v2889, -inf
      %2894 = vmax.xlane.f32.xlu0 %v2893
      %v2895 = vpop.xlane.xlu0 %2894
      %v2896 = vsel %vm542, %v2890, -inf
      %2897 = vmax.xlane.f32.xlu0 %v2896
      %v2898 = vpop.xlane.xlu0 %2897
      %v2899 = vsel %vm542, %v2891, -inf
      %2900 = vmax.xlane.f32.xlu0 %v2899
      %v2901 = vpop.xlane.xlu0 %2900
      %v2902 = vsel %vm542, %v2892, -inf
      %2903 = vmax.xlane.f32.xlu0 %v2902
      %v2904 = vpop.xlane.xlu0 %2903
      %v2905 = vsub.f32 %v2889, %v2895
      %v2906 = vsub.f32 %v2890, %v2898
      %v2907 = vsub.f32 %v2891, %v2901
      %v2908 = vsub.f32 %v2892, %v2904
      %v2909 = vmul.f32 %v2905, 1.442695
      %v2910 = vpow.pop %v2909
      %v2911 = vmul.f32 %v2906, 1.442695
      %v2912 = vpow.pop %v2911
      %v2913 = vmul.f32 %v2907, 1.442695
      %v2914 = vpow.pop %v2913
      %v2915 = vmul.f32 %v2908, 1.442695
      %v2916 = vpow.pop %v2915
      %v2917 = vsel %vm542, %v2910, 0.0
      %2918 = vadd.xlane.f32.xlu0 %v2917
      %v2919 = vpop.xlane.xlu0 %2918
      %v2920 = vsel %vm542, %v2912, 0.0
      %2921 = vadd.xlane.f32.xlu0 %v2920
      %v2922 = vpop.xlane.xlu0 %2921
      %v2923 = vsel %vm542, %v2914, 0.0
      %2924 = vadd.xlane.f32.xlu0 %v2923
      %v2925 = vpop.xlane.xlu0 %2924
      %v2926 = vsel %vm542, %v2916, 0.0
      %2927 = vadd.xlane.f32.xlu0 %v2926
      %v2928 = vpop.xlane.xlu0 %2927
      %v2929 = vrcp.pop %v2919
      %v2930 = vrcp.pop %v2922
      %v2931 = vrcp.pop %v2925
      %v2932 = vrcp.pop %v2928
      %v2933 = vmul.f32 %v2910, %v2929
      %v2934 = vmul.f32 %v2912, %v2930
      %v2935 = vmul.f32 %v2914, %v2931
      %v2936 = vmul.f32 %v2916, %v2932
      %2937 = vrot.lane.b32.xlu0 %v2476, 56
      %v2938 = vpop.permute.xlu0 %2937
      %2939 = vrot.lane.b32.xlu0 %v2481, 56
      %v2940 = vpop.permute.xlu0 %2939
      %2941 = vrot.lane.b32.xlu0 %v2486, 56
      %v2942 = vpop.permute.xlu0 %2941
      %2943 = vrot.lane.b32.xlu0 %v2491, 56
      %v2944 = vpop.permute.xlu0 %2943
      %v2950 = vsel %vm542, %v2933, 0
      %v2953 = vsel %vm542, %v2934, 0
      %v2956 = vsel %vm542, %v2935, 0
      %v2959 = vsel %vm542, %v2936, 0
      %2961 = vmatprep.subr.mxu0 0.0
      %2962 = vmatpush1.msra.mxu0 %v2938
      %2963 = vmatprep.subr.mxu0 0.0
      %2964 = vmatpush1.msra.mxu0 %v2940
      %2965 = vmatprep.subr.mxu0 0.0
      %2966 = vmatpush1.msra.mxu0 %v2942
      %2967 = vmatprep.subr.mxu0 0.0
      %2968 = vmatpush1.msra.mxu0 %v2944
      %2969 = vmatprep.subr.mxu0 0.0
      %2970 = vmatpush1.msra.mxu0 0.0
      %2971 = vmatprep.subr.mxu0 0.0
      %2972 = vmatpush1.msra.mxu0 0.0
      %2973 = vmatprep.subr.mxu0 0.0
      %2974 = vmatpush1.msra.mxu0 0.0
      %2975 = vmatprep.subr.mxu0 0.0
      %2976 = vmatpush1.msra.mxu0 0.0
      %2977 = vmatprep.subr.mxu0 0.0
      %2978 = vmatpush1.msra.mxu0 0.0
      %2979 = vmatprep.subr.mxu0 0.0
      %2980 = vmatpush1.msra.mxu0 0.0
      %2981 = vmatprep.subr.mxu0 0.0
      %2982 = vmatpush1.msra.mxu0 0.0
      %2983 = vmatprep.subr.mxu0 0.0
      %2984 = vmatpush1.msra.mxu0 0.0
      %2985 = vmatprep.subr.mxu0 0.0
      %2986 = vmatpush1.msra.mxu0 0.0
      %2987 = vmatprep.subr.mxu0 0.0
      %2988 = vmatpush1.msra.mxu0 0.0
      %2989 = vmatprep.subr.mxu0 0.0
      %2990 = vmatpush1.msra.mxu0 0.0
      %2991 = vmatprep.subr.mxu0 0.0
      %2992 = vmatpush1.msra.mxu0 0.0
      %2993 = vmatprep.subr.mxu0 0.0
      %2994 = vmatpush1.msra.mxu0 0.0
      %2995 = vmatprep.subr.mxu0 0.0
      %2996 = vmatpush1.msra.mxu0 0.0
      %2997 = vmatprep.subr.mxu0 0.0
      %2998 = vmatpush1.msra.mxu0 0.0
      %2999 = vmatprep.subr.mxu0 0.0
      %3000 = vmatpush1.msra.mxu0 0.0
      %3001 = vmatprep.subr.mxu0 0.0
      %3002 = vmatpush1.msra.mxu0 0.0
      %3003 = vmatprep.subr.mxu0 0.0
      %3004 = vmatpush1.msra.mxu0 0.0
      %3005 = vmatprep.subr.mxu0 0.0
      %3006 = vmatpush1.msra.mxu0 0.0
      %3007 = vmatprep.subr.mxu0 0.0
      %3008 = vmatpush1.msra.mxu0 0.0
      %3009 = vmatprep.subr.mxu0 0.0
      %3010 = vmatpush1.msra.mxu0 0.0
      %3011 = vmatprep.subr.mxu0 0.0
      %3012 = vmatpush1.msra.mxu0 0.0
      %3013 = vmatprep.subr.mxu0 0.0
      %3014 = vmatpush1.msra.mxu0 0.0
      %3015 = vmatprep.subr.mxu0 0.0
      %3016 = vmatpush1.msra.mxu0 0.0
      %3017 = vmatprep.subr.mxu0 0.0
      %3018 = vmatpush1.msra.mxu0 0.0
      %3019 = vmatprep.subr.mxu0 0.0
      %3020 = vmatpush1.msra.mxu0 0.0
      %3021 = vmatprep.subr.mxu0 0.0
      %3022 = vmatpush1.msra.mxu0 0.0
      %3023 = vmatprep.subr.mxu0 0.0
      %3024 = vmatpush1.msra.mxu0 0.0
      %3025 = vmatprep.mubr.f32.mxu0 0.0
      %3026 = vmatmul.mubr.f32.gmra.mrb[0].mxu0 %v2950
      %v3027 = vpop.f32.mrb[0].mxu0
      %v3028 = vadd.f32 0.0, %v3027
      %v3029 = vpop.f32.mrb[0].mxu0
      %3030 = vmatprep.mubr.f32.mxu0 0.0
      %3031 = vmatmul.mubr.f32.gmra.mrb[0].mxu0 %v2953
      %v3032 = vpop.f32.mrb[0].mxu0
      %v3033 = vadd.f32 0.0, %v3032
      %v3034 = vpop.f32.mrb[0].mxu0
      %3035 = vmatprep.mubr.f32.mxu0 0.0
      %3036 = vmatmul.mubr.f32.gmra.mrb[0].mxu0 %v2956
      %v3037 = vpop.f32.mrb[0].mxu0
      %v3038 = vadd.f32 0.0, %v3037
      %v3039 = vpop.f32.mrb[0].mxu0
      %3040 = vmatprep.mubr.f32.mxu0 0.0
      %3041 = vmatmul.mubr.f32.gmra.mrb[0].mxu0 %v2959
      %v3042 = vpop.f32.mrb[0].mxu0
      %v3043 = vadd.f32 0.0, %v3042
      %v3044 = vpop.f32.mrb[0].mxu0
      %3045 = vdwg.mxu0
      %v3047 = vsel %vm749, %v3028, 0
      %v3050 = vsel %vm749, %v3033, 0
      %v3053 = vsel %vm749, %v3038, 0
      %v3056 = vsel %vm749, %v3043, 0
      %3058 = vmatprep.subr.mxu0 0.0
      %3059 = vmatpush1.msra.mxu0 %v2385
      %3060 = vmatprep.subr.mxu0 0.0
      %3061 = vmatpush1.msra.mxu0 0.0
      %3062 = vmatprep.subr.mxu0 0.0
      %3063 = vmatpush1.msra.mxu0 0.0
      %3064 = vmatprep.subr.mxu0 0.0
      %3065 = vmatpush1.msra.mxu0 0.0
      %3066 = vmatprep.subr.mxu0 0.0
      %3067 = vmatpush1.msra.mxu0 0.0
      %3068 = vmatprep.subr.mxu0 0.0
      %3069 = vmatpush1.msra.mxu0 0.0
      %3070 = vmatprep.subr.mxu0 0.0
      %3071 = vmatpush1.msra.mxu0 0.0
      %3072 = vmatprep.subr.mxu0 0.0
      %3073 = vmatpush1.msra.mxu0 0.0
      %3074 = vmatprep.subr.mxu0 0.0
      %3075 = vmatpush1.msra.mxu0 0.0
      %3076 = vmatprep.subr.mxu0 0.0
      %3077 = vmatpush1.msra.mxu0 0.0
      %3078 = vmatprep.subr.mxu0 0.0
      %3079 = vmatpush1.msra.mxu0 0.0
      %3080 = vmatprep.subr.mxu0 0.0
      %3081 = vmatpush1.msra.mxu0 0.0
      %3082 = vmatprep.subr.mxu0 0.0
      %3083 = vmatpush1.msra.mxu0 0.0
      %3084 = vmatprep.subr.mxu0 0.0
      %3085 = vmatpush1.msra.mxu0 0.0
      %3086 = vmatprep.subr.mxu0 0.0
      %3087 = vmatpush1.msra.mxu0 0.0
      %3088 = vmatprep.subr.mxu0 0.0
      %3089 = vmatpush1.msra.mxu0 0.0
      %3090 = vmatprep.subr.mxu0 0.0
      %3091 = vmatpush1.msra.mxu0 0.0
      %3092 = vmatprep.subr.mxu0 0.0
      %3093 = vmatpush1.msra.mxu0 0.0
      %3094 = vmatprep.subr.mxu0 0.0
      %3095 = vmatpush1.msra.mxu0 0.0
      %3096 = vmatprep.subr.mxu0 0.0
      %3097 = vmatpush1.msra.mxu0 0.0
      %3098 = vmatprep.subr.mxu0 0.0
      %3099 = vmatpush1.msra.mxu0 0.0
      %3100 = vmatprep.subr.mxu0 0.0
      %3101 = vmatpush1.msra.mxu0 0.0
      %3102 = vmatprep.subr.mxu0 0.0
      %3103 = vmatpush1.msra.mxu0 0.0
      %3104 = vmatprep.subr.mxu0 0.0
      %3105 = vmatpush1.msra.mxu0 0.0
      %3106 = vmatprep.subr.mxu0 0.0
      %3107 = vmatpush1.msra.mxu0 0.0
      %3108 = vmatprep.subr.mxu0 0.0
      %3109 = vmatpush1.msra.mxu0 0.0
      %3110 = vmatprep.subr.mxu0 0.0
      %3111 = vmatpush1.msra.mxu0 0.0
      %3112 = vmatprep.subr.mxu0 0.0
      %3113 = vmatpush1.msra.mxu0 0.0
      %3114 = vmatprep.subr.mxu0 0.0
      %3115 = vmatpush1.msra.mxu0 0.0
      %3116 = vmatprep.subr.mxu0 0.0
      %3117 = vmatpush1.msra.mxu0 0.0
      %3118 = vmatprep.subr.mxu0 0.0
      %3119 = vmatpush1.msra.mxu0 0.0
      %3120 = vmatprep.subr.mxu0 0.0
      %3121 = vmatpush1.msra.mxu0 0.0
      %3122 = vmatprep.mubr.f32.mxu0 0.0
      %3123 = vmatmul.mubr.f32.gmra.mrb[0].mxu0 %v3047
      %v3124 = vpop.f32.mrb[0].mxu0
      %v3125 = vadd.f32 0.0, %v3124
      %v3126 = vpop.f32.mrb[0].mxu0
      %3127 = vmatprep.mubr.f32.mxu0 0.0
      %3128 = vmatmul.mubr.f32.gmra.mrb[0].mxu0 %v3050
      %v3129 = vpop.f32.mrb[0].mxu0
      %v3130 = vadd.f32 0.0, %v3129
      %v3131 = vpop.f32.mrb[0].mxu0
      %3132 = vmatprep.mubr.f32.mxu0 0.0
      %3133 = vmatmul.mubr.f32.gmra.mrb[0].mxu0 %v3053
      %v3134 = vpop.f32.mrb[0].mxu0
      %v3135 = vadd.f32 0.0, %v3134
      %v3136 = vpop.f32.mrb[0].mxu0
      %3137 = vmatprep.mubr.f32.mxu0 0.0
      %3138 = vmatmul.mubr.f32.gmra.mrb[0].mxu0 %v3056
      %v3139 = vpop.f32.mrb[0].mxu0
      %v3140 = vadd.f32 0.0, %v3139
      %v3141 = vpop.f32.mrb[0].mxu0
      %3142 = vdwg.mxu0
      %v3144 = vsel %vm749, %v2750, 0
      %v3147 = vsel %vm749, %v2755, 0
      %v3150 = vsel %vm749, %v2760, 0
      %v3153 = vsel %vm749, %v2765, 0
      %3155 = vmatprep.subr.mxu0 0.0
      %3156 = vmatpush1.msra.mxu0 %v2384
      %3157 = vmatprep.subr.mxu0 0.0
      %3158 = vmatpush1.msra.mxu0 0.0
      %3159 = vmatprep.subr.mxu0 0.0
      %3160 = vmatpush1.msra.mxu0 0.0
      %3161 = vmatprep.subr.mxu0 0.0
      %3162 = vmatpush1.msra.mxu0 0.0
      %3163 = vmatprep.subr.mxu0 0.0
      %3164 = vmatpush1.msra.mxu0 0.0
      %3165 = vmatprep.subr.mxu0 0.0
      %3166 = vmatpush1.msra.mxu0 0.0
      %3167 = vmatprep.subr.mxu0 0.0
      %3168 = vmatpush1.msra.mxu0 0.0
      %3169 = vmatprep.subr.mxu0 0.0
      %3170 = vmatpush1.msra.mxu0 0.0
      %3171 = vmatprep.subr.mxu0 0.0
      %3172 = vmatpush1.msra.mxu0 0.0
      %3173 = vmatprep.subr.mxu0 0.0
      %3174 = vmatpush1.msra.mxu0 0.0
      %3175 = vmatprep.subr.mxu0 0.0
      %3176 = vmatpush1.msra.mxu0 0.0
      %3177 = vmatprep.subr.mxu0 0.0
      %3178 = vmatpush1.msra.mxu0 0.0
      %3179 = vmatprep.subr.mxu0 0.0
      %3180 = vmatpush1.msra.mxu0 0.0
      %3181 = vmatprep.subr.mxu0 0.0
      %3182 = vmatpush1.msra.mxu0 0.0
      %3183 = vmatprep.subr.mxu0 0.0
      %3184 = vmatpush1.msra.mxu0 0.0
      %3185 = vmatprep.subr.mxu0 0.0
      %3186 = vmatpush1.msra.mxu0 0.0
      %3187 = vmatprep.subr.mxu0 0.0
      %3188 = vmatpush1.msra.mxu0 0.0
      %3189 = vmatprep.subr.mxu0 0.0
      %3190 = vmatpush1.msra.mxu0 0.0
      %3191 = vmatprep.subr.mxu0 0.0
      %3192 = vmatpush1.msra.mxu0 0.0
      %3193 = vmatprep.subr.mxu0 0.0
      %3194 = vmatpush1.msra.mxu0 0.0
      %3195 = vmatprep.subr.mxu0 0.0
      %3196 = vmatpush1.msra.mxu0 0.0
      %3197 = vmatprep.subr.mxu0 0.0
      %3198 = vmatpush1.msra.mxu0 0.0
      %3199 = vmatprep.subr.mxu0 0.0
      %3200 = vmatpush1.msra.mxu0 0.0
      %3201 = vmatprep.subr.mxu0 0.0
      %3202 = vmatpush1.msra.mxu0 0.0
      %3203 = vmatprep.subr.mxu0 0.0
      %3204 = vmatpush1.msra.mxu0 0.0
      %3205 = vmatprep.subr.mxu0 0.0
      %3206 = vmatpush1.msra.mxu0 0.0
      %3207 = vmatprep.subr.mxu0 0.0
      %3208 = vmatpush1.msra.mxu0 0.0
      %3209 = vmatprep.subr.mxu0 0.0
      %3210 = vmatpush1.msra.mxu0 0.0
      %3211 = vmatprep.subr.mxu0 0.0
      %3212 = vmatpush1.msra.mxu0 0.0
      %3213 = vmatprep.subr.mxu0 0.0
      %3214 = vmatpush1.msra.mxu0 0.0
      %3215 = vmatprep.subr.mxu0 0.0
      %3216 = vmatpush1.msra.mxu0 0.0
      %3217 = vmatprep.subr.mxu0 0.0
      %3218 = vmatpush1.msra.mxu0 0.0
      %3219 = vmatprep.mubr.f32.mxu0 0.0
      %3220 = vmatmul.mubr.f32.gmra.mrb[0].mxu0 %v3144
      %v3221 = vpop.f32.mrb[0].mxu0
      %v3222 = vadd.f32 %v3125, %v3221
      %v3223 = vpop.f32.mrb[0].mxu0
      %3224 = vmatprep.mubr.f32.mxu0 0.0
      %3225 = vmatmul.mubr.f32.gmra.mrb[0].mxu0 %v3147
      %v3226 = vpop.f32.mrb[0].mxu0
      %v3227 = vadd.f32 %v3130, %v3226
      %v3228 = vpop.f32.mrb[0].mxu0
      %3229 = vmatprep.mubr.f32.mxu0 0.0
      %3230 = vmatmul.mubr.f32.gmra.mrb[0].mxu0 %v3150
      %v3231 = vpop.f32.mrb[0].mxu0
      %v3232 = vadd.f32 %v3135, %v3231
      %v3233 = vpop.f32.mrb[0].mxu0
      %3234 = vmatprep.mubr.f32.mxu0 0.0
      %3235 = vmatmul.mubr.f32.gmra.mrb[0].mxu0 %v3153
      %v3236 = vpop.f32.mrb[0].mxu0
      %v3237 = vadd.f32 %v3140, %v3236
      %v3238 = vpop.f32.mrb[0].mxu0
      %3239 = vdwg.mxu0
      %3240 = vrot.lane.b32.xlu0 %v2476, 112
      %v3241 = vpop.permute.xlu0 %3240
      %3242 = vrot.lane.b32.xlu0 %v2481, 112
      %v3243 = vpop.permute.xlu0 %3242
      %3244 = vrot.lane.b32.xlu0 %v2486, 112
      %v3245 = vpop.permute.xlu0 %3244
      %3246 = vrot.lane.b32.xlu0 %v2491, 112
      %v3247 = vpop.permute.xlu0 %3246
      %3248 = vrot.lane.b32.xlu0 %v2476, 80
      %v3249 = vpop.permute.xlu0 %3248
      %3250 = vrot.lane.b32.xlu0 %v2481, 80
      %v3251 = vpop.permute.xlu0 %3250
      %3252 = vrot.lane.b32.xlu0 %v2486, 80
      %v3253 = vpop.permute.xlu0 %3252
      %3254 = vrot.lane.b32.xlu0 %v2491, 80
      %v3255 = vpop.permute.xlu0 %3254
      %v3256 = vsel %vm749, %v3241, 0
      %v3258 = vsel %vm749, %v3243, 0
      %v3260 = vsel %vm749, %v3245, 0
      %v3262 = vsel %vm749, %v3247, 0
      %v3264 = vsel %vm749, %v3249, 0
      %v3266 = vsel %vm749, %v3251, 0
      %v3268 = vsel %vm749, %v3253, 0
      %v3270 = vsel %vm749, %v3255, 0
      %3272 = vmatprep.subr.mxu0 0.0
      %3273 = vmatpush1.xpose.msra.mxu0 %v3264
      %3274 = vmatprep.subr.mxu0 0.0
      %3275 = vmatpush1.xpose.msra.mxu0 %v3266
      %3276 = vmatprep.subr.mxu0 0.0
      %3277 = vmatpush1.xpose.msra.mxu0 %v3268
      %3278 = vmatprep.subr.mxu0 0.0
      %3279 = vmatpush1.xpose.msra.mxu0 %v3270
      %3280 = vmatprep.subr.mxu0 0.0
      %3281 = vmatpush1.xpose.msra.mxu0 0.0
      %3282 = vmatprep.subr.mxu0 0.0
      %3283 = vmatpush1.xpose.msra.mxu0 0.0
      %3284 = vmatprep.subr.mxu0 0.0
      %3285 = vmatpush1.xpose.msra.mxu0 0.0
      %3286 = vmatprep.subr.mxu0 0.0
      %3287 = vmatpush1.xpose.msra.mxu0 0.0
      %3288 = vmatprep.subr.mxu0 0.0
      %3289 = vmatpush1.xpose.msra.mxu0 0.0
      %3290 = vmatprep.subr.mxu0 0.0
      %3291 = vmatpush1.xpose.msra.mxu0 0.0
      %3292 = vmatprep.subr.mxu0 0.0
      %3293 = vmatpush1.xpose.msra.mxu0 0.0
      %3294 = vmatprep.subr.mxu0 0.0
      %3295 = vmatpush1.xpose.msra.mxu0 0.0
      %3296 = vmatprep.subr.mxu0 0.0
      %3297 = vmatpush1.xpose.msra.mxu0 0.0
      %3298 = vmatprep.subr.mxu0 0.0
      %3299 = vmatpush1.xpose.msra.mxu0 0.0
      %3300 = vmatprep.subr.mxu0 0.0
      %3301 = vmatpush1.xpose.msra.mxu0 0.0
      %3302 = vmatprep.subr.mxu0 0.0
      %3303 = vmatpush1.xpose.msra.mxu0 0.0
      %3304 = vmatprep.subr.mxu0 0.0
      %3305 = vmatpush1.xpose.msra.mxu0 0.0
      %3306 = vmatprep.subr.mxu0 0.0
      %3307 = vmatpush1.xpose.msra.mxu0 0.0
      %3308 = vmatprep.subr.mxu0 0.0
      %3309 = vmatpush1.xpose.msra.mxu0 0.0
      %3310 = vmatprep.subr.mxu0 0.0
      %3311 = vmatpush1.xpose.msra.mxu0 0.0
      %3312 = vmatprep.subr.mxu0 0.0
      %3313 = vmatpush1.xpose.msra.mxu0 0.0
      %3314 = vmatprep.subr.mxu0 0.0
      %3315 = vmatpush1.xpose.msra.mxu0 0.0
      %3316 = vmatprep.subr.mxu0 0.0
      %3317 = vmatpush1.xpose.msra.mxu0 0.0
      %3318 = vmatprep.subr.mxu0 0.0
      %3319 = vmatpush1.xpose.msra.mxu0 0.0
      %3320 = vmatprep.subr.mxu0 0.0
      %3321 = vmatpush1.xpose.msra.mxu0 0.0
      %3322 = vmatprep.subr.mxu0 0.0
      %3323 = vmatpush1.xpose.msra.mxu0 0.0
      %3324 = vmatprep.subr.mxu0 0.0
      %3325 = vmatpush1.xpose.msra.mxu0 0.0
      %3326 = vmatprep.subr.mxu0 0.0
      %3327 = vmatpush1.xpose.msra.mxu0 0.0
      %3328 = vmatprep.subr.mxu0 0.0
      %3329 = vmatpush1.xpose.msra.mxu0 0.0
      %3330 = vmatprep.subr.mxu0 0.0
      %3331 = vmatpush1.xpose.msra.mxu0 0.0
      %3332 = vmatprep.subr.mxu0 0.0
      %3333 = vmatpush1.xpose.msra.mxu0 0.0
      %3334 = vmatprep.subr.mxu0 0.0
      %3335 = vmatpush1.xpose.msra.mxu0 0.0
      %3336 = vmatprep.mubr.f32.mxu0 0.0
      %3337 = vmatmul.mubr.f32.gmra.mrb[0].mxu0 %v3256
      %v3338 = vpop.f32.mrb[0].mxu0
      %v3339 = vadd.f32 0.0, %v3338
      %v3340 = vpop.f32.mrb[0].mxu0
      %3341 = vmatprep.mubr.f32.mxu0 0.0
      %3342 = vmatmul.mubr.f32.gmra.mrb[0].mxu0 %v3258
      %v3343 = vpop.f32.mrb[0].mxu0
      %v3344 = vadd.f32 0.0, %v3343
      %v3345 = vpop.f32.mrb[0].mxu0
      %3346 = vmatprep.mubr.f32.mxu0 0.0
      %3347 = vmatmul.mubr.f32.gmra.mrb[0].mxu0 %v3260
      %v3348 = vpop.f32.mrb[0].mxu0
      %v3349 = vadd.f32 0.0, %v3348
      %v3350 = vpop.f32.mrb[0].mxu0
      %3351 = vmatprep.mubr.f32.mxu0 0.0
      %3352 = vmatmul.mubr.f32.gmra.mrb[0].mxu0 %v3262
      %v3353 = vpop.f32.mrb[0].mxu0
      %v3354 = vadd.f32 0.0, %v3353
      %v3355 = vpop.f32.mrb[0].mxu0
      %3356 = vdwg.mxu0
      %v3357 = vmul.f32 %v3339, 0.35355338
      %v3358 = vmul.f32 %v3344, 0.35355338
      %v3359 = vmul.f32 %v3349, 0.35355338
      %v3360 = vmul.f32 %v3354, 0.35355338
      %v3361 = vadd.f32 %v3357, %v2372
      %v3362 = vadd.f32 %v3358, %v2373
      %v3363 = vadd.f32 %v3359, %v2374
      %v3364 = vadd.f32 %v3360, %v2375
      %v3365 = vsel %vm542, %v3361, -inf
      %3366 = vmax.xlane.f32.xlu0 %v3365
      %v3367 = vpop.xlane.xlu0 %3366
      %v3368 = vsel %vm542, %v3362, -inf
      %3369 = vmax.xlane.f32.xlu0 %v3368
      %v3370 = vpop.xlane.xlu0 %3369
      %v3371 = vsel %vm542, %v3363, -inf
      %3372 = vmax.xlane.f32.xlu0 %v3371
      %v3373 = vpop.xlane.xlu0 %3372
      %v3374 = vsel %vm542, %v3364, -inf
      %3375 = vmax.xlane.f32.xlu0 %v3374
      %v3376 = vpop.xlane.xlu0 %3375
      %v3377 = vsub.f32 %v3361, %v3367
      %v3378 = vsub.f32 %v3362, %v3370
      %v3379 = vsub.f32 %v3363, %v3373
      %v3380 = vsub.f32 %v3364, %v3376
      %v3381 = vmul.f32 %v3377, 1.442695
      %v3382 = vpow.pop %v3381
      %v3383 = vmul.f32 %v3378, 1.442695
      %v3384 = vpow.pop %v3383
      %v3385 = vmul.f32 %v3379, 1.442695
      %v3386 = vpow.pop %v3385
      %v3387 = vmul.f32 %v3380, 1.442695
      %v3388 = vpow.pop %v3387
      %v3389 = vsel %vm542, %v3382, 0.0
      %3390 = vadd.xlane.f32.xlu0 %v3389
      %v3391 = vpop.xlane.xlu0 %3390
      %v3392 = vsel %vm542, %v3384, 0.0
      %3393 = vadd.xlane.f32.xlu0 %v3392
      %v3394 = vpop.xlane.xlu0 %3393
      %v3395 = vsel %vm542, %v3386, 0.0
      %3396 = vadd.xlane.f32.xlu0 %v3395
      %v3397 = vpop.xlane.xlu0 %3396
      %v3398 = vsel %vm542, %v3388, 0.0
      %3399 = vadd.xlane.f32.xlu0 %v3398
      %v3400 = vpop.xlane.xlu0 %3399
      %v3401 = vrcp.pop %v3391
      %v3402 = vrcp.pop %v3394
      %v3403 = vrcp.pop %v3397
      %v3404 = vrcp.pop %v3400
      %v3405 = vmul.f32 %v3382, %v3401
      %v3406 = vmul.f32 %v3384, %v3402
      %v3407 = vmul.f32 %v3386, %v3403
      %v3408 = vmul.f32 %v3388, %v3404
      %3409 = vrot.lane.b32.xlu0 %v2476, 48
      %v3410 = vpop.permute.xlu0 %3409
      %3411 = vrot.lane.b32.xlu0 %v2481, 48
      %v3412 = vpop.permute.xlu0 %3411
      %3413 = vrot.lane.b32.xlu0 %v2486, 48
      %v3414 = vpop.permute.xlu0 %3413
      %3415 = vrot.lane.b32.xlu0 %v2491, 48
      %v3416 = vpop.permute.xlu0 %3415
      %v3422 = vsel %vm542, %v3405, 0
      %v3425 = vsel %vm542, %v3406, 0
      %v3428 = vsel %vm542, %v3407, 0
      %v3431 = vsel %vm542, %v3408, 0
      %3433 = vmatprep.subr.mxu0 0.0
      %3434 = vmatpush1.msra.mxu0 %v3410
      %3435 = vmatprep.subr.mxu0 0.0
      %3436 = vmatpush1.msra.mxu0 %v3412
      %3437 = vmatprep.subr.mxu0 0.0
      %3438 = vmatpush1.msra.mxu0 %v3414
      %3439 = vmatprep.subr.mxu0 0.0
      %3440 = vmatpush1.msra.mxu0 %v3416
      %3441 = vmatprep.subr.mxu0 0.0
      %3442 = vmatpush1.msra.mxu0 0.0
      %3443 = vmatprep.subr.mxu0 0.0
      %3444 = vmatpush1.msra.mxu0 0.0
      %3445 = vmatprep.subr.mxu0 0.0
      %3446 = vmatpush1.msra.mxu0 0.0
      %3447 = vmatprep.subr.mxu0 0.0
      %3448 = vmatpush1.msra.mxu0 0.0
      %3449 = vmatprep.subr.mxu0 0.0
      %3450 = vmatpush1.msra.mxu0 0.0
      %3451 = vmatprep.subr.mxu0 0.0
      %3452 = vmatpush1.msra.mxu0 0.0
      %3453 = vmatprep.subr.mxu0 0.0
      %3454 = vmatpush1.msra.mxu0 0.0
      %3455 = vmatprep.subr.mxu0 0.0
      %3456 = vmatpush1.msra.mxu0 0.0
      %3457 = vmatprep.subr.mxu0 0.0
      %3458 = vmatpush1.msra.mxu0 0.0
      %3459 = vmatprep.subr.mxu0 0.0
      %3460 = vmatpush1.msra.mxu0 0.0
      %3461 = vmatprep.subr.mxu0 0.0
      %3462 = vmatpush1.msra.mxu0 0.0
      %3463 = vmatprep.subr.mxu0 0.0
      %3464 = vmatpush1.msra.mxu0 0.0
      %3465 = vmatprep.subr.mxu0 0.0
      %3466 = vmatpush1.msra.mxu0 0.0
      %3467 = vmatprep.subr.mxu0 0.0
      %3468 = vmatpush1.msra.mxu0 0.0
      %3469 = vmatprep.subr.mxu0 0.0
      %3470 = vmatpush1.msra.mxu0 0.0
      %3471 = vmatprep.subr.mxu0 0.0
      %3472 = vmatpush1.msra.mxu0 0.0
      %3473 = vmatprep.subr.mxu0 0.0
      %3474 = vmatpush1.msra.mxu0 0.0
      %3475 = vmatprep.subr.mxu0 0.0
      %3476 = vmatpush1.msra.mxu0 0.0
      %3477 = vmatprep.subr.mxu0 0.0
      %3478 = vmatpush1.msra.mxu0 0.0
      %3479 = vmatprep.subr.mxu0 0.0
      %3480 = vmatpush1.msra.mxu0 0.0
      %3481 = vmatprep.subr.mxu0 0.0
      %3482 = vmatpush1.msra.mxu0 0.0
      %3483 = vmatprep.subr.mxu0 0.0
      %3484 = vmatpush1.msra.mxu0 0.0
      %3485 = vmatprep.subr.mxu0 0.0
      %3486 = vmatpush1.msra.mxu0 0.0
      %3487 = vmatprep.subr.mxu0 0.0
      %3488 = vmatpush1.msra.mxu0 0.0
      %3489 = vmatprep.subr.mxu0 0.0
      %3490 = vmatpush1.msra.mxu0 0.0
      %3491 = vmatprep.subr.mxu0 0.0
      %3492 = vmatpush1.msra.mxu0 0.0
      %3493 = vmatprep.subr.mxu0 0.0
      %3494 = vmatpush1.msra.mxu0 0.0
      %3495 = vmatprep.subr.mxu0 0.0
      %3496 = vmatpush1.msra.mxu0 0.0
      %3497 = vmatprep.mubr.f32.mxu0 0.0
      %3498 = vmatmul.mubr.f32.gmra.mrb[0].mxu0 %v3422
      %v3499 = vpop.f32.mrb[0].mxu0
      %v3500 = vadd.f32 0.0, %v3499
      %v3501 = vpop.f32.mrb[0].mxu0
      %3502 = vmatprep.mubr.f32.mxu0 0.0
      %3503 = vmatmul.mubr.f32.gmra.mrb[0].mxu0 %v3425
      %v3504 = vpop.f32.mrb[0].mxu0
      %v3505 = vadd.f32 0.0, %v3504
      %v3506 = vpop.f32.mrb[0].mxu0
      %3507 = vmatprep.mubr.f32.mxu0 0.0
      %3508 = vmatmul.mubr.f32.gmra.mrb[0].mxu0 %v3428
      %v3509 = vpop.f32.mrb[0].mxu0
      %v3510 = vadd.f32 0.0, %v3509
      %v3511 = vpop.f32.mrb[0].mxu0
      %3512 = vmatprep.mubr.f32.mxu0 0.0
      %3513 = vmatmul.mubr.f32.gmra.mrb[0].mxu0 %v3431
      %v3514 = vpop.f32.mrb[0].mxu0
      %v3515 = vadd.f32 0.0, %v3514
      %v3516 = vpop.f32.mrb[0].mxu0
      %3517 = vdwg.mxu0
      %v3519 = vsel %vm749, %v3500, 0
      %v3522 = vsel %vm749, %v3505, 0
      %v3525 = vsel %vm749, %v3510, 0
      %v3528 = vsel %vm749, %v3515, 0
      %3530 = vmatprep.subr.mxu0 0.0
      %3531 = vmatpush1.msra.mxu0 %v2386
      %3532 = vmatprep.subr.mxu0 0.0
      %3533 = vmatpush1.msra.mxu0 0.0
      %3534 = vmatprep.subr.mxu0 0.0
      %3535 = vmatpush1.msra.mxu0 0.0
      %3536 = vmatprep.subr.mxu0 0.0
      %3537 = vmatpush1.msra.mxu0 0.0
      %3538 = vmatprep.subr.mxu0 0.0
      %3539 = vmatpush1.msra.mxu0 0.0
      %3540 = vmatprep.subr.mxu0 0.0
      %3541 = vmatpush1.msra.mxu0 0.0
      %3542 = vmatprep.subr.mxu0 0.0
      %3543 = vmatpush1.msra.mxu0 0.0
      %3544 = vmatprep.subr.mxu0 0.0
      %3545 = vmatpush1.msra.mxu0 0.0
      %3546 = vmatprep.subr.mxu0 0.0
      %3547 = vmatpush1.msra.mxu0 0.0
      %3548 = vmatprep.subr.mxu0 0.0
      %3549 = vmatpush1.msra.mxu0 0.0
      %3550 = vmatprep.subr.mxu0 0.0
      %3551 = vmatpush1.msra.mxu0 0.0
      %3552 = vmatprep.subr.mxu0 0.0
      %3553 = vmatpush1.msra.mxu0 0.0
      %3554 = vmatprep.subr.mxu0 0.0
      %3555 = vmatpush1.msra.mxu0 0.0
      %3556 = vmatprep.subr.mxu0 0.0
      %3557 = vmatpush1.msra.mxu0 0.0
      %3558 = vmatprep.subr.mxu0 0.0
      %3559 = vmatpush1.msra.mxu0 0.0
      %3560 = vmatprep.subr.mxu0 0.0
      %3561 = vmatpush1.msra.mxu0 0.0
      %3562 = vmatprep.subr.mxu0 0.0
      %3563 = vmatpush1.msra.mxu0 0.0
      %3564 = vmatprep.subr.mxu0 0.0
      %3565 = vmatpush1.msra.mxu0 0.0
      %3566 = vmatprep.subr.mxu0 0.0
      %3567 = vmatpush1.msra.mxu0 0.0
      %3568 = vmatprep.subr.mxu0 0.0
      %3569 = vmatpush1.msra.mxu0 0.0
      %3570 = vmatprep.subr.mxu0 0.0
      %3571 = vmatpush1.msra.mxu0 0.0
      %3572 = vmatprep.subr.mxu0 0.0
      %3573 = vmatpush1.msra.mxu0 0.0
      %3574 = vmatprep.subr.mxu0 0.0
      %3575 = vmatpush1.msra.mxu0 0.0
      %3576 = vmatprep.subr.mxu0 0.0
      %3577 = vmatpush1.msra.mxu0 0.0
      %3578 = vmatprep.subr.mxu0 0.0
      %3579 = vmatpush1.msra.mxu0 0.0
      %3580 = vmatprep.subr.mxu0 0.0
      %3581 = vmatpush1.msra.mxu0 0.0
      %3582 = vmatprep.subr.mxu0 0.0
      %3583 = vmatpush1.msra.mxu0 0.0
      %3584 = vmatprep.subr.mxu0 0.0
      %3585 = vmatpush1.msra.mxu0 0.0
      %3586 = vmatprep.subr.mxu0 0.0
      %3587 = vmatpush1.msra.mxu0 0.0
      %3588 = vmatprep.subr.mxu0 0.0
      %3589 = vmatpush1.msra.mxu0 0.0
      %3590 = vmatprep.subr.mxu0 0.0
      %3591 = vmatpush1.msra.mxu0 0.0
      %3592 = vmatprep.subr.mxu0 0.0
      %3593 = vmatpush1.msra.mxu0 0.0
      %3594 = vmatprep.mubr.f32.mxu0 0.0
      %3595 = vmatmul.mubr.f32.gmra.mrb[0].mxu0 %v3519
      %v3596 = vpop.f32.mrb[0].mxu0
      %v3597 = vadd.f32 0.0, %v3596
      %v3598 = vpop.f32.mrb[0].mxu0
      %3599 = vmatprep.mubr.f32.mxu0 0.0
      %3600 = vmatmul.mubr.f32.gmra.mrb[0].mxu0 %v3522
      %v3601 = vpop.f32.mrb[0].mxu0
      %v3602 = vadd.f32 0.0, %v3601
      %v3603 = vpop.f32.mrb[0].mxu0
      %3604 = vmatprep.mubr.f32.mxu0 0.0
      %3605 = vmatmul.mubr.f32.gmra.mrb[0].mxu0 %v3525
      %v3606 = vpop.f32.mrb[0].mxu0
      %v3607 = vadd.f32 0.0, %v3606
      %v3608 = vpop.f32.mrb[0].mxu0
      %3609 = vmatprep.mubr.f32.mxu0 0.0
      %3610 = vmatmul.mubr.f32.gmra.mrb[0].mxu0 %v3528
      %v3611 = vpop.f32.mrb[0].mxu0
      %v3612 = vadd.f32 0.0, %v3611
      %v3613 = vpop.f32.mrb[0].mxu0
      %3614 = vdwg.mxu0
      %v3615 = vadd.f32 %v3222, %v3597
      %v3616 = vadd.f32 %v3227, %v3602
      %v3617 = vadd.f32 %v3232, %v3607
      %v3618 = vadd.f32 %v3237, %v3612
      %3619 = vrot.lane.b32.xlu0 %v2476, 104
      %v3620 = vpop.permute.xlu0 %3619
      %3621 = vrot.lane.b32.xlu0 %v2481, 104
      %v3622 = vpop.permute.xlu0 %3621
      %3623 = vrot.lane.b32.xlu0 %v2486, 104
      %v3624 = vpop.permute.xlu0 %3623
      %3625 = vrot.lane.b32.xlu0 %v2491, 104
      %v3626 = vpop.permute.xlu0 %3625
      %3627 = vrot.lane.b32.xlu0 %v2476, 72
      %v3628 = vpop.permute.xlu0 %3627
      %3629 = vrot.lane.b32.xlu0 %v2481, 72
      %v3630 = vpop.permute.xlu0 %3629
      %3631 = vrot.lane.b32.xlu0 %v2486, 72
      %v3632 = vpop.permute.xlu0 %3631
      %3633 = vrot.lane.b32.xlu0 %v2491, 72
      %v3634 = vpop.permute.xlu0 %3633
      %v3635 = vsel %vm749, %v3620, 0
      %v3637 = vsel %vm749, %v3622, 0
      %v3639 = vsel %vm749, %v3624, 0
      %v3641 = vsel %vm749, %v3626, 0
      %v3643 = vsel %vm749, %v3628, 0
      %v3645 = vsel %vm749, %v3630, 0
      %v3647 = vsel %vm749, %v3632, 0
      %v3649 = vsel %vm749, %v3634, 0
      %3651 = vmatprep.subr.mxu0 0.0
      %3652 = vmatpush1.xpose.msra.mxu0 %v3643
      %3653 = vmatprep.subr.mxu0 0.0
      %3654 = vmatpush1.xpose.msra.mxu0 %v3645
      %3655 = vmatprep.subr.mxu0 0.0
      %3656 = vmatpush1.xpose.msra.mxu0 %v3647
      %3657 = vmatprep.subr.mxu0 0.0
      %3658 = vmatpush1.xpose.msra.mxu0 %v3649
      %3659 = vmatprep.subr.mxu0 0.0
      %3660 = vmatpush1.xpose.msra.mxu0 0.0
      %3661 = vmatprep.subr.mxu0 0.0
      %3662 = vmatpush1.xpose.msra.mxu0 0.0
      %3663 = vmatprep.subr.mxu0 0.0
      %3664 = vmatpush1.xpose.msra.mxu0 0.0
      %3665 = vmatprep.subr.mxu0 0.0
      %3666 = vmatpush1.xpose.msra.mxu0 0.0
      %3667 = vmatprep.subr.mxu0 0.0
      %3668 = vmatpush1.xpose.msra.mxu0 0.0
      %3669 = vmatprep.subr.mxu0 0.0
      %3670 = vmatpush1.xpose.msra.mxu0 0.0
      %3671 = vmatprep.subr.mxu0 0.0
      %3672 = vmatpush1.xpose.msra.mxu0 0.0
      %3673 = vmatprep.subr.mxu0 0.0
      %3674 = vmatpush1.xpose.msra.mxu0 0.0
      %3675 = vmatprep.subr.mxu0 0.0
      %3676 = vmatpush1.xpose.msra.mxu0 0.0
      %3677 = vmatprep.subr.mxu0 0.0
      %3678 = vmatpush1.xpose.msra.mxu0 0.0
      %3679 = vmatprep.subr.mxu0 0.0
      %3680 = vmatpush1.xpose.msra.mxu0 0.0
      %3681 = vmatprep.subr.mxu0 0.0
      %3682 = vmatpush1.xpose.msra.mxu0 0.0
      %3683 = vmatprep.subr.mxu0 0.0
      %3684 = vmatpush1.xpose.msra.mxu0 0.0
      %3685 = vmatprep.subr.mxu0 0.0
      %3686 = vmatpush1.xpose.msra.mxu0 0.0
      %3687 = vmatprep.subr.mxu0 0.0
      %3688 = vmatpush1.xpose.msra.mxu0 0.0
      %3689 = vmatprep.subr.mxu0 0.0
      %3690 = vmatpush1.xpose.msra.mxu0 0.0
      %3691 = vmatprep.subr.mxu0 0.0
      %3692 = vmatpush1.xpose.msra.mxu0 0.0
      %3693 = vmatprep.subr.mxu0 0.0
      %3694 = vmatpush1.xpose.msra.mxu0 0.0
      %3695 = vmatprep.subr.mxu0 0.0
      %3696 = vmatpush1.xpose.msra.mxu0 0.0
      %3697 = vmatprep.subr.mxu0 0.0
      %3698 = vmatpush1.xpose.msra.mxu0 0.0
      %3699 = vmatprep.subr.mxu0 0.0
      %3700 = vmatpush1.xpose.msra.mxu0 0.0
      %3701 = vmatprep.subr.mxu0 0.0
      %3702 = vmatpush1.xpose.msra.mxu0 0.0
      %3703 = vmatprep.subr.mxu0 0.0
      %3704 = vmatpush1.xpose.msra.mxu0 0.0
      %3705 = vmatprep.subr.mxu0 0.0
      %3706 = vmatpush1.xpose.msra.mxu0 0.0
      %3707 = vmatprep.subr.mxu0 0.0
      %3708 = vmatpush1.xpose.msra.mxu0 0.0
      %3709 = vmatprep.subr.mxu0 0.0
      %3710 = vmatpush1.xpose.msra.mxu0 0.0
      %3711 = vmatprep.subr.mxu0 0.0
      %3712 = vmatpush1.xpose.msra.mxu0 0.0
      %3713 = vmatprep.subr.mxu0 0.0
      %3714 = vmatpush1.xpose.msra.mxu0 0.0
      %3715 = vmatprep.mubr.f32.mxu0 0.0
      %3716 = vmatmul.mubr.f32.gmra.mrb[0].mxu0 %v3635
      %v3717 = vpop.f32.mrb[0].mxu0
      %v3718 = vadd.f32 0.0, %v3717
      %v3719 = vpop.f32.mrb[0].mxu0
      %3720 = vmatprep.mubr.f32.mxu0 0.0
      %3721 = vmatmul.mubr.f32.gmra.mrb[0].mxu0 %v3637
      %v3722 = vpop.f32.mrb[0].mxu0
      %v3723 = vadd.f32 0.0, %v3722
      %v3724 = vpop.f32.mrb[0].mxu0
      %3725 = vmatprep.mubr.f32.mxu0 0.0
      %3726 = vmatmul.mubr.f32.gmra.mrb[0].mxu0 %v3639
      %v3727 = vpop.f32.mrb[0].mxu0
      %v3728 = vadd.f32 0.0, %v3727
      %v3729 = vpop.f32.mrb[0].mxu0
      %3730 = vmatprep.mubr.f32.mxu0 0.0
      %3731 = vmatmul.mubr.f32.gmra.mrb[0].mxu0 %v3641
      %v3732 = vpop.f32.mrb[0].mxu0
      %v3733 = vadd.f32 0.0, %v3732
      %v3734 = vpop.f32.mrb[0].mxu0
      %3735 = vdwg.mxu0
      %v3736 = vmul.f32 %v3718, 0.35355338
      %v3737 = vmul.f32 %v3723, 0.35355338
      %v3738 = vmul.f32 %v3728, 0.35355338
      %v3739 = vmul.f32 %v3733, 0.35355338
      %v3740 = vadd.f32 %v3736, %v2372
      %v3741 = vadd.f32 %v3737, %v2373
      %v3742 = vadd.f32 %v3738, %v2374
      %v3743 = vadd.f32 %v3739, %v2375
      %v3744 = vsel %vm542, %v3740, -inf
      %3745 = vmax.xlane.f32.xlu0 %v3744
      %v3746 = vpop.xlane.xlu0 %3745
      %v3747 = vsel %vm542, %v3741, -inf
      %3748 = vmax.xlane.f32.xlu0 %v3747
      %v3749 = vpop.xlane.xlu0 %3748
      %v3750 = vsel %vm542, %v3742, -inf
      %3751 = vmax.xlane.f32.xlu0 %v3750
      %v3752 = vpop.xlane.xlu0 %3751
      %v3753 = vsel %vm542, %v3743, -inf
      %3754 = vmax.xlane.f32.xlu0 %v3753
      %v3755 = vpop.xlane.xlu0 %3754
      %v3756 = vsub.f32 %v3740, %v3746
      %v3757 = vsub.f32 %v3741, %v3749
      %v3758 = vsub.f32 %v3742, %v3752
      %v3759 = vsub.f32 %v3743, %v3755
      %v3760 = vmul.f32 %v3756, 1.442695
      %v3761 = vpow.pop %v3760
      %v3762 = vmul.f32 %v3757, 1.442695
      %v3763 = vpow.pop %v3762
      %v3764 = vmul.f32 %v3758, 1.442695
      %v3765 = vpow.pop %v3764
      %v3766 = vmul.f32 %v3759, 1.442695
      %v3767 = vpow.pop %v3766
      %v3768 = vsel %vm542, %v3761, 0.0
      %3769 = vadd.xlane.f32.xlu0 %v3768
      %v3770 = vpop.xlane.xlu0 %3769
      %v3771 = vsel %vm542, %v3763, 0.0
      %3772 = vadd.xlane.f32.xlu0 %v3771
      %v3773 = vpop.xlane.xlu0 %3772
      %v3774 = vsel %vm542, %v3765, 0.0
      %3775 = vadd.xlane.f32.xlu0 %v3774
      %v3776 = vpop.xlane.xlu0 %3775
      %v3777 = vsel %vm542, %v3767, 0.0
      %3778 = vadd.xlane.f32.xlu0 %v3777
      %v3779 = vpop.xlane.xlu0 %3778
      %v3780 = vrcp.pop %v3770
      %v3781 = vrcp.pop %v3773
      %v3782 = vrcp.pop %v3776
      %v3783 = vrcp.pop %v3779
      %v3784 = vmul.f32 %v3761, %v3780
      %v3785 = vmul.f32 %v3763, %v3781
      %v3786 = vmul.f32 %v3765, %v3782
      %v3787 = vmul.f32 %v3767, %v3783
      %3788 = vrot.lane.b32.xlu0 %v2476, 40
      %v3789 = vpop.permute.xlu0 %3788
      %3790 = vrot.lane.b32.xlu0 %v2481, 40
      %v3791 = vpop.permute.xlu0 %3790
      %3792 = vrot.lane.b32.xlu0 %v2486, 40
      %v3793 = vpop.permute.xlu0 %3792
      %3794 = vrot.lane.b32.xlu0 %v2491, 40
      %v3795 = vpop.permute.xlu0 %3794
      %v3801 = vsel %vm542, %v3784, 0
      %v3804 = vsel %vm542, %v3785, 0
      %v3807 = vsel %vm542, %v3786, 0
      %v3810 = vsel %vm542, %v3787, 0
      %3812 = vmatprep.subr.mxu0 0.0
      %3813 = vmatpush1.msra.mxu0 %v3789
      %3814 = vmatprep.subr.mxu0 0.0
      %3815 = vmatpush1.msra.mxu0 %v3791
      %3816 = vmatprep.subr.mxu0 0.0
      %3817 = vmatpush1.msra.mxu0 %v3793
      %3818 = vmatprep.subr.mxu0 0.0
      %3819 = vmatpush1.msra.mxu0 %v3795
      %3820 = vmatprep.subr.mxu0 0.0
      %3821 = vmatpush1.msra.mxu0 0.0
      %3822 = vmatprep.subr.mxu0 0.0
      %3823 = vmatpush1.msra.mxu0 0.0
      %3824 = vmatprep.subr.mxu0 0.0
      %3825 = vmatpush1.msra.mxu0 0.0
      %3826 = vmatprep.subr.mxu0 0.0
      %3827 = vmatpush1.msra.mxu0 0.0
      %3828 = vmatprep.subr.mxu0 0.0
      %3829 = vmatpush1.msra.mxu0 0.0
      %3830 = vmatprep.subr.mxu0 0.0
      %3831 = vmatpush1.msra.mxu0 0.0
      %3832 = vmatprep.subr.mxu0 0.0
      %3833 = vmatpush1.msra.mxu0 0.0
      %3834 = vmatprep.subr.mxu0 0.0
      %3835 = vmatpush1.msra.mxu0 0.0
      %3836 = vmatprep.subr.mxu0 0.0
      %3837 = vmatpush1.msra.mxu0 0.0
      %3838 = vmatprep.subr.mxu0 0.0
      %3839 = vmatpush1.msra.mxu0 0.0
      %3840 = vmatprep.subr.mxu0 0.0
      %3841 = vmatpush1.msra.mxu0 0.0
      %3842 = vmatprep.subr.mxu0 0.0
      %3843 = vmatpush1.msra.mxu0 0.0
      %3844 = vmatprep.subr.mxu0 0.0
      %3845 = vmatpush1.msra.mxu0 0.0
      %3846 = vmatprep.subr.mxu0 0.0
      %3847 = vmatpush1.msra.mxu0 0.0
      %3848 = vmatprep.subr.mxu0 0.0
      %3849 = vmatpush1.msra.mxu0 0.0
      %3850 = vmatprep.subr.mxu0 0.0
      %3851 = vmatpush1.msra.mxu0 0.0
      %3852 = vmatprep.subr.mxu0 0.0
      %3853 = vmatpush1.msra.mxu0 0.0
      %3854 = vmatprep.subr.mxu0 0.0
      %3855 = vmatpush1.msra.mxu0 0.0
      %3856 = vmatprep.subr.mxu0 0.0
      %3857 = vmatpush1.msra.mxu0 0.0
      %3858 = vmatprep.subr.mxu0 0.0
      %3859 = vmatpush1.msra.mxu0 0.0
      %3860 = vmatprep.subr.mxu0 0.0
      %3861 = vmatpush1.msra.mxu0 0.0
      %3862 = vmatprep.subr.mxu0 0.0
      %3863 = vmatpush1.msra.mxu0 0.0
      %3864 = vmatprep.subr.mxu0 0.0
      %3865 = vmatpush1.msra.mxu0 0.0
      %3866 = vmatprep.subr.mxu0 0.0
      %3867 = vmatpush1.msra.mxu0 0.0
      %3868 = vmatprep.subr.mxu0 0.0
      %3869 = vmatpush1.msra.mxu0 0.0
      %3870 = vmatprep.subr.mxu0 0.0
      %3871 = vmatpush1.msra.mxu0 0.0
      %3872 = vmatprep.subr.mxu0 0.0
      %3873 = vmatpush1.msra.mxu0 0.0
      %3874 = vmatprep.subr.mxu0 0.0
      %3875 = vmatpush1.msra.mxu0 0.0
      %3876 = vmatprep.mubr.f32.mxu0 0.0
      %3877 = vmatmul.mubr.f32.gmra.mrb[0].mxu0 %v3801
      %v3878 = vpop.f32.mrb[0].mxu0
      %v3879 = vadd.f32 0.0, %v3878
      %v3880 = vpop.f32.mrb[0].mxu0
      %3881 = vmatprep.mubr.f32.mxu0 0.0
      %3882 = vmatmul.mubr.f32.gmra.mrb[0].mxu0 %v3804
      %v3883 = vpop.f32.mrb[0].mxu0
      %v3884 = vadd.f32 0.0, %v3883
      %v3885 = vpop.f32.mrb[0].mxu0
      %3886 = vmatprep.mubr.f32.mxu0 0.0
      %3887 = vmatmul.mubr.f32.gmra.mrb[0].mxu0 %v3807
      %v3888 = vpop.f32.mrb[0].mxu0
      %v3889 = vadd.f32 0.0, %v3888
      %v3890 = vpop.f32.mrb[0].mxu0
      %3891 = vmatprep.mubr.f32.mxu0 0.0
      %3892 = vmatmul.mubr.f32.gmra.mrb[0].mxu0 %v3810
      %v3893 = vpop.f32.mrb[0].mxu0
      %v3894 = vadd.f32 0.0, %v3893
      %v3895 = vpop.f32.mrb[0].mxu0
      %3896 = vdwg.mxu0
      %v3898 = vsel %vm749, %v3879, 0
      %v3901 = vsel %vm749, %v3884, 0
      %v3904 = vsel %vm749, %v3889, 0
      %v3907 = vsel %vm749, %v3894, 0
      %3909 = vmatprep.subr.mxu0 0.0
      %3910 = vmatpush1.msra.mxu0 %v2387
      %3911 = vmatprep.subr.mxu0 0.0
      %3912 = vmatpush1.msra.mxu0 0.0
      %3913 = vmatprep.subr.mxu0 0.0
      %3914 = vmatpush1.msra.mxu0 0.0
      %3915 = vmatprep.subr.mxu0 0.0
      %3916 = vmatpush1.msra.mxu0 0.0
      %3917 = vmatprep.subr.mxu0 0.0
      %3918 = vmatpush1.msra.mxu0 0.0
      %3919 = vmatprep.subr.mxu0 0.0
      %3920 = vmatpush1.msra.mxu0 0.0
      %3921 = vmatprep.subr.mxu0 0.0
      %3922 = vmatpush1.msra.mxu0 0.0
      %3923 = vmatprep.subr.mxu0 0.0
      %3924 = vmatpush1.msra.mxu0 0.0
      %3925 = vmatprep.subr.mxu0 0.0
      %3926 = vmatpush1.msra.mxu0 0.0
      %3927 = vmatprep.subr.mxu0 0.0
      %3928 = vmatpush1.msra.mxu0 0.0
      %3929 = vmatprep.subr.mxu0 0.0
      %3930 = vmatpush1.msra.mxu0 0.0
      %3931 = vmatprep.subr.mxu0 0.0
      %3932 = vmatpush1.msra.mxu0 0.0
      %3933 = vmatprep.subr.mxu0 0.0
      %3934 = vmatpush1.msra.mxu0 0.0
      %3935 = vmatprep.subr.mxu0 0.0
      %3936 = vmatpush1.msra.mxu0 0.0
      %3937 = vmatprep.subr.mxu0 0.0
      %3938 = vmatpush1.msra.mxu0 0.0
      %3939 = vmatprep.subr.mxu0 0.0
      %3940 = vmatpush1.msra.mxu0 0.0
      %3941 = vmatprep.subr.mxu0 0.0
      %3942 = vmatpush1.msra.mxu0 0.0
      %3943 = vmatprep.subr.mxu0 0.0
      %3944 = vmatpush1.msra.mxu0 0.0
      %3945 = vmatprep.subr.mxu0 0.0
      %3946 = vmatpush1.msra.mxu0 0.0
      %3947 = vmatprep.subr.mxu0 0.0
      %3948 = vmatpush1.msra.mxu0 0.0
      %3949 = vmatprep.subr.mxu0 0.0
      %3950 = vmatpush1.msra.mxu0 0.0
      %3951 = vmatprep.subr.mxu0 0.0
      %3952 = vmatpush1.msra.mxu0 0.0
      %3953 = vmatprep.subr.mxu0 0.0
      %3954 = vmatpush1.msra.mxu0 0.0
      %3955 = vmatprep.subr.mxu0 0.0
      %3956 = vmatpush1.msra.mxu0 0.0
      %3957 = vmatprep.subr.mxu0 0.0
      %3958 = vmatpush1.msra.mxu0 0.0
      %3959 = vmatprep.subr.mxu0 0.0
      %3960 = vmatpush1.msra.mxu0 0.0
      %3961 = vmatprep.subr.mxu0 0.0
      %3962 = vmatpush1.msra.mxu0 0.0
      %3963 = vmatprep.subr.mxu0 0.0
      %3964 = vmatpush1.msra.mxu0 0.0
      %3965 = vmatprep.subr.mxu0 0.0
      %3966 = vmatpush1.msra.mxu0 0.0
      %3967 = vmatprep.subr.mxu0 0.0
      %3968 = vmatpush1.msra.mxu0 0.0
      %3969 = vmatprep.subr.mxu0 0.0
      %3970 = vmatpush1.msra.mxu0 0.0
      %3971 = vmatprep.subr.mxu0 0.0
      %3972 = vmatpush1.msra.mxu0 0.0
      %3973 = vmatprep.mubr.f32.mxu0 0.0
      %3974 = vmatmul.mubr.f32.gmra.mrb[0].mxu0 %v3898
      %v3975 = vpop.f32.mrb[0].mxu0
      %v3976 = vadd.f32 0.0, %v3975
      %v3977 = vpop.f32.mrb[0].mxu0
      %3978 = vmatprep.mubr.f32.mxu0 0.0
      %3979 = vmatmul.mubr.f32.gmra.mrb[0].mxu0 %v3901
      %v3980 = vpop.f32.mrb[0].mxu0
      %v3981 = vadd.f32 0.0, %v3980
      %v3982 = vpop.f32.mrb[0].mxu0
      %3983 = vmatprep.mubr.f32.mxu0 0.0
      %3984 = vmatmul.mubr.f32.gmra.mrb[0].mxu0 %v3904
      %v3985 = vpop.f32.mrb[0].mxu0
      %v3986 = vadd.f32 0.0, %v3985
      %v3987 = vpop.f32.mrb[0].mxu0
      %3988 = vmatprep.mubr.f32.mxu0 0.0
      %3989 = vmatmul.mubr.f32.gmra.mrb[0].mxu0 %v3907
      %v3990 = vpop.f32.mrb[0].mxu0
      %v3991 = vadd.f32 0.0, %v3990
      %v3992 = vpop.f32.mrb[0].mxu0
      %3993 = vdwg.mxu0
      %v3994 = vadd.f32 %v3615, %v3976
      %v3995 = vadd.f32 %v3616, %v3981
      %v3996 = vadd.f32 %v3617, %v3986
      %v3997 = vadd.f32 %v3618, %v3991
      %v3998 = vlaneseq
      %v3999 = vshrl.u32 %v3998, 7
      %v4000 = vsub.s32 0, %v3999
      %v4001 = vrot.slane %v2388, %v4000
      %v4002 = vadd.f32 %v3994, %v4001
      %v4003 = vadd.f32 %v3995, %v4001
      %v4004 = vadd.f32 %v3996, %v4001
      %v4005 = vadd.f32 %v3997, %v4001
      %v4006 = vadd.f32 %v4002, %v2368
      %v4007 = vadd.f32 %v4003, %v2369
      %v4008 = vadd.f32 %v4004, %v2370
      %v4009 = vadd.f32 %v4005, %v2371
      %v4010 = vsel %vm542, %v4006, 0.0
      %4011 = vadd.xlane.f32.xlu0 %v4010
      %v4012 = vpop.xlane.xlu0 %4011
      %v4013 = vsel %vm542, %v4007, 0.0
      %4014 = vadd.xlane.f32.xlu0 %v4013
      %v4015 = vpop.xlane.xlu0 %4014
      %v4016 = vsel %vm542, %v4008, 0.0
      %4017 = vadd.xlane.f32.xlu0 %v4016
      %v4018 = vpop.xlane.xlu0 %4017
      %v4019 = vsel %vm542, %v4009, 0.0
      %4020 = vadd.xlane.f32.xlu0 %v4019
      %v4021 = vpop.xlane.xlu0 %4020
      %v4022 = vmul.f32 %v4012, %v2270
      %v4023 = vmul.f32 %v4015, %v2270
      %v4024 = vmul.f32 %v4018, %v2270
      %v4025 = vmul.f32 %v4021, %v2270
      %v4026 = vsub.f32 %v4006, %v4022
      %v4027 = vsub.f32 %v4007, %v4023
      %v4028 = vsub.f32 %v4008, %v4024
      %v4029 = vsub.f32 %v4009, %v4025
      %v4030 = vmul.f32 %v4026, %v4026
      %v4031 = vmul.f32 %v4027, %v4027
      %v4032 = vmul.f32 %v4028, %v4028
      %v4033 = vmul.f32 %v4029, %v4029
      %v4034 = vsel %vm542, %v4030, 0.0
      %4035 = vadd.xlane.f32.xlu0 %v4034
      %v4036 = vpop.xlane.xlu0 %4035
      %v4037 = vsel %vm542, %v4031, 0.0
      %4038 = vadd.xlane.f32.xlu0 %v4037
      %v4039 = vpop.xlane.xlu0 %4038
      %v4040 = vsel %vm542, %v4032, 0.0
      %4041 = vadd.xlane.f32.xlu0 %v4040
      %v4042 = vpop.xlane.xlu0 %4041
      %v4043 = vsel %vm542, %v4033, 0.0
      %4044 = vadd.xlane.f32.xlu0 %v4043
      %v4045 = vpop.xlane.xlu0 %4044
      %v4046 = vmul.f32 %v4036, %v2270
      %v4047 = vmul.f32 %v4039, %v2270
      %v4048 = vmul.f32 %v4042, %v2270
      %v4049 = vmul.f32 %v4045, %v2270
      %v4050 = vadd.f32 %v4046, 1e-12
      %v4051 = vadd.f32 %v4047, 1e-12
      %v4052 = vadd.f32 %v4048, 1e-12
      %v4053 = vadd.f32 %v4049, 1e-12
      %v4054 = vrsqrt.pop %v4050
      %v4055 = vrsqrt.pop %v4051
      %v4056 = vrsqrt.pop %v4052
      %v4057 = vrsqrt.pop %v4053
      %v4058 = vmul.f32 %v4026, %v4054
      %v4059 = vmul.f32 %v4027, %v4055
      %v4060 = vmul.f32 %v4028, %v4056
      %v4061 = vmul.f32 %v4029, %v4057
      %v4062 = vlaneseq
      %v4063 = vshrl.u32 %v4062, 7
      %v4064 = vsub.s32 0, %v4063
      %v4065 = vrot.slane %v2389, %v4064
      %v4066 = vmul.f32 %v4058, %v4065
      %v4067 = vmul.f32 %v4059, %v4065
      %v4068 = vmul.f32 %v4060, %v4065
      %v4069 = vmul.f32 %v4061, %v4065
      %v4070 = vlaneseq
      %v4071 = vshrl.u32 %v4070, 7
      %v4072 = vsub.s32 0, %v4071
      %v4073 = vrot.slane %v2390, %v4072
      %v4074 = vadd.f32 %v4066, %v4073
      %v4075 = vadd.f32 %v4067, %v4073
      %v4076 = vadd.f32 %v4068, %v4073
      %v4077 = vadd.f32 %v4069, %v4073
      %v4078 = vmul.f32 %v4074, 0.5
      %v4079 = vmul.f32 %v4075, 0.5
      %v4080 = vmul.f32 %v4076, 0.5
      %v4081 = vmul.f32 %v4077, 0.5
      %v4082 = vmul.f32 %v4074, %v2331
      %v4083 = vmul.f32 %v4075, %v2331
      %v4084 = vmul.f32 %v4076, %v2331
      %v4085 = vmul.f32 %v4077, %v2331
      %v4086 = verf.f32.pop %v4082
      %v4087 = verf.f32.pop %v4083
      %v4088 = verf.f32.pop %v4084
      %v4089 = verf.f32.pop %v4085
      %v4090 = vadd.f32 %v4086, 1.0
      %v4091 = vadd.f32 %v4087, 1.0
      %v4092 = vadd.f32 %v4088, 1.0
      %v4093 = vadd.f32 %v4089, 1.0
      %v4094 = vmul.f32 %v4078, %v4090
      %v4095 = vmul.f32 %v4079, %v4091
      %v4096 = vmul.f32 %v4080, %v4092
      %v4097 = vmul.f32 %v4081, %v4093
      %v4098 = vmul.f32 %v4094, %v2351
      %v4099 = vmul.f32 %v4095, %v2356
      %v4100 = vmul.f32 %v4096, %v2361
      %v4101 = vmul.f32 %v4097, %v2366
      %v4102 = vld [vmem:[%s7] sm:$0xff]
      %v4103 = vld [vmem:[%s7 + $0x8] sm:$0xff]
      %v4104 = vld [vmem:[%s7 + $0x10] sm:$0xff]
      %v4105 = vld [vmem:[%s7 + $0x18] sm:$0xff]
      %v4106 = vld [vmem:[%s11] sm:$0x1]
      %v4108 = vlaneseq
      %v4109 = vshrl.u32 %v4108, 7
      %v4110 = vsub.s32 0, %v4109
      %v4111 = vrot.slane %v4106, %v4110
      %v4114 = vsel %vm542, %v4098, 0
      %v4117 = vsel %vm542, %v4099, 0
      %v4120 = vsel %vm542, %v4100, 0
      %v4123 = vsel %vm542, %v4101, 0
      %4125 = vmatprep.subr.mxu0 0.0
      %4126 = vmatpush1.msra.mxu0 %v4102
      %4127 = vmatprep.subr.mxu0 0.0
      %4128 = vmatpush1.msra.mxu0 %v4103
      %4129 = vmatprep.subr.mxu0 0.0
      %4130 = vmatpush1.msra.mxu0 %v4104
      %4131 = vmatprep.subr.mxu0 0.0
      %4132 = vmatpush1.msra.mxu0 %v4105
      %4133 = vmatprep.subr.mxu0 0.0
      %4134 = vmatpush1.msra.mxu0 0.0
      %4135 = vmatprep.subr.mxu0 0.0
      %4136 = vmatpush1.msra.mxu0 0.0
      %4137 = vmatprep.subr.mxu0 0.0
      %4138 = vmatpush1.msra.mxu0 0.0
      %4139 = vmatprep.subr.mxu0 0.0
      %4140 = vmatpush1.msra.mxu0 0.0
      %4141 = vmatprep.subr.mxu0 0.0
      %4142 = vmatpush1.msra.mxu0 0.0
      %4143 = vmatprep.subr.mxu0 0.0
      %4144 = vmatpush1.msra.mxu0 0.0
      %4145 = vmatprep.subr.mxu0 0.0
      %4146 = vmatpush1.msra.mxu0 0.0
      %4147 = vmatprep.subr.mxu0 0.0
      %4148 = vmatpush1.msra.mxu0 0.0
      %4149 = vmatprep.subr.mxu0 0.0
      %4150 = vmatpush1.msra.mxu0 0.0
      %4151 = vmatprep.subr.mxu0 0.0
      %4152 = vmatpush1.msra.mxu0 0.0
      %4153 = vmatprep.subr.mxu0 0.0
      %4154 = vmatpush1.msra.mxu0 0.0
      %4155 = vmatprep.subr.mxu0 0.0
      %4156 = vmatpush1.msra.mxu0 0.0
      %4157 = vmatprep.subr.mxu0 0.0
      %4158 = vmatpush1.msra.mxu0 0.0
      %4159 = vmatprep.subr.mxu0 0.0
      %4160 = vmatpush1.msra.mxu0 0.0
      %4161 = vmatprep.subr.mxu0 0.0
      %4162 = vmatpush1.msra.mxu0 0.0
      %4163 = vmatprep.subr.mxu0 0.0
      %4164 = vmatpush1.msra.mxu0 0.0
      %4165 = vmatprep.subr.mxu0 0.0
      %4166 = vmatpush1.msra.mxu0 0.0
      %4167 = vmatprep.subr.mxu0 0.0
      %4168 = vmatpush1.msra.mxu0 0.0
      %4169 = vmatprep.subr.mxu0 0.0
      %4170 = vmatpush1.msra.mxu0 0.0
      %4171 = vmatprep.subr.mxu0 0.0
      %4172 = vmatpush1.msra.mxu0 0.0
      %4173 = vmatprep.subr.mxu0 0.0
      %4174 = vmatpush1.msra.mxu0 0.0
      %4175 = vmatprep.subr.mxu0 0.0
      %4176 = vmatpush1.msra.mxu0 0.0
      %4177 = vmatprep.subr.mxu0 0.0
      %4178 = vmatpush1.msra.mxu0 0.0
      %4179 = vmatprep.subr.mxu0 0.0
      %4180 = vmatpush1.msra.mxu0 0.0
      %4181 = vmatprep.subr.mxu0 0.0
      %4182 = vmatpush1.msra.mxu0 0.0
      %4183 = vmatprep.subr.mxu0 0.0
      %4184 = vmatpush1.msra.mxu0 0.0
      %4185 = vmatprep.subr.mxu0 0.0
      %4186 = vmatpush1.msra.mxu0 0.0
      %4187 = vmatprep.subr.mxu0 0.0
      %4188 = vmatpush1.msra.mxu0 0.0
      %4189 = vmatprep.mubr.f32.mxu0 0.0
      %4190 = vmatmul.mubr.f32.gmra.mrb[0].mxu0 %v4114
      %v4191 = vpop.f32.mrb[0].mxu0
      %v4192 = vadd.f32 %v4111, %v4191
      %v4193 = vpop.f32.mrb[0].mxu0
      %4194 = vmatprep.mubr.f32.mxu0 0.0
      %4195 = vmatmul.mubr.f32.gmra.mrb[0].mxu0 %v4117
      %v4196 = vpop.f32.mrb[0].mxu0
      %v4197 = vadd.f32 %v4111, %v4196
      %v4198 = vpop.f32.mrb[0].mxu0
      %4199 = vmatprep.mubr.f32.mxu0 0.0
      %4200 = vmatmul.mubr.f32.gmra.mrb[0].mxu0 %v4120
      %v4201 = vpop.f32.mrb[0].mxu0
      %v4202 = vadd.f32 %v4111, %v4201
      %v4203 = vpop.f32.mrb[0].mxu0
      %4204 = vmatprep.mubr.f32.mxu0 0.0
      %4205 = vmatmul.mubr.f32.gmra.mrb[0].mxu0 %v4123
      %v4206 = vpop.f32.mrb[0].mxu0
      %v4207 = vadd.f32 %v4111, %v4206
      %v4208 = vpop.f32.mrb[0].mxu0
      %4209 = vdwg.mxu0
      %v4210 = vmul.f32 %v4192, 0.5
      %v4211 = vmul.f32 %v4197, 0.5
      %v4212 = vmul.f32 %v4202, 0.5
      %v4213 = vmul.f32 %v4207, 0.5
      %v4214 = vmul.f32 %v4192, %v2331
      %v4215 = vmul.f32 %v4197, %v2331
      %v4216 = vmul.f32 %v4202, %v2331
      %v4217 = vmul.f32 %v4207, %v2331
      %v4218 = verf.f32.pop %v4214
      %v4219 = verf.f32.pop %v4215
      %v4220 = verf.f32.pop %v4216
      %v4221 = verf.f32.pop %v4217
      %v4222 = vadd.f32 %v4218, 1.0
      %v4223 = vadd.f32 %v4219, 1.0
      %v4224 = vadd.f32 %v4220, 1.0
      %v4225 = vadd.f32 %v4221, 1.0
      %v4226 = vmul.f32 %v4210, %v4222
      %v4227 = vmul.f32 %v4211, %v4223
      %v4228 = vmul.f32 %v4212, %v4224
      %v4229 = vmul.f32 %v4213, %v4225
      %v4230 = vmul.f32 %v4226, %v2351
      %v4231 = vmul.f32 %v4227, %v2356
      %v4232 = vmul.f32 %v4228, %v2361
      %v4233 = vmul.f32 %v4229, %v2366
      %v4234 = vld [vmem:[%s8] sm:$0xff]
      %v4235 = vld [vmem:[%s8 + $0x8] sm:$0xff]
      %v4236 = vld [vmem:[%s8 + $0x10] sm:$0xff]
      %v4237 = vld [vmem:[%s8 + $0x18] sm:$0xff]
      %v4238 = vld [vmem:[%s8 + $0x20] sm:$0xff]
      %v4239 = vld [vmem:[%s8 + $0x28] sm:$0xff]
      %v4240 = vld [vmem:[%s8 + $0x30] sm:$0xff]
      %v4241 = vld [vmem:[%s8 + $0x38] sm:$0xff]
      %v4242 = vld [vmem:[%s10 + $0x6] sm:$0x1]
      %v4243 = vlaneseq
      %v4244 = vshrl.u32 %v4243, 7
      %v4245 = vsub.s32 0, %v4244
      %v4246 = vrot.slane %v4242, %v4245
      %vm4247 = vcmask 523264
      %v4249 = vsel %vm4247, %v4230, 0
      %v4252 = vsel %vm4247, %v4231, 0
      %v4255 = vsel %vm4247, %v4232, 0
      %v4258 = vsel %vm4247, %v4233, 0
      %4260 = vmatprep.subr.mxu0 0.0
      %4261 = vmatpush1.msra.mxu0 %v4234
      %4262 = vmatprep.subr.mxu0 0.0
      %4263 = vmatpush1.msra.mxu0 %v4235
      %4264 = vmatprep.subr.mxu0 0.0
      %4265 = vmatpush1.msra.mxu0 %v4236
      %4266 = vmatprep.subr.mxu0 0.0
      %4267 = vmatpush1.msra.mxu0 %v4237
      %4268 = vmatprep.subr.mxu0 0.0
      %4269 = vmatpush1.msra.mxu0 %v4238
      %4270 = vmatprep.subr.mxu0 0.0
      %4271 = vmatpush1.msra.mxu0 %v4239
      %4272 = vmatprep.subr.mxu0 0.0
      %4273 = vmatpush1.msra.mxu0 %v4240
      %4274 = vmatprep.subr.mxu0 0.0
      %4275 = vmatpush1.msra.mxu0 %v4241
      %4276 = vmatprep.subr.mxu0 0.0
      %4277 = vmatpush1.msra.mxu0 0.0
      %4278 = vmatprep.subr.mxu0 0.0
      %4279 = vmatpush1.msra.mxu0 0.0
      %4280 = vmatprep.subr.mxu0 0.0
      %4281 = vmatpush1.msra.mxu0 0.0
      %4282 = vmatprep.subr.mxu0 0.0
      %4283 = vmatpush1.msra.mxu0 0.0
      %4284 = vmatprep.subr.mxu0 0.0
      %4285 = vmatpush1.msra.mxu0 0.0
      %4286 = vmatprep.subr.mxu0 0.0
      %4287 = vmatpush1.msra.mxu0 0.0
      %4288 = vmatprep.subr.mxu0 0.0
      %4289 = vmatpush1.msra.mxu0 0.0
      %4290 = vmatprep.subr.mxu0 0.0
      %4291 = vmatpush1.msra.mxu0 0.0
      %4292 = vmatprep.subr.mxu0 0.0
      %4293 = vmatpush1.msra.mxu0 0.0
      %4294 = vmatprep.subr.mxu0 0.0
      %4295 = vmatpush1.msra.mxu0 0.0
      %4296 = vmatprep.subr.mxu0 0.0
      %4297 = vmatpush1.msra.mxu0 0.0
      %4298 = vmatprep.subr.mxu0 0.0
      %4299 = vmatpush1.msra.mxu0 0.0
      %4300 = vmatprep.subr.mxu0 0.0
      %4301 = vmatpush1.msra.mxu0 0.0
      %4302 = vmatprep.subr.mxu0 0.0
      %4303 = vmatpush1.msra.mxu0 0.0
      %4304 = vmatprep.subr.mxu0 0.0
      %4305 = vmatpush1.msra.mxu0 0.0
      %4306 = vmatprep.subr.mxu0 0.0
      %4307 = vmatpush1.msra.mxu0 0.0
      %4308 = vmatprep.subr.mxu0 0.0
      %4309 = vmatpush1.msra.mxu0 0.0
      %4310 = vmatprep.subr.mxu0 0.0
      %4311 = vmatpush1.msra.mxu0 0.0
      %4312 = vmatprep.subr.mxu0 0.0
      %4313 = vmatpush1.msra.mxu0 0.0
      %4314 = vmatprep.subr.mxu0 0.0
      %4315 = vmatpush1.msra.mxu0 0.0
      %4316 = vmatprep.subr.mxu0 0.0
      %4317 = vmatpush1.msra.mxu0 0.0
      %4318 = vmatprep.subr.mxu0 0.0
      %4319 = vmatpush1.msra.mxu0 0.0
      %4320 = vmatprep.subr.mxu0 0.0
      %4321 = vmatpush1.msra.mxu0 0.0
      %4322 = vmatprep.subr.mxu0 0.0
      %4323 = vmatpush1.msra.mxu0 0.0
      %4324 = vmatprep.mubr.f32.mxu0 0.0
      %4325 = vmatmul.mubr.f32.gmra.mrb[0].mxu0 %v4249
      %v4326 = vpop.f32.mrb[0].mxu0
      %v4327 = vadd.f32 %v4246, %v4326
      %v4328 = vpop.f32.mrb[0].mxu0
      %4329 = vmatprep.mubr.f32.mxu0 0.0
      %4330 = vmatmul.mubr.f32.gmra.mrb[0].mxu0 %v4252
      %v4331 = vpop.f32.mrb[0].mxu0
      %v4332 = vadd.f32 %v4246, %v4331
      %v4333 = vpop.f32.mrb[0].mxu0
      %4334 = vmatprep.mubr.f32.mxu0 0.0
      %4335 = vmatmul.mubr.f32.gmra.mrb[0].mxu0 %v4255
      %v4336 = vpop.f32.mrb[0].mxu0
      %v4337 = vadd.f32 %v4246, %v4336
      %v4338 = vpop.f32.mrb[0].mxu0
      %4339 = vmatprep.mubr.f32.mxu0 0.0
      %4340 = vmatmul.mubr.f32.gmra.mrb[0].mxu0 %v4258
      %v4341 = vpop.f32.mrb[0].mxu0
      %v4342 = vadd.f32 %v4246, %v4341
      %v4343 = vpop.f32.mrb[0].mxu0
      %4344 = vdwg.mxu0
      %v4345 = vadd.f32 %v4327, %v4098
      %v4346 = vadd.f32 %v4332, %v4099
      %v4347 = vadd.f32 %v4337, %v4100
      %v4348 = vadd.f32 %v4342, %v4101
      %v4349 = vld [vmem:[%s10 + $0x7] sm:$0x1]
      %v4350 = vld [vmem:[%s10 + $0x8] sm:$0x1]
      %v4351 = vsel %vm542, %v4345, 0.0
      %4352 = vadd.xlane.f32.xlu0 %v4351
      %v4353 = vpop.xlane.xlu0 %4352
      %v4354 = vsel %vm542, %v4346, 0.0
      %4355 = vadd.xlane.f32.xlu0 %v4354
      %v4356 = vpop.xlane.xlu0 %4355
      %v4357 = vsel %vm542, %v4347, 0.0
      %4358 = vadd.xlane.f32.xlu0 %v4357
      %v4359 = vpop.xlane.xlu0 %4358
      %v4360 = vsel %vm542, %v4348, 0.0
      %4361 = vadd.xlane.f32.xlu0 %v4360
      %v4362 = vpop.xlane.xlu0 %4361
      %v4363 = vmul.f32 %v4353, %v2270
      %v4364 = vmul.f32 %v4356, %v2270
      %v4365 = vmul.f32 %v4359, %v2270
      %v4366 = vmul.f32 %v4362, %v2270
      %v4367 = vsub.f32 %v4345, %v4363
      %v4368 = vsub.f32 %v4346, %v4364
      %v4369 = vsub.f32 %v4347, %v4365
      %v4370 = vsub.f32 %v4348, %v4366
      %v4371 = vmul.f32 %v4367, %v4367
      %v4372 = vmul.f32 %v4368, %v4368
      %v4373 = vmul.f32 %v4369, %v4369
      %v4374 = vmul.f32 %v4370, %v4370
      %v4375 = vsel %vm542, %v4371, 0.0
      %4376 = vadd.xlane.f32.xlu0 %v4375
      %v4377 = vpop.xlane.xlu0 %4376
      %v4378 = vsel %vm542, %v4372, 0.0
      %4379 = vadd.xlane.f32.xlu0 %v4378
      %v4380 = vpop.xlane.xlu0 %4379
      %v4381 = vsel %vm542, %v4373, 0.0
      %4382 = vadd.xlane.f32.xlu0 %v4381
      %v4383 = vpop.xlane.xlu0 %4382
      %v4384 = vsel %vm542, %v4374, 0.0
      %4385 = vadd.xlane.f32.xlu0 %v4384
      %v4386 = vpop.xlane.xlu0 %4385
      %v4387 = vmul.f32 %v4377, %v2270
      %v4388 = vmul.f32 %v4380, %v2270
      %v4389 = vmul.f32 %v4383, %v2270
      %v4390 = vmul.f32 %v4386, %v2270
      %v4391 = vadd.f32 %v4387, 1e-12
      %v4392 = vadd.f32 %v4388, 1e-12
      %v4393 = vadd.f32 %v4389, 1e-12
      %v4394 = vadd.f32 %v4390, 1e-12
      %v4395 = vrsqrt.pop %v4391
      %v4396 = vrsqrt.pop %v4392
      %v4397 = vrsqrt.pop %v4393
      %v4398 = vrsqrt.pop %v4394
      %v4399 = vmul.f32 %v4367, %v4395
      %v4400 = vmul.f32 %v4368, %v4396
      %v4401 = vmul.f32 %v4369, %v4397
      %v4402 = vmul.f32 %v4370, %v4398
      %v4403 = vlaneseq
      %v4404 = vshrl.u32 %v4403, 7
      %v4405 = vsub.s32 0, %v4404
      %v4406 = vrot.slane %v4349, %v4405
      %v4407 = vmul.f32 %v4399, %v4406
      %v4408 = vmul.f32 %v4400, %v4406
      %v4409 = vmul.f32 %v4401, %v4406
      %v4410 = vmul.f32 %v4402, %v4406
      %v4411 = vlaneseq
      %v4412 = vshrl.u32 %v4411, 7
      %v4413 = vsub.s32 0, %v4412
      %v4414 = vrot.slane %v4350, %v4413
      %v4415 = vadd.f32 %v4407, %v4414
      %v4416 = vadd.f32 %v4408, %v4414
      %v4417 = vadd.f32 %v4409, %v4414
      %v4418 = vadd.f32 %v4410, %v4414
      %v4419 = vmul.f32 %v4415, %v2351
      %v4420 = vmul.f32 %v4416, %v2356
      %v4421 = vmul.f32 %v4417, %v2361
      %v4422 = vmul.f32 %v4418, %v2366
      %4423 = vst.msk [vmem:[%s507] sm:$0xff] %vm542, %v4419
      %4424 = vst.msk [vmem:[%s507 + $0x8] sm:$0xff] %vm542, %v4420
      %4425 = vst.msk [vmem:[%s507 + $0x10] sm:$0xff] %vm542, %v4421
      %4426 = vst.msk [vmem:[%s507 + $0x18] sm:$0xff] %vm542, %v4422
      %p4427 = scmp.lt.s32.totalorder %s23, 1
      %s4428 = scalar_select %p4427, %s23, 1
      %s4429 = smul.addr %s4428, 4
      %s4430 = smul.addr %s4429, 8
      %s4431 = scalar_lea.vmem %s12, %s4430
      // Predicated region
      $region69: #{cross_att_layer_forward.1} parent=67 // pred_check
        %p4432 = pneg %p322
      $region70: #{cross_att_layer_forward.1} parent=67 // pred_check_branch
        %4434 = sbr.rel (%p4432) target = $region72
      $region71: #{cross_att_layer_forward.1} parent=67 // pred_region
        _
      $region72: #{cross_att_layer_forward.1} parent=67 // pred_fallthru
        _
    $region68: #{cross_att_layer_forward.1} parent=5 // pred_fallthru
      _
    %p4435 = scmp.le.s32.totalorder 2, %s18
    // Predicated region
    $region73: #{cross_att_layer_forward.1} parent=5 // pred_check
      %p4436 = pneg %p4435
    $region74: #{cross_att_layer_forward.1} parent=5 // pred_check_branch
      %4438 = sbr.rel (%p4436) target = $region76
    $region75: #{cross_att_layer_forward.1} parent=5 // pred_region
      %s4439 = ssub.s32 %s18, 2
      // Predicated region
      $region77: #{cross_att_layer_forward.1} parent=75 // pred_check
        %p4440 = pneg %p328
      $region78: #{cross_att_layer_forward.1} parent=75 // pred_check_branch
        %4442 = sbr.rel (%p4440) target = $region80
      $region79: #{cross_att_layer_forward.1} parent=75 // pred_region
        %p4443 = scmp.lt.s32.totalorder %s24, 1
        %s4444 = scalar_select %p4443, %s24, 1
        %s4445 = smul.addr %s4444, 4
        %s4446 = smul.addr %s4445, 8
        %s4447 = scalar_lea.vmem %s12, %s4446
      $region80: #{cross_att_layer_forward.1} parent=75 // pred_fallthru
        _
    $region76: #{cross_att_layer_forward.1} parent=5 // pred_fallthru
      _
  $region6: #{cross_att_layer_forward.1} parent=0 // loop_footer
    %s22 = sadd.s32 1, %s18
  $region7: #{cross_att_layer_forward.1} parent=0 // loop_footer_branch
    %17 = sbr.rel target = $region3
  $region8: #{cross_att_layer_forward.1} parent=0 // loop_exit
    _

</llo_original>
